<compile_context>
chip_gen: v6e
topology: v6e:2x2x1
jax: 0.10.0
libtpu: 0.0.40
codegen_flags: <defaults>
</compile_context>

<pallas_src>
import functools
import math

import jax
import jax.numpy as jnp
from jax.experimental import pallas as pl
from jax.experimental.pallas import tpu as pltpu


def _layernorm(x, gamma, beta, eps=1e-5):
    mean = jnp.mean(x, axis=-1, keepdims=True)
    var = jnp.mean((x - mean) ** 2, axis=-1, keepdims=True)
    return (x - mean) * jax.lax.rsqrt(var + eps) * gamma + beta


def decoder_layer_kernel(
    x_ref, padk_ref,
    wq_ref, bq_ref, wk_ref, bk_ref, wv_ref, bv_ref,
    wo_ref, bo_ref,
    g1_ref, beta1_ref,
    w1_ref, bf1_ref, w2_ref, bf2_ref,
    g2_ref, beta2_ref,
    out_ref, attnw_ref,
    kh_scr, vh_scr,
    *, n_heads, d_k, q_tile,
):
    S = x_ref.shape[1]
    qi = pl.program_id(1)
    q0 = pl.multiple_of(qi * q_tile, q_tile)

    # --- K/V projections: once per batch row, persisted in bf16 VMEM scratch ---
    @pl.when(qi == 0)
    def _():
        x_b = x_ref[0].astype(jnp.bfloat16)                                   # (S, D)
        k = jnp.dot(x_b, wk_ref[...], preferred_element_type=jnp.float32) + bk_ref[...]
        v = jnp.dot(x_b, wv_ref[...], preferred_element_type=jnp.float32) + bv_ref[...]
        kh_scr[...] = k.reshape(S, n_heads, d_k).transpose(1, 0, 2).astype(jnp.bfloat16)
        vh_scr[...] = v.reshape(S, n_heads, d_k).transpose(1, 0, 2).astype(jnp.bfloat16)

    # query tile of this grid step
    xq = x_ref[0, pl.ds(q0, q_tile), :]                                       # (TQ, D) f32
    xq_b = xq.astype(jnp.bfloat16)

    # Q projection (1/sqrt(d_k) already folded into wq / bq host-side)
    q = jnp.dot(xq_b, wq_ref[...], preferred_element_type=jnp.float32) + bq_ref[...]
    qh = q.reshape(q_tile, n_heads, d_k).transpose(1, 0, 2).astype(jnp.bfloat16)  # (H, TQ, dk)

    # scores for all heads in one batched contraction against the persistent K
    scores = jnp.einsum('hqd,hkd->hqk', qh, kh_scr[...],
                        preferred_element_type=jnp.float32)                   # (H, TQ, S)

    # --- causal + key-pad mask, rebuilt in-kernel; stays 2-D, broadcast over heads ---
    rows = q0 + jax.lax.broadcasted_iota(jnp.int32, (q_tile, S), 0)           # abs query idx
    cols = jax.lax.broadcasted_iota(jnp.int32, (q_tile, S), 1)                # key idx
    masked = jnp.logical_or(cols > rows, padk_ref[0, :, :] > 0.0)             # (TQ, S)
    scores = jnp.where(masked[None, :, :], jnp.float32(-1e9), scores)

    # --- softmax (f32), approx reciprocal on the EUP ---
    m = jnp.max(scores, axis=-1, keepdims=True)
    e = jnp.exp(scores - m)
    denom = jnp.sum(e, axis=-1, keepdims=True)
    attn = e * pl.reciprocal(denom, approx=True)                              # (H, TQ, S)
    attnw_ref[0] = attn.astype(attnw_ref.dtype)                               # bf16 writeback

    # context + output projection
    ctx = jnp.einsum('hqk,hkd->hqd', attn.astype(jnp.bfloat16), vh_scr[...],
                     preferred_element_type=jnp.float32)                      # (H, TQ, dk)
    ctx = ctx.transpose(1, 0, 2).reshape(q_tile, n_heads * d_k)               # (TQ, D)
    attn_out = jnp.dot(ctx.astype(jnp.bfloat16), wo_ref[...],
                       preferred_element_type=jnp.float32) + bo_ref[...]

    # residual + layernorm 1 (f32)
    h1 = _layernorm(xq + attn_out, g1_ref[...], beta1_ref[...])

    # --- position-wise FFN (exact erf GELU, matches nn.GELU()) ---
    ff = jnp.dot(h1.astype(jnp.bfloat16), w1_ref[...],
                 preferred_element_type=jnp.float32) + bf1_ref[...]
    ff = 0.5 * ff * (1.0 + jax.lax.erf(ff * jnp.float32(1.0 / math.sqrt(2.0))))
    ff = jnp.dot(ff.astype(jnp.bfloat16), w2_ref[...],
                 preferred_element_type=jnp.float32) + bf2_ref[...]

    # residual + layernorm 2 (f32)
    out = _layernorm(h1 + ff, g2_ref[...], beta2_ref[...])
    out_ref[0] = out.astype(out_ref.dtype)


def _vmem_limit_bytes():
    # 7/8 of physical VMEM: ~56 MiB on v7x (64 MiB), 112 MiB on v5e/v6e (128 MiB).
    try:
        cap = int(pltpu.get_tpu_info().vmem_capacity_bytes)
    except Exception:
        cap = 64 * 1024 * 1024
    return min(cap * 7 // 8, 112 * 1024 * 1024)


def _const_spec(arr, single_buffer):
    """BlockSpec for a weight whose block index is constant across the grid."""
    idx = lambda b, qi: (0,) * arr.ndim
    if single_buffer and hasattr(pl, "Buffered"):
        try:
            return pl.BlockSpec(arr.shape, idx, pipeline_mode=pl.Buffered(1))
        except TypeError:
            pass
    return pl.BlockSpec(arr.shape, idx)


def _build_decoder_call(B, S, D, n_heads, d_k, q_tile, weight_args, attnw_dtype,
                        single_buffer_weights):
    nq = S // q_tile
    in_specs = [
        # full sequence (for K/V at qi==0 and Q-tile slicing); only re-DMA'd when b changes
        pl.BlockSpec((1, S, D), lambda b, qi: (b, 0, 0)),
        pl.BlockSpec((1, 1, S), lambda b, qi: (b, 0, 0)),       # key pad flags
    ] + [_const_spec(w, single_buffer_weights) for w in weight_args]

    out_specs = [
        pl.BlockSpec((1, q_tile, D), lambda b, qi: (b, qi, 0)),
        pl.BlockSpec((1, n_heads, q_tile, S), lambda b, qi: (b, 0, qi, 0)),
    ]

    kernel = functools.partial(decoder_layer_kernel,
                               n_heads=n_heads, d_k=d_k, q_tile=q_tile)

    return pl.pallas_call(
        kernel,
        out_shape=(
            jax.ShapeDtypeStruct((B, S, D), jnp.float32),
            jax.ShapeDtypeStruct((B, n_heads, S, S), attnw_dtype),
        ),
        grid_spec=pltpu.PrefetchScalarGridSpec(
            num_scalar_prefetch=0,
            grid=(B, nq),
            in_specs=in_specs,
            out_specs=out_specs,
            scratch_shapes=[
                pltpu.VMEM((n_heads, S, d_k), jnp.bfloat16),    # K heads (per batch row)
                pltpu.VMEM((n_heads, S, d_k), jnp.bfloat16),    # V heads (per batch row)
            ],
        ),
        compiler_params=pltpu.CompilerParams(
            # qi carries the K/V scratch -> must be sequential ("arbitrary")
            dimension_semantics=("parallel", "arbitrary"),
            vmem_limit_bytes=_vmem_limit_bytes()),
    )


def decoder_layer(x, key_pad, layer_params, *, n_heads, q_tile, attnw_dtype=jnp.bfloat16):
    B, S, D = x.shape
    d_k = D // n_heads
    assert S % q_tile == 0

    weight_args = [
        layer_params["wq"], layer_params["bq"],
        layer_params["wk"], layer_params["bk"],
        layer_params["wv"], layer_params["bv"],
        layer_params["wo"], layer_params["bo"],
        layer_params["ln1_g"], layer_params["ln1_b"],
        layer_params["w1"], layer_params["b1"],
        layer_params["w2"], layer_params["b2"],
        layer_params["ln2_g"], layer_params["ln2_b"],
    ]

    try:
        call = _build_decoder_call(B, S, D, n_heads, d_k, q_tile, weight_args,
                                   attnw_dtype, single_buffer_weights=True)
        out, attnw = call(x, key_pad, *weight_args)
    except Exception:
        # Fallback: default (double) buffering for weight blocks.
        call = _build_decoder_call(B, S, D, n_heads, d_k, q_tile, weight_args,
                                   attnw_dtype, single_buffer_weights=False)
        out, attnw = call(x, key_pad, *weight_args)
    return out, attnw


def init_gpt_params(key, vocab_size, seq_len, d_model, n_layers, d_ff):
    keys = jax.random.split(key, 2 + n_layers)
    params = {
        "tok_emb": 0.02 * jax.random.normal(keys[0], (vocab_size, d_model), jnp.float32),
        "pos_emb": 0.02 * jax.random.normal(keys[1], (seq_len + 1, d_model), jnp.float32),
        "layers": [],
    }
    for l in range(n_layers):
        lk = jax.random.split(keys[2 + l], 6)
        layer = {
            "wq": 0.02 * jax.random.normal(lk[0], (d_model, d_model), jnp.float32),
            "bq": jnp.zeros((1, d_model), jnp.float32),
            "wk": 0.02 * jax.random.normal(lk[1], (d_model, d_model), jnp.float32),
            "bk": jnp.zeros((1, d_model), jnp.float32),
            "wv": 0.02 * jax.random.normal(lk[2], (d_model, d_model), jnp.float32),
            "bv": jnp.zeros((1, d_model), jnp.float32),
            "wo": 0.02 * jax.random.normal(lk[3], (d_model, d_model), jnp.float32),
            "bo": jnp.zeros((1, d_model), jnp.float32),
            "ln1_g": jnp.ones((1, d_model), jnp.float32),
            "ln1_b": jnp.zeros((1, d_model), jnp.float32),
            "w1": 0.02 * jax.random.normal(lk[4], (d_model, d_ff), jnp.float32),
            "b1": jnp.zeros((1, d_ff), jnp.float32),
            "w2": 0.02 * jax.random.normal(lk[5], (d_ff, d_model), jnp.float32),
            "b2": jnp.zeros((1, d_model), jnp.float32),
            "ln2_g": jnp.ones((1, d_model), jnp.float32),
            "ln2_b": jnp.zeros((1, d_model), jnp.float32),
        }
        params["layers"].append(layer)
    return params


def prepare_gpt_params(params, n_heads):
    """One-time kernel prep: cast matmul weights to bf16 and fold 1/sqrt(d_k) into Q proj."""
    d_model = params["tok_emb"].shape[1]
    d_k = d_model // n_heads
    scale = jnp.float32(1.0 / math.sqrt(d_k))
    bf16 = jnp.bfloat16
    prepared = {"tok_emb": params["tok_emb"], "pos_emb": params["pos_emb"], "layers": []}
    for layer in params["layers"]:
        prepared["layers"].append({
            "wq": (layer["wq"] * scale).astype(bf16),
            "bq": (layer["bq"] * scale).astype(jnp.float32),
            "wk": layer["wk"].astype(bf16), "bk": layer["bk"],
            "wv": layer["wv"].astype(bf16), "bv": layer["bv"],
            "wo": layer["wo"].astype(bf16), "bo": layer["bo"],
            "ln1_g": layer["ln1_g"], "ln1_b": layer["ln1_b"],
            "w1": layer["w1"].astype(bf16), "b1": layer["b1"],
            "w2": layer["w2"].astype(bf16), "b2": layer["b2"],
            "ln2_g": layer["ln2_g"], "ln2_b": layer["ln2_b"],
        })
    return prepared


def _pick_q_tile(S):
    if S <= 128:
        return S
    try:
        kind = jax.devices()[0].device_kind.lower()
    except Exception:
        kind = ""
    # v6e/v7x have 256-wide MXU M dim; v5e saturates at 128.
    if ("v6" in kind or "v7" in kind) and S % 256 == 0:
        return 256
    return 128


def gpt_forward(inputs, params, *, n_heads, pad_id=0):
    """inputs: [B, S] int32 token ids; params: output of prepare_gpt_params.
    Returns (outputs [B,S,D] f32, list of attn weights [B,H,S,S] bf16)."""
    B, S = inputs.shape

    # positions (1-based, 0 where padded)
    positions = jnp.broadcast_to(jnp.arange(S, dtype=inputs.dtype), (B, S)) + 1
    positions = jnp.where(inputs == pad_id, 0, positions)

    # embeddings (glue: gathers stay in plain JAX)
    x = jnp.take(params["tok_emb"], inputs, axis=0) + jnp.take(params["pos_emb"], positions, axis=0)

    # per-key pad flags; the causal part of the mask is rebuilt in-kernel from iota
    key_pad = (inputs == pad_id).astype(jnp.float32)[:, None, :]   # (B, 1, S)

    q_tile = _pick_q_tile(S)
    assert S % q_tile == 0

    attention_weights = []
    for layer_params in params["layers"]:
        x, attnw = decoder_layer(x, key_pad, layer_params,
                                 n_heads=n_heads, q_tile=q_tile)
        attention_weights.append(attnw)
    return x, attention_weights


if __name__ == "__main__":
    # small config consistent with the module's forward
    vocab_size = 32
    seq_len = 8
    d_model = 32
    n_layers = 2
    n_heads = 4
    d_ff = 64
    pad_id = 0
    B = 2

    key = jax.random.PRNGKey(0)
    pkey, ikey = jax.random.split(key)
    params = init_gpt_params(pkey, vocab_size, seq_len, d_model, n_layers, d_ff)
    params = prepare_gpt_params(params, n_heads)   # one-time bf16 cast + scale fold

    inputs = jax.random.randint(ikey, (B, seq_len), 0, vocab_size, dtype=jnp.int32)

    outputs, attn_ws = gpt_forward(inputs, params, n_heads=n_heads, pad_id=pad_id)
    outputs = jax.block_until_ready(outputs)
    for a in attn_ws:
        jax.block_until_ready(a)

    assert outputs.shape == (B, seq_len, d_model)
    assert len(attn_ws) == n_layers
    assert attn_ws[0].shape == (B, n_heads, seq_len, seq_len)
    assert bool(jnp.all(jnp.isfinite(outputs)))
    assert bool(jnp.all(jnp.isfinite(attn_ws[0].astype(jnp.float32))))
    print("KERNEL_OK")
</pallas_src>

<mosaic_0001>
module attributes {stable_mosaic.version = 11 : i64} {
  func.func @decoder_layer_kernel(%arg0: i32, %arg1: i32, %arg2: memref<1x8x32xf32, #tpu.memory_space<vmem>>, %arg3: memref<1x1x8xf32, #tpu.memory_space<vmem>>, %arg4: memref<32x32xbf16, #tpu.memory_space<vmem>>, %arg5: memref<1x32xf32, #tpu.memory_space<vmem>>, %arg6: memref<32x32xbf16, #tpu.memory_space<vmem>>, %arg7: memref<1x32xf32, #tpu.memory_space<vmem>>, %arg8: memref<32x32xbf16, #tpu.memory_space<vmem>>, %arg9: memref<1x32xf32, #tpu.memory_space<vmem>>, %arg10: memref<32x32xbf16, #tpu.memory_space<vmem>>, %arg11: memref<1x32xf32, #tpu.memory_space<vmem>>, %arg12: memref<1x32xf32, #tpu.memory_space<vmem>>, %arg13: memref<1x32xf32, #tpu.memory_space<vmem>>, %arg14: memref<32x64xbf16, #tpu.memory_space<vmem>>, %arg15: memref<1x64xf32, #tpu.memory_space<vmem>>, %arg16: memref<64x32xbf16, #tpu.memory_space<vmem>>, %arg17: memref<1x32xf32, #tpu.memory_space<vmem>>, %arg18: memref<1x32xf32, #tpu.memory_space<vmem>>, %arg19: memref<1x32xf32, #tpu.memory_space<vmem>>, %arg20: memref<1x8x32xf32, #tpu.memory_space<vmem>>, %arg21: memref<1x4x8x8xbf16, #tpu.memory_space<vmem>>, %arg22: memref<4x8x8xbf16, #tpu.memory_space<vmem>>, %arg23: memref<4x8x8xbf16, #tpu.memory_space<vmem>>) attributes {dimension_semantics = [#tpu.dimension_semantics<parallel>, #tpu.dimension_semantics<arbitrary>], iteration_bounds = array<i64: 2, 1>, scalar_prefetch = 0 : i64, scratch_operands = 2 : i64, tpu.core_type = #tpu.core_type<tc>, window_params = [{transform_indices = @transform_0, window_bounds = array<i64: 1, 8, 32>}, {transform_indices = @transform_1, window_bounds = array<i64: 1, 1, 8>}, {pipeline_mode = #tpu.pipeline_mode<synchronous>, transform_indices = @transform_2, window_bounds = array<i64: 32, 32>}, {pipeline_mode = #tpu.pipeline_mode<synchronous>, transform_indices = @transform_3, window_bounds = array<i64: 1, 32>}, {pipeline_mode = #tpu.pipeline_mode<synchronous>, transform_indices = @transform_4, window_bounds = array<i64: 32, 32>}, {pipeline_mode = #tpu.pipeline_mode<synchronous>, transform_indices = @transform_5, window_bounds = array<i64: 1, 32>}, {pipeline_mode = #tpu.pipeline_mode<synchronous>, transform_indices = @transform_6, window_bounds = array<i64: 32, 32>}, {pipeline_mode = #tpu.pipeline_mode<synchronous>, transform_indices = @transform_7, window_bounds = array<i64: 1, 32>}, {pipeline_mode = #tpu.pipeline_mode<synchronous>, transform_indices = @transform_8, window_bounds = array<i64: 32, 32>}, {pipeline_mode = #tpu.pipeline_mode<synchronous>, transform_indices = @transform_9, window_bounds = array<i64: 1, 32>}, {pipeline_mode = #tpu.pipeline_mode<synchronous>, transform_indices = @transform_10, window_bounds = array<i64: 1, 32>}, {pipeline_mode = #tpu.pipeline_mode<synchronous>, transform_indices = @transform_11, window_bounds = array<i64: 1, 32>}, {pipeline_mode = #tpu.pipeline_mode<synchronous>, transform_indices = @transform_12, window_bounds = array<i64: 32, 64>}, {pipeline_mode = #tpu.pipeline_mode<synchronous>, transform_indices = @transform_13, window_bounds = array<i64: 1, 64>}, {pipeline_mode = #tpu.pipeline_mode<synchronous>, transform_indices = @transform_14, window_bounds = array<i64: 64, 32>}, {pipeline_mode = #tpu.pipeline_mode<synchronous>, transform_indices = @transform_15, window_bounds = array<i64: 1, 32>}, {pipeline_mode = #tpu.pipeline_mode<synchronous>, transform_indices = @transform_16, window_bounds = array<i64: 1, 32>}, {pipeline_mode = #tpu.pipeline_mode<synchronous>, transform_indices = @transform_17, window_bounds = array<i64: 1, 32>}, {transform_indices = @transform_18, window_bounds = array<i64: 1, 8, 32>}, {transform_indices = @transform_19, window_bounds = array<i64: 1, 4, 8, 8>}]} {
    %c8_i32 = arith.constant 8 : i32
    %0 = arith.muli %arg1, %c8_i32 : i32
    %1 = tpu.assume_multiple %0, 8 : i32
    %c0_i32 = arith.constant 0 : i32
    %2 = arith.cmpi eq, %arg1, %c0_i32 : i32
    %3 = arith.extui %2 : i1 to i32
    %c0_i32_0 = arith.constant 0 : i32
    %4 = arith.cmpi ne, %3, %c0_i32_0 : i32
    scf.if %4 {
      %c0_64 = arith.constant 0 : index
      %c0_65 = arith.constant 0 : index
      %c0_66 = arith.constant 0 : index
      %133 = vector.load %arg2[%c0_64, %c0_65, %c0_66] : memref<1x8x32xf32, #tpu.memory_space<vmem>>, vector<1x8x32xf32>
      %134 = vector.shape_cast %133 : vector<1x8x32xf32> to vector<8x32xf32>
      %135 = arith.truncf %134 : vector<8x32xf32> to vector<8x32xbf16>
      %c0_67 = arith.constant 0 : index
      %c0_68 = arith.constant 0 : index
      %136 = vector.load %arg6[%c0_67, %c0_68] : memref<32x32xbf16, #tpu.memory_space<vmem>>, vector<32x32xbf16>
      %cst_69 = arith.constant dense<0.000000e+00> : vector<8x32xf32>
      %137 = tpu.matmul %135, %136, %cst_69 {dimension_numbers = #tpu.dot_dimension_numbers<[1], [0], [0], [1], [0, 0, 1, 1], [], []>} : vector<8x32xbf16>, vector<32x32xbf16>, vector<8x32xf32> -> vector<8x32xf32>
      %c0_70 = arith.constant 0 : index
      %c0_71 = arith.constant 0 : index
      %138 = vector.load %arg7[%c0_70, %c0_71] : memref<1x32xf32, #tpu.memory_space<vmem>>, vector<1x32xf32>
      %139 = vector.broadcast %138 : vector<1x32xf32> to vector<8x32xf32>
      %140 = arith.addf %137, %139 : vector<8x32xf32>
      %c0_72 = arith.constant 0 : index
      %c0_73 = arith.constant 0 : index
      %141 = vector.load %arg8[%c0_72, %c0_73] : memref<32x32xbf16, #tpu.memory_space<vmem>>, vector<32x32xbf16>
      %cst_74 = arith.constant dense<0.000000e+00> : vector<8x32xf32>
      %142 = tpu.matmul %135, %141, %cst_74 {dimension_numbers = #tpu.dot_dimension_numbers<[1], [0], [0], [1], [0, 0, 1, 1], [], []>} : vector<8x32xbf16>, vector<32x32xbf16>, vector<8x32xf32> -> vector<8x32xf32>
      %c0_75 = arith.constant 0 : index
      %c0_76 = arith.constant 0 : index
      %143 = vector.load %arg9[%c0_75, %c0_76] : memref<1x32xf32, #tpu.memory_space<vmem>>, vector<1x32xf32>
      %144 = vector.broadcast %143 : vector<1x32xf32> to vector<8x32xf32>
      %145 = arith.addf %142, %144 : vector<8x32xf32>
      %146 = vector.shape_cast %140 : vector<8x32xf32> to vector<8x4x8xf32>
      %147 = tpu.transpose %146, [1, 0, 2] : vector<8x4x8xf32> -> vector<4x8x8xf32>
      %148 = arith.truncf %147 : vector<4x8x8xf32> to vector<4x8x8xbf16>
      %c0_77 = arith.constant 0 : index
      %c0_78 = arith.constant 0 : index
      %c0_79 = arith.constant 0 : index
      %149 = vector.load %arg22[%c0_77, %c0_78, %c0_79] : memref<4x8x8xbf16, #tpu.memory_space<vmem>>, vector<4x8x8xbf16>
      tpu.vector_store %arg22[%c0_77, %c0_78, %c0_79], %148 {strides = array<i32>} : memref<4x8x8xbf16, #tpu.memory_space<vmem>>, vector<4x8x8xbf16>,
      %150 = vector.shape_cast %145 : vector<8x32xf32> to vector<8x4x8xf32>
      %151 = tpu.transpose %150, [1, 0, 2] : vector<8x4x8xf32> -> vector<4x8x8xf32>
      %152 = arith.truncf %151 : vector<4x8x8xf32> to vector<4x8x8xbf16>
      %c0_80 = arith.constant 0 : index
      %c0_81 = arith.constant 0 : index
      %c0_82 = arith.constant 0 : index
      %153 = vector.load %arg23[%c0_80, %c0_81, %c0_82] : memref<4x8x8xbf16, #tpu.memory_space<vmem>>, vector<4x8x8xbf16>
      tpu.vector_store %arg23[%c0_80, %c0_81, %c0_82], %152 {strides = array<i32>} : memref<4x8x8xbf16, #tpu.memory_space<vmem>>, vector<4x8x8xbf16>,
    } else {
    }
    %c0 = arith.constant 0 : index
    %5 = arith.index_cast %1 : i32 to index
    %c0_1 = arith.constant 0 : index
    %6 = vector.load %arg2[%c0, %5, %c0_1] : memref<1x8x32xf32, #tpu.memory_space<vmem>>, vector<1x8x32xf32>
    %7 = vector.shape_cast %6 : vector<1x8x32xf32> to vector<8x32xf32>
    %8 = arith.truncf %7 : vector<8x32xf32> to vector<8x32xbf16>
    %c0_2 = arith.constant 0 : index
    %c0_3 = arith.constant 0 : index
    %9 = vector.load %arg4[%c0_2, %c0_3] : memref<32x32xbf16, #tpu.memory_space<vmem>>, vector<32x32xbf16>
    %cst = arith.constant dense<0.000000e+00> : vector<8x32xf32>
    %10 = tpu.matmul %8, %9, %cst {dimension_numbers = #tpu.dot_dimension_numbers<[1], [0], [0], [1], [0, 0, 1, 1], [], []>} : vector<8x32xbf16>, vector<32x32xbf16>, vector<8x32xf32> -> vector<8x32xf32>
    %c0_4 = arith.constant 0 : index
    %c0_5 = arith.constant 0 : index
    %11 = vector.load %arg5[%c0_4, %c0_5] : memref<1x32xf32, #tpu.memory_space<vmem>>, vector<1x32xf32>
    %12 = vector.broadcast %11 : vector<1x32xf32> to vector<8x32xf32>
    %13 = arith.addf %10, %12 : vector<8x32xf32>
    %14 = vector.shape_cast %13 : vector<8x32xf32> to vector<8x4x8xf32>
    %15 = tpu.transpose %14, [1, 0, 2] : vector<8x4x8xf32> -> vector<4x8x8xf32>
    %16 = arith.truncf %15 : vector<4x8x8xf32> to vector<4x8x8xbf16>
    %c0_6 = arith.constant 0 : index
    %c0_7 = arith.constant 0 : index
    %c0_8 = arith.constant 0 : index
    %17 = vector.load %arg22[%c0_6, %c0_7, %c0_8] : memref<4x8x8xbf16, #tpu.memory_space<vmem>>, vector<4x8x8xbf16>
    "tpu.trace_start"() <{level = 10 : i32, message = "hqd,hkd->hqk"}> : () -> ()
    %cst_9 = arith.constant dense<0.000000e+00> : vector<4x8x8xf32>
    %18 = tpu.matmul %16, %17, %cst_9 {dimension_numbers = #tpu.dot_dimension_numbers<[2], [2], [1], [1], [0, 0, 0, 1, 1, 1], [0], [0]>} : vector<4x8x8xbf16>, vector<4x8x8xbf16>, vector<4x8x8xf32> -> vector<4x8x8xf32>
    "tpu.trace_stop"() : () -> ()
    %19 = tpu.iota {dimensions = array<i32: 0>} : vector<8x8xi32>
    %20 = vector.broadcast %1 : i32 to vector<8x8xi32>
    %21 = arith.addi %20, %19 : vector<8x8xi32>
    %22 = tpu.iota {dimensions = array<i32: 1>} : vector<8x8xi32>
    %23 = arith.cmpi sgt, %22, %21 : vector<8x8xi32>
    %c0_10 = arith.constant 0 : index
    %c0_11 = arith.constant 0 : index
    %c0_12 = arith.constant 0 : index
    %24 = vector.load %arg3[%c0_10, %c0_11, %c0_12] : memref<1x1x8xf32, #tpu.memory_space<vmem>>, vector<1x1x8xf32>
    %25 = vector.shape_cast %24 : vector<1x1x8xf32> to vector<1x8xf32>
    %cst_13 = arith.constant 0.000000e+00 : f32
    %26 = vector.broadcast %cst_13 : f32 to vector<1x8xf32>
    %27 = arith.cmpf ogt, %25, %26 : vector<1x8xf32>
    %28 = vector.broadcast %27 : vector<1x8xi1> to vector<8x8xi1>
    %29 = arith.ori %23, %28 : vector<8x8xi1>
    %30 = vector.shape_cast %29 : vector<8x8xi1> to vector<1x8x8xi1>
    %cst_14 = arith.constant -1.000000e+09 : f32
    %31 = vector.shape_cast %30 : vector<1x8x8xi1> to vector<1x8x8xi1>
    %32 = vector.broadcast %31 : vector<1x8x8xi1> to vector<4x8x8xi1>
    %33 = vector.broadcast %cst_14 : f32 to vector<4x8x8xf32>
    %34 = arith.select %32, %33, %18 : vector<4x8x8xi1>, vector<4x8x8xf32>
    %cst_15 = arith.constant dense<0xFF800000> : vector<4x8xf32>
    %35 = vector.multi_reduction <maximumf>, %34, %cst_15 [2] : vector<4x8x8xf32> to vector<4x8xf32>
    %36 = vector.shape_cast %35 : vector<4x8xf32> to vector<4x8x1xf32>
    %37 = vector.broadcast %36 : vector<4x8x1xf32> to vector<4x8x8xf32>
    %38 = arith.subf %34, %37 : vector<4x8x8xf32>
    %39 = math.exp %38 : vector<4x8x8xf32>
    %cst_16 = arith.constant dense<0.000000e+00> : vector<4x8xf32>
    %40 = vector.multi_reduction <add>, %39, %cst_16 [2] : vector<4x8x8xf32> to vector<4x8xf32>
    %41 = vector.shape_cast %40 : vector<4x8xf32> to vector<4x8x1xf32>
    %42 = tpu.reciprocal %41 {approx = true} : vector<4x8x1xf32> -> vector<4x8x1xf32>
    %43 = vector.broadcast %42 : vector<4x8x1xf32> to vector<4x8x8xf32>
    %44 = arith.mulf %39, %43 : vector<4x8x8xf32>
    %45 = arith.truncf %44 : vector<4x8x8xf32> to vector<4x8x8xbf16>
    %c0_17 = arith.constant 0 : index
    %c0_18 = arith.constant 0 : index
    %c0_19 = arith.constant 0 : index
    %c0_20 = arith.constant 0 : index
    %46 = vector.load %arg21[%c0_17, %c0_18, %c0_19, %c0_20] : memref<1x4x8x8xbf16, #tpu.memory_space<vmem>>, vector<1x4x8x8xbf16>
    %47 = vector.shape_cast %46 : vector<1x4x8x8xbf16> to vector<4x8x8xbf16>
    %48 = vector.shape_cast %45 : vector<4x8x8xbf16> to vector<1x4x8x8xbf16>
    tpu.vector_store %arg21[%c0_17, %c0_18, %c0_19, %c0_20], %48 {strides = array<i32>} : memref<1x4x8x8xbf16, #tpu.memory_space<vmem>>, vector<1x4x8x8xbf16>,
    %49 = arith.truncf %44 : vector<4x8x8xf32> to vector<4x8x8xbf16>
    %c0_21 = arith.constant 0 : index
    %c0_22 = arith.constant 0 : index
    %c0_23 = arith.constant 0 : index
    %50 = vector.load %arg23[%c0_21, %c0_22, %c0_23] : memref<4x8x8xbf16, #tpu.memory_space<vmem>>, vector<4x8x8xbf16>
    "tpu.trace_start"() <{level = 10 : i32, message = "hqk,hkd->hqd"}> : () -> ()
    %cst_24 = arith.constant dense<0.000000e+00> : vector<4x8x8xf32>
    %51 = tpu.matmul %49, %50, %cst_24 {dimension_numbers = #tpu.dot_dimension_numbers<[2], [1], [1], [2], [0, 0, 0, 1, 1, 2], [0], [0]>} : vector<4x8x8xbf16>, vector<4x8x8xbf16>, vector<4x8x8xf32> -> vector<4x8x8xf32>
    "tpu.trace_stop"() : () -> ()
    %52 = tpu.transpose %51, [1, 0, 2] : vector<4x8x8xf32> -> vector<8x4x8xf32>
    %53 = vector.shape_cast %52 : vector<8x4x8xf32> to vector<8x32xf32>
    %54 = arith.truncf %53 : vector<8x32xf32> to vector<8x32xbf16>
    %c0_25 = arith.constant 0 : index
    %c0_26 = arith.constant 0 : index
    %55 = vector.load %arg10[%c0_25, %c0_26] : memref<32x32xbf16, #tpu.memory_space<vmem>>, vector<32x32xbf16>
    %cst_27 = arith.constant dense<0.000000e+00> : vector<8x32xf32>
    %56 = tpu.matmul %54, %55, %cst_27 {dimension_numbers = #tpu.dot_dimension_numbers<[1], [0], [0], [1], [0, 0, 1, 1], [], []>} : vector<8x32xbf16>, vector<32x32xbf16>, vector<8x32xf32> -> vector<8x32xf32>
    %c0_28 = arith.constant 0 : index
    %c0_29 = arith.constant 0 : index
    %57 = vector.load %arg11[%c0_28, %c0_29] : memref<1x32xf32, #tpu.memory_space<vmem>>, vector<1x32xf32>
    %58 = vector.broadcast %57 : vector<1x32xf32> to vector<8x32xf32>
    %59 = arith.addf %56, %58 : vector<8x32xf32>
    %60 = arith.addf %7, %59 : vector<8x32xf32>
    %c0_30 = arith.constant 0 : index
    %c0_31 = arith.constant 0 : index
    %61 = vector.load %arg12[%c0_30, %c0_31] : memref<1x32xf32, #tpu.memory_space<vmem>>, vector<1x32xf32>
    %c0_32 = arith.constant 0 : index
    %c0_33 = arith.constant 0 : index
    %62 = vector.load %arg13[%c0_32, %c0_33] : memref<1x32xf32, #tpu.memory_space<vmem>>, vector<1x32xf32>
    %cst_34 = arith.constant dense<0.000000e+00> : vector<8xf32>
    %63 = vector.multi_reduction <add>, %60, %cst_34 [1] : vector<8x32xf32> to vector<8xf32>
    %64 = vector.shape_cast %63 : vector<8xf32> to vector<8x1xf32>
    %cst_35 = arith.constant 3.200000e+01 : f32
    %65 = vector.broadcast %cst_35 : f32 to vector<8x1xf32>
    %66 = arith.divf %64, %65 : vector<8x1xf32>
    %67 = vector.broadcast %66 : vector<8x1xf32> to vector<8x32xf32>
    %68 = arith.subf %60, %67 : vector<8x32xf32>
    %69 = arith.mulf %68, %68 : vector<8x32xf32>
    %cst_36 = arith.constant dense<0.000000e+00> : vector<8xf32>
    %70 = vector.multi_reduction <add>, %69, %cst_36 [1] : vector<8x32xf32> to vector<8xf32>
    %71 = vector.shape_cast %70 : vector<8xf32> to vector<8x1xf32>
    %cst_37 = arith.constant 3.200000e+01 : f32
    %72 = vector.broadcast %cst_37 : f32 to vector<8x1xf32>
    %73 = arith.divf %71, %72 : vector<8x1xf32>
    %74 = vector.broadcast %66 : vector<8x1xf32> to vector<8x32xf32>
    %75 = arith.subf %60, %74 : vector<8x32xf32>
    %cst_38 = arith.constant 9.99999974E-6 : f32
    %76 = vector.broadcast %cst_38 : f32 to vector<8x1xf32>
    %77 = arith.addf %73, %76 : vector<8x1xf32>
    %78 = math.rsqrt %77 : vector<8x1xf32>
    %79 = vector.broadcast %78 : vector<8x1xf32> to vector<8x32xf32>
    %80 = arith.mulf %75, %79 : vector<8x32xf32>
    %81 = vector.broadcast %61 : vector<1x32xf32> to vector<8x32xf32>
    %82 = arith.mulf %80, %81 : vector<8x32xf32>
    %83 = vector.broadcast %62 : vector<1x32xf32> to vector<8x32xf32>
    %84 = arith.addf %82, %83 : vector<8x32xf32>
    %85 = arith.truncf %84 : vector<8x32xf32> to vector<8x32xbf16>
    %c0_39 = arith.constant 0 : index
    %c0_40 = arith.constant 0 : index
    %86 = vector.load %arg14[%c0_39, %c0_40] : memref<32x64xbf16, #tpu.memory_space<vmem>>, vector<32x64xbf16>
    %cst_41 = arith.constant dense<0.000000e+00> : vector<8x64xf32>
    %87 = tpu.matmul %85, %86, %cst_41 {dimension_numbers = #tpu.dot_dimension_numbers<[1], [0], [0], [1], [0, 0, 1, 1], [], []>} : vector<8x32xbf16>, vector<32x64xbf16>, vector<8x64xf32> -> vector<8x64xf32>
    %c0_42 = arith.constant 0 : index
    %c0_43 = arith.constant 0 : index
    %88 = vector.load %arg15[%c0_42, %c0_43] : memref<1x64xf32, #tpu.memory_space<vmem>>, vector<1x64xf32>
    %89 = vector.broadcast %88 : vector<1x64xf32> to vector<8x64xf32>
    %90 = arith.addf %87, %89 : vector<8x64xf32>
    %cst_44 = arith.constant 5.000000e-01 : f32
    %91 = vector.broadcast %cst_44 : f32 to vector<8x64xf32>
    %92 = arith.mulf %91, %90 : vector<8x64xf32>
    %cst_45 = arith.constant 0.707106769 : f32
    %93 = vector.broadcast %cst_45 : f32 to vector<8x64xf32>
    %94 = arith.mulf %90, %93 : vector<8x64xf32>
    %95 = math.erf %94 : vector<8x64xf32>
    %cst_46 = arith.constant 1.000000e+00 : f32
    %96 = vector.broadcast %cst_46 : f32 to vector<8x64xf32>
    %97 = arith.addf %96, %95 : vector<8x64xf32>
    %98 = arith.mulf %92, %97 : vector<8x64xf32>
    %99 = arith.truncf %98 : vector<8x64xf32> to vector<8x64xbf16>
    %c0_47 = arith.constant 0 : index
    %c0_48 = arith.constant 0 : index
    %100 = vector.load %arg16[%c0_47, %c0_48] : memref<64x32xbf16, #tpu.memory_space<vmem>>, vector<64x32xbf16>
    %cst_49 = arith.constant dense<0.000000e+00> : vector<8x32xf32>
    %101 = tpu.matmul %99, %100, %cst_49 {dimension_numbers = #tpu.dot_dimension_numbers<[1], [0], [0], [1], [0, 0, 1, 1], [], []>} : vector<8x64xbf16>, vector<64x32xbf16>, vector<8x32xf32> -> vector<8x32xf32>
    %c0_50 = arith.constant 0 : index
    %c0_51 = arith.constant 0 : index
    %102 = vector.load %arg17[%c0_50, %c0_51] : memref<1x32xf32, #tpu.memory_space<vmem>>, vector<1x32xf32>
    %103 = vector.broadcast %102 : vector<1x32xf32> to vector<8x32xf32>
    %104 = arith.addf %101, %103 : vector<8x32xf32>
    %105 = arith.addf %84, %104 : vector<8x32xf32>
    %c0_52 = arith.constant 0 : index
    %c0_53 = arith.constant 0 : index
    %106 = vector.load %arg18[%c0_52, %c0_53] : memref<1x32xf32, #tpu.memory_space<vmem>>, vector<1x32xf32>
    %c0_54 = arith.constant 0 : index
    %c0_55 = arith.constant 0 : index
    %107 = vector.load %arg19[%c0_54, %c0_55] : memref<1x32xf32, #tpu.memory_space<vmem>>, vector<1x32xf32>
    %cst_56 = arith.constant dense<0.000000e+00> : vector<8xf32>
    %108 = vector.multi_reduction <add>, %105, %cst_56 [1] : vector<8x32xf32> to vector<8xf32>
    %109 = vector.shape_cast %108 : vector<8xf32> to vector<8x1xf32>
    %cst_57 = arith.constant 3.200000e+01 : f32
    %110 = vector.broadcast %cst_57 : f32 to vector<8x1xf32>
    %111 = arith.divf %109, %110 : vector<8x1xf32>
    %112 = vector.broadcast %111 : vector<8x1xf32> to vector<8x32xf32>
    %113 = arith.subf %105, %112 : vector<8x32xf32>
    %114 = arith.mulf %113, %113 : vector<8x32xf32>
    %cst_58 = arith.constant dense<0.000000e+00> : vector<8xf32>
    %115 = vector.multi_reduction <add>, %114, %cst_58 [1] : vector<8x32xf32> to vector<8xf32>
    %116 = vector.shape_cast %115 : vector<8xf32> to vector<8x1xf32>
    %cst_59 = arith.constant 3.200000e+01 : f32
    %117 = vector.broadcast %cst_59 : f32 to vector<8x1xf32>
    %118 = arith.divf %116, %117 : vector<8x1xf32>
    %119 = vector.broadcast %111 : vector<8x1xf32> to vector<8x32xf32>
    %120 = arith.subf %105, %119 : vector<8x32xf32>
    %cst_60 = arith.constant 9.99999974E-6 : f32
    %121 = vector.broadcast %cst_60 : f32 to vector<8x1xf32>
    %122 = arith.addf %118, %121 : vector<8x1xf32>
    %123 = math.rsqrt %122 : vector<8x1xf32>
    %124 = vector.broadcast %123 : vector<8x1xf32> to vector<8x32xf32>
    %125 = arith.mulf %120, %124 : vector<8x32xf32>
    %126 = vector.broadcast %106 : vector<1x32xf32> to vector<8x32xf32>
    %127 = arith.mulf %125, %126 : vector<8x32xf32>
    %128 = vector.broadcast %107 : vector<1x32xf32> to vector<8x32xf32>
    %129 = arith.addf %127, %128 : vector<8x32xf32>
    %c0_61 = arith.constant 0 : index
    %c0_62 = arith.constant 0 : index
    %c0_63 = arith.constant 0 : index
    %130 = vector.load %arg20[%c0_61, %c0_62, %c0_63] : memref<1x8x32xf32, #tpu.memory_space<vmem>>, vector<1x8x32xf32>
    %131 = vector.shape_cast %130 : vector<1x8x32xf32> to vector<8x32xf32>
    %132 = vector.shape_cast %129 : vector<8x32xf32> to vector<1x8x32xf32>
    tpu.vector_store %arg20[%c0_61, %c0_62, %c0_63], %132 {strides = array<i32>} : memref<1x8x32xf32, #tpu.memory_space<vmem>>, vector<1x8x32xf32>,
    return
  }
  func.func @transform_0(%arg0: i32, %arg1: i32) -> (i32, i32, i32) {
    %c0_i32 = arith.constant 0 : i32
    %c0_i32_0 = arith.constant 0 : i32
    %c0_i32_1 = arith.constant 0 : i32
    return %arg0, %c0_i32, %c0_i32_0 : i32, i32, i32
  }
  func.func @transform_1(%arg0: i32, %arg1: i32) -> (i32, i32, i32) {
    %c0_i32 = arith.constant 0 : i32
    %c0_i32_0 = arith.constant 0 : i32
    %c0_i32_1 = arith.constant 0 : i32
    return %arg0, %c0_i32, %c0_i32_0 : i32, i32, i32
  }
  func.func @transform_2(%arg0: i32, %arg1: i32) -> (i32, i32) {
    %c0_i32 = arith.constant 0 : i32
    %c0_i32_0 = arith.constant 0 : i32
    %c0_i32_1 = arith.constant 0 : i32
    return %c0_i32, %c0_i32_0 : i32, i32
  }
  func.func @transform_3(%arg0: i32, %arg1: i32) -> (i32, i32) {
    %c0_i32 = arith.constant 0 : i32
    %c0_i32_0 = arith.constant 0 : i32
    %c0_i32_1 = arith.constant 0 : i32
    return %c0_i32, %c0_i32_0 : i32, i32
  }
  func.func @transform_4(%arg0: i32, %arg1: i32) -> (i32, i32) {
    %c0_i32 = arith.constant 0 : i32
    %c0_i32_0 = arith.constant 0 : i32
    %c0_i32_1 = arith.constant 0 : i32
    return %c0_i32, %c0_i32_0 : i32, i32
  }
  func.func @transform_5(%arg0: i32, %arg1: i32) -> (i32, i32) {
    %c0_i32 = arith.constant 0 : i32
    %c0_i32_0 = arith.constant 0 : i32
    %c0_i32_1 = arith.constant 0 : i32
    return %c0_i32, %c0_i32_0 : i32, i32
  }
  func.func @transform_6(%arg0: i32, %arg1: i32) -> (i32, i32) {
    %c0_i32 = arith.constant 0 : i32
    %c0_i32_0 = arith.constant 0 : i32
    %c0_i32_1 = arith.constant 0 : i32
    return %c0_i32, %c0_i32_0 : i32, i32
  }
  func.func @transform_7(%arg0: i32, %arg1: i32) -> (i32, i32) {
    %c0_i32 = arith.constant 0 : i32
    %c0_i32_0 = arith.constant 0 : i32
    %c0_i32_1 = arith.constant 0 : i32
    return %c0_i32, %c0_i32_0 : i32, i32
  }
  func.func @transform_8(%arg0: i32, %arg1: i32) -> (i32, i32) {
    %c0_i32 = arith.constant 0 : i32
    %c0_i32_0 = arith.constant 0 : i32
    %c0_i32_1 = arith.constant 0 : i32
    return %c0_i32, %c0_i32_0 : i32, i32
  }
  func.func @transform_9(%arg0: i32, %arg1: i32) -> (i32, i32) {
    %c0_i32 = arith.constant 0 : i32
    %c0_i32_0 = arith.constant 0 : i32
    %c0_i32_1 = arith.constant 0 : i32
    return %c0_i32, %c0_i32_0 : i32, i32
  }
  func.func @transform_10(%arg0: i32, %arg1: i32) -> (i32, i32) {
    %c0_i32 = arith.constant 0 : i32
    %c0_i32_0 = arith.constant 0 : i32
    %c0_i32_1 = arith.constant 0 : i32
    return %c0_i32, %c0_i32_0 : i32, i32
  }
  func.func @transform_11(%arg0: i32, %arg1: i32) -> (i32, i32) {
    %c0_i32 = arith.constant 0 : i32
    %c0_i32_0 = arith.constant 0 : i32
    %c0_i32_1 = arith.constant 0 : i32
    return %c0_i32, %c0_i32_0 : i32, i32
  }
  func.func @transform_12(%arg0: i32, %arg1: i32) -> (i32, i32) {
    %c0_i32 = arith.constant 0 : i32
    %c0_i32_0 = arith.constant 0 : i32
    %c0_i32_1 = arith.constant 0 : i32
    return %c0_i32, %c0_i32_0 : i32, i32
  }
  func.func @transform_13(%arg0: i32, %arg1: i32) -> (i32, i32) {
    %c0_i32 = arith.constant 0 : i32
    %c0_i32_0 = arith.constant 0 : i32
    %c0_i32_1 = arith.constant 0 : i32
    return %c0_i32, %c0_i32_0 : i32, i32
  }
  func.func @transform_14(%arg0: i32, %arg1: i32) -> (i32, i32) {
    %c0_i32 = arith.constant 0 : i32
    %c0_i32_0 = arith.constant 0 : i32
    %c0_i32_1 = arith.constant 0 : i32
    return %c0_i32, %c0_i32_0 : i32, i32
  }
  func.func @transform_15(%arg0: i32, %arg1: i32) -> (i32, i32) {
    %c0_i32 = arith.constant 0 : i32
    %c0_i32_0 = arith.constant 0 : i32
    %c0_i32_1 = arith.constant 0 : i32
    return %c0_i32, %c0_i32_0 : i32, i32
  }
  func.func @transform_16(%arg0: i32, %arg1: i32) -> (i32, i32) {
    %c0_i32 = arith.constant 0 : i32
    %c0_i32_0 = arith.constant 0 : i32
    %c0_i32_1 = arith.constant 0 : i32
    return %c0_i32, %c0_i32_0 : i32, i32
  }
  func.func @transform_17(%arg0: i32, %arg1: i32) -> (i32, i32) {
    %c0_i32 = arith.constant 0 : i32
    %c0_i32_0 = arith.constant 0 : i32
    %c0_i32_1 = arith.constant 0 : i32
    return %c0_i32, %c0_i32_0 : i32, i32
  }
  func.func @transform_18(%arg0: i32, %arg1: i32) -> (i32, i32, i32) {
    %c0_i32 = arith.constant 0 : i32
    %c0_i32_0 = arith.constant 0 : i32
    return %arg0, %arg1, %c0_i32 : i32, i32, i32
  }
  func.func @transform_19(%arg0: i32, %arg1: i32) -> (i32, i32, i32, i32) {
    %c0_i32 = arith.constant 0 : i32
    %c0_i32_0 = arith.constant 0 : i32
    %c0_i32_1 = arith.constant 0 : i32
    return %arg0, %c0_i32, %arg1, %c0_i32_0 : i32, i32, i32, i32
  }
}

module attributes {stable_mosaic.version = 11 : i64} {
  func.func @decoder_layer_kernel(%arg0: i32, %arg1: i32, %arg2: memref<1x8x32xf32, #tpu.memory_space<vmem>>, %arg3: memref<1x1x8xf32, #tpu.memory_space<vmem>>, %arg4: memref<32x32xbf16, #tpu.memory_space<vmem>>, %arg5: memref<1x32xf32, #tpu.memory_space<vmem>>, %arg6: memref<32x32xbf16, #tpu.memory_space<vmem>>, %arg7: memref<1x32xf32, #tpu.memory_space<vmem>>, %arg8: memref<32x32xbf16, #tpu.memory_space<vmem>>, %arg9: memref<1x32xf32, #tpu.memory_space<vmem>>, %arg10: memref<32x32xbf16, #tpu.memory_space<vmem>>, %arg11: memref<1x32xf32, #tpu.memory_space<vmem>>, %arg12: memref<1x32xf32, #tpu.memory_space<vmem>>, %arg13: memref<1x32xf32, #tpu.memory_space<vmem>>, %arg14: memref<32x64xbf16, #tpu.memory_space<vmem>>, %arg15: memref<1x64xf32, #tpu.memory_space<vmem>>, %arg16: memref<64x32xbf16, #tpu.memory_space<vmem>>, %arg17: memref<1x32xf32, #tpu.memory_space<vmem>>, %arg18: memref<1x32xf32, #tpu.memory_space<vmem>>, %arg19: memref<1x32xf32, #tpu.memory_space<vmem>>, %arg20: memref<1x8x32xf32, #tpu.memory_space<vmem>>, %arg21: memref<1x4x8x8xbf16, #tpu.memory_space<vmem>>, %arg22: memref<4x8x8xbf16, #tpu.memory_space<vmem>>, %arg23: memref<4x8x8xbf16, #tpu.memory_space<vmem>>) attributes {dimension_semantics = [#tpu.dimension_semantics<parallel>, #tpu.dimension_semantics<arbitrary>], iteration_bounds = array<i64: 2, 1>, scalar_prefetch = 0 : i64, scratch_operands = 2 : i64, tpu.core_type = #tpu.core_type<tc>, window_params = [{transform_indices = @transform_0, window_bounds = array<i64: 1, 8, 32>}, {transform_indices = @transform_1, window_bounds = array<i64: 1, 1, 8>}, {pipeline_mode = #tpu.pipeline_mode<synchronous>, transform_indices = @transform_2, window_bounds = array<i64: 32, 32>}, {pipeline_mode = #tpu.pipeline_mode<synchronous>, transform_indices = @transform_3, window_bounds = array<i64: 1, 32>}, {pipeline_mode = #tpu.pipeline_mode<synchronous>, transform_indices = @transform_4, window_bounds = array<i64: 32, 32>}, {pipeline_mode = #tpu.pipeline_mode<synchronous>, transform_indices = @transform_5, window_bounds = array<i64: 1, 32>}, {pipeline_mode = #tpu.pipeline_mode<synchronous>, transform_indices = @transform_6, window_bounds = array<i64: 32, 32>}, {pipeline_mode = #tpu.pipeline_mode<synchronous>, transform_indices = @transform_7, window_bounds = array<i64: 1, 32>}, {pipeline_mode = #tpu.pipeline_mode<synchronous>, transform_indices = @transform_8, window_bounds = array<i64: 32, 32>}, {pipeline_mode = #tpu.pipeline_mode<synchronous>, transform_indices = @transform_9, window_bounds = array<i64: 1, 32>}, {pipeline_mode = #tpu.pipeline_mode<synchronous>, transform_indices = @transform_10, window_bounds = array<i64: 1, 32>}, {pipeline_mode = #tpu.pipeline_mode<synchronous>, transform_indices = @transform_11, window_bounds = array<i64: 1, 32>}, {pipeline_mode = #tpu.pipeline_mode<synchronous>, transform_indices = @transform_12, window_bounds = array<i64: 32, 64>}, {pipeline_mode = #tpu.pipeline_mode<synchronous>, transform_indices = @transform_13, window_bounds = array<i64: 1, 64>}, {pipeline_mode = #tpu.pipeline_mode<synchronous>, transform_indices = @transform_14, window_bounds = array<i64: 64, 32>}, {pipeline_mode = #tpu.pipeline_mode<synchronous>, transform_indices = @transform_15, window_bounds = array<i64: 1, 32>}, {pipeline_mode = #tpu.pipeline_mode<synchronous>, transform_indices = @transform_16, window_bounds = array<i64: 1, 32>}, {pipeline_mode = #tpu.pipeline_mode<synchronous>, transform_indices = @transform_17, window_bounds = array<i64: 1, 32>}, {transform_indices = @transform_18, window_bounds = array<i64: 1, 8, 32>}, {transform_indices = @transform_19, window_bounds = array<i64: 1, 4, 8, 8>}]} {
    %c8_i32 = arith.constant 8 : i32
    %0 = arith.muli %arg1, %c8_i32 : i32
    %1 = tpu.assume_multiple %0, 8 : i32
    %c0_i32 = arith.constant 0 : i32
    %2 = arith.cmpi eq, %arg1, %c0_i32 : i32
    %3 = arith.extui %2 : i1 to i32
    %c0_i32_0 = arith.constant 0 : i32
    %4 = arith.cmpi ne, %3, %c0_i32_0 : i32
    scf.if %4 {
      %c0_64 = arith.constant 0 : index
      %c0_65 = arith.constant 0 : index
      %c0_66 = arith.constant 0 : index
      %133 = vector.load %arg2[%c0_64, %c0_65, %c0_66] : memref<1x8x32xf32, #tpu.memory_space<vmem>>, vector<1x8x32xf32>
      %134 = vector.shape_cast %133 : vector<1x8x32xf32> to vector<8x32xf32>
      %135 = arith.truncf %134 : vector<8x32xf32> to vector<8x32xbf16>
      %c0_67 = arith.constant 0 : index
      %c0_68 = arith.constant 0 : index
      %136 = vector.load %arg6[%c0_67, %c0_68] : memref<32x32xbf16, #tpu.memory_space<vmem>>, vector<32x32xbf16>
      %cst_69 = arith.constant dense<0.000000e+00> : vector<8x32xf32>
      %137 = tpu.matmul %135, %136, %cst_69 {dimension_numbers = #tpu.dot_dimension_numbers<[1], [0], [0], [1], [0, 0, 1, 1], [], []>} : vector<8x32xbf16>, vector<32x32xbf16>, vector<8x32xf32> -> vector<8x32xf32>
      %c0_70 = arith.constant 0 : index
      %c0_71 = arith.constant 0 : index
      %138 = vector.load %arg7[%c0_70, %c0_71] : memref<1x32xf32, #tpu.memory_space<vmem>>, vector<1x32xf32>
      %139 = vector.broadcast %138 : vector<1x32xf32> to vector<8x32xf32>
      %140 = arith.addf %137, %139 : vector<8x32xf32>
      %c0_72 = arith.constant 0 : index
      %c0_73 = arith.constant 0 : index
      %141 = vector.load %arg8[%c0_72, %c0_73] : memref<32x32xbf16, #tpu.memory_space<vmem>>, vector<32x32xbf16>
      %cst_74 = arith.constant dense<0.000000e+00> : vector<8x32xf32>
      %142 = tpu.matmul %135, %141, %cst_74 {dimension_numbers = #tpu.dot_dimension_numbers<[1], [0], [0], [1], [0, 0, 1, 1], [], []>} : vector<8x32xbf16>, vector<32x32xbf16>, vector<8x32xf32> -> vector<8x32xf32>
      %c0_75 = arith.constant 0 : index
      %c0_76 = arith.constant 0 : index
      %143 = vector.load %arg9[%c0_75, %c0_76] : memref<1x32xf32, #tpu.memory_space<vmem>>, vector<1x32xf32>
      %144 = vector.broadcast %143 : vector<1x32xf32> to vector<8x32xf32>
      %145 = arith.addf %142, %144 : vector<8x32xf32>
      %146 = vector.shape_cast %140 : vector<8x32xf32> to vector<8x4x8xf32>
      %147 = tpu.transpose %146, [1, 0, 2] : vector<8x4x8xf32> -> vector<4x8x8xf32>
      %148 = arith.truncf %147 : vector<4x8x8xf32> to vector<4x8x8xbf16>
      %c0_77 = arith.constant 0 : index
      %c0_78 = arith.constant 0 : index
      %c0_79 = arith.constant 0 : index
      %149 = vector.load %arg22[%c0_77, %c0_78, %c0_79] : memref<4x8x8xbf16, #tpu.memory_space<vmem>>, vector<4x8x8xbf16>
      tpu.vector_store %arg22[%c0_77, %c0_78, %c0_79], %148 {strides = array<i32>} : memref<4x8x8xbf16, #tpu.memory_space<vmem>>, vector<4x8x8xbf16>,
      %150 = vector.shape_cast %145 : vector<8x32xf32> to vector<8x4x8xf32>
      %151 = tpu.transpose %150, [1, 0, 2] : vector<8x4x8xf32> -> vector<4x8x8xf32>
      %152 = arith.truncf %151 : vector<4x8x8xf32> to vector<4x8x8xbf16>
      %c0_80 = arith.constant 0 : index
      %c0_81 = arith.constant 0 : index
      %c0_82 = arith.constant 0 : index
      %153 = vector.load %arg23[%c0_80, %c0_81, %c0_82] : memref<4x8x8xbf16, #tpu.memory_space<vmem>>, vector<4x8x8xbf16>
      tpu.vector_store %arg23[%c0_80, %c0_81, %c0_82], %152 {strides = array<i32>} : memref<4x8x8xbf16, #tpu.memory_space<vmem>>, vector<4x8x8xbf16>,
    } else {
    }
    %c0 = arith.constant 0 : index
    %5 = arith.index_cast %1 : i32 to index
    %c0_1 = arith.constant 0 : index
    %6 = vector.load %arg2[%c0, %5, %c0_1] : memref<1x8x32xf32, #tpu.memory_space<vmem>>, vector<1x8x32xf32>
    %7 = vector.shape_cast %6 : vector<1x8x32xf32> to vector<8x32xf32>
    %8 = arith.truncf %7 : vector<8x32xf32> to vector<8x32xbf16>
    %c0_2 = arith.constant 0 : index
    %c0_3 = arith.constant 0 : index
    %9 = vector.load %arg4[%c0_2, %c0_3] : memref<32x32xbf16, #tpu.memory_space<vmem>>, vector<32x32xbf16>
    %cst = arith.constant dense<0.000000e+00> : vector<8x32xf32>
    %10 = tpu.matmul %8, %9, %cst {dimension_numbers = #tpu.dot_dimension_numbers<[1], [0], [0], [1], [0, 0, 1, 1], [], []>} : vector<8x32xbf16>, vector<32x32xbf16>, vector<8x32xf32> -> vector<8x32xf32>
    %c0_4 = arith.constant 0 : index
    %c0_5 = arith.constant 0 : index
    %11 = vector.load %arg5[%c0_4, %c0_5] : memref<1x32xf32, #tpu.memory_space<vmem>>, vector<1x32xf32>
    %12 = vector.broadcast %11 : vector<1x32xf32> to vector<8x32xf32>
    %13 = arith.addf %10, %12 : vector<8x32xf32>
    %14 = vector.shape_cast %13 : vector<8x32xf32> to vector<8x4x8xf32>
    %15 = tpu.transpose %14, [1, 0, 2] : vector<8x4x8xf32> -> vector<4x8x8xf32>
    %16 = arith.truncf %15 : vector<4x8x8xf32> to vector<4x8x8xbf16>
    %c0_6 = arith.constant 0 : index
    %c0_7 = arith.constant 0 : index
    %c0_8 = arith.constant 0 : index
    %17 = vector.load %arg22[%c0_6, %c0_7, %c0_8] : memref<4x8x8xbf16, #tpu.memory_space<vmem>>, vector<4x8x8xbf16>
    "tpu.trace_start"() <{level = 10 : i32, message = "hqd,hkd->hqk"}> : () -> ()
    %cst_9 = arith.constant dense<0.000000e+00> : vector<4x8x8xf32>
    %18 = tpu.matmul %16, %17, %cst_9 {dimension_numbers = #tpu.dot_dimension_numbers<[2], [2], [1], [1], [0, 0, 0, 1, 1, 1], [0], [0]>} : vector<4x8x8xbf16>, vector<4x8x8xbf16>, vector<4x8x8xf32> -> vector<4x8x8xf32>
    "tpu.trace_stop"() : () -> ()
    %19 = tpu.iota {dimensions = array<i32: 0>} : vector<8x8xi32>
    %20 = vector.broadcast %1 : i32 to vector<8x8xi32>
    %21 = arith.addi %20, %19 : vector<8x8xi32>
    %22 = tpu.iota {dimensions = array<i32: 1>} : vector<8x8xi32>
    %23 = arith.cmpi sgt, %22, %21 : vector<8x8xi32>
    %c0_10 = arith.constant 0 : index
    %c0_11 = arith.constant 0 : index
    %c0_12 = arith.constant 0 : index
    %24 = vector.load %arg3[%c0_10, %c0_11, %c0_12] : memref<1x1x8xf32, #tpu.memory_space<vmem>>, vector<1x1x8xf32>
    %25 = vector.shape_cast %24 : vector<1x1x8xf32> to vector<1x8xf32>
    %cst_13 = arith.constant 0.000000e+00 : f32
    %26 = vector.broadcast %cst_13 : f32 to vector<1x8xf32>
    %27 = arith.cmpf ogt, %25, %26 : vector<1x8xf32>
    %28 = vector.broadcast %27 : vector<1x8xi1> to vector<8x8xi1>
    %29 = arith.ori %23, %28 : vector<8x8xi1>
    %30 = vector.shape_cast %29 : vector<8x8xi1> to vector<1x8x8xi1>
    %cst_14 = arith.constant -1.000000e+09 : f32
    %31 = vector.shape_cast %30 : vector<1x8x8xi1> to vector<1x8x8xi1>
    %32 = vector.broadcast %31 : vector<1x8x8xi1> to vector<4x8x8xi1>
    %33 = vector.broadcast %cst_14 : f32 to vector<4x8x8xf32>
    %34 = arith.select %32, %33, %18 : vector<4x8x8xi1>, vector<4x8x8xf32>
    %cst_15 = arith.constant dense<0xFF800000> : vector<4x8xf32>
    %35 = vector.multi_reduction <maximumf>, %34, %cst_15 [2] : vector<4x8x8xf32> to vector<4x8xf32>
    %36 = vector.shape_cast %35 : vector<4x8xf32> to vector<4x8x1xf32>
    %37 = vector.broadcast %36 : vector<4x8x1xf32> to vector<4x8x8xf32>
    %38 = arith.subf %34, %37 : vector<4x8x8xf32>
    %39 = math.exp %38 : vector<4x8x8xf32>
    %cst_16 = arith.constant dense<0.000000e+00> : vector<4x8xf32>
    %40 = vector.multi_reduction <add>, %39, %cst_16 [2] : vector<4x8x8xf32> to vector<4x8xf32>
    %41 = vector.shape_cast %40 : vector<4x8xf32> to vector<4x8x1xf32>
    %42 = tpu.reciprocal %41 {approx = true} : vector<4x8x1xf32> -> vector<4x8x1xf32>
    %43 = vector.broadcast %42 : vector<4x8x1xf32> to vector<4x8x8xf32>
    %44 = arith.mulf %39, %43 : vector<4x8x8xf32>
    %45 = arith.truncf %44 : vector<4x8x8xf32> to vector<4x8x8xbf16>
    %c0_17 = arith.constant 0 : index
    %c0_18 = arith.constant 0 : index
    %c0_19 = arith.constant 0 : index
    %c0_20 = arith.constant 0 : index
    %46 = vector.load %arg21[%c0_17, %c0_18, %c0_19, %c0_20] : memref<1x4x8x8xbf16, #tpu.memory_space<vmem>>, vector<1x4x8x8xbf16>
    %47 = vector.shape_cast %46 : vector<1x4x8x8xbf16> to vector<4x8x8xbf16>
    %48 = vector.shape_cast %45 : vector<4x8x8xbf16> to vector<1x4x8x8xbf16>
    tpu.vector_store %arg21[%c0_17, %c0_18, %c0_19, %c0_20], %48 {strides = array<i32>} : memref<1x4x8x8xbf16, #tpu.memory_space<vmem>>, vector<1x4x8x8xbf16>,
    %49 = arith.truncf %44 : vector<4x8x8xf32> to vector<4x8x8xbf16>
    %c0_21 = arith.constant 0 : index
    %c0_22 = arith.constant 0 : index
    %c0_23 = arith.constant 0 : index
    %50 = vector.load %arg23[%c0_21, %c0_22, %c0_23] : memref<4x8x8xbf16, #tpu.memory_space<vmem>>, vector<4x8x8xbf16>
    "tpu.trace_start"() <{level = 10 : i32, message = "hqk,hkd->hqd"}> : () -> ()
    %cst_24 = arith.constant dense<0.000000e+00> : vector<4x8x8xf32>
    %51 = tpu.matmul %49, %50, %cst_24 {dimension_numbers = #tpu.dot_dimension_numbers<[2], [1], [1], [2], [0, 0, 0, 1, 1, 2], [0], [0]>} : vector<4x8x8xbf16>, vector<4x8x8xbf16>, vector<4x8x8xf32> -> vector<4x8x8xf32>
    "tpu.trace_stop"() : () -> ()
    %52 = tpu.transpose %51, [1, 0, 2] : vector<4x8x8xf32> -> vector<8x4x8xf32>
    %53 = vector.shape_cast %52 : vector<8x4x8xf32> to vector<8x32xf32>
    %54 = arith.truncf %53 : vector<8x32xf32> to vector<8x32xbf16>
    %c0_25 = arith.constant 0 : index
    %c0_26 = arith.constant 0 : index
    %55 = vector.load %arg10[%c0_25, %c0_26] : memref<32x32xbf16, #tpu.memory_space<vmem>>, vector<32x32xbf16>
    %cst_27 = arith.constant dense<0.000000e+00> : vector<8x32xf32>
    %56 = tpu.matmul %54, %55, %cst_27 {dimension_numbers = #tpu.dot_dimension_numbers<[1], [0], [0], [1], [0, 0, 1, 1], [], []>} : vector<8x32xbf16>, vector<32x32xbf16>, vector<8x32xf32> -> vector<8x32xf32>
    %c0_28 = arith.constant 0 : index
    %c0_29 = arith.constant 0 : index
    %57 = vector.load %arg11[%c0_28, %c0_29] : memref<1x32xf32, #tpu.memory_space<vmem>>, vector<1x32xf32>
    %58 = vector.broadcast %57 : vector<1x32xf32> to vector<8x32xf32>
    %59 = arith.addf %56, %58 : vector<8x32xf32>
    %60 = arith.addf %7, %59 : vector<8x32xf32>
    %c0_30 = arith.constant 0 : index
    %c0_31 = arith.constant 0 : index
    %61 = vector.load %arg12[%c0_30, %c0_31] : memref<1x32xf32, #tpu.memory_space<vmem>>, vector<1x32xf32>
    %c0_32 = arith.constant 0 : index
    %c0_33 = arith.constant 0 : index
    %62 = vector.load %arg13[%c0_32, %c0_33] : memref<1x32xf32, #tpu.memory_space<vmem>>, vector<1x32xf32>
    %cst_34 = arith.constant dense<0.000000e+00> : vector<8xf32>
    %63 = vector.multi_reduction <add>, %60, %cst_34 [1] : vector<8x32xf32> to vector<8xf32>
    %64 = vector.shape_cast %63 : vector<8xf32> to vector<8x1xf32>
    %cst_35 = arith.constant 3.200000e+01 : f32
    %65 = vector.broadcast %cst_35 : f32 to vector<8x1xf32>
    %66 = arith.divf %64, %65 : vector<8x1xf32>
    %67 = vector.broadcast %66 : vector<8x1xf32> to vector<8x32xf32>
    %68 = arith.subf %60, %67 : vector<8x32xf32>
    %69 = arith.mulf %68, %68 : vector<8x32xf32>
    %cst_36 = arith.constant dense<0.000000e+00> : vector<8xf32>
    %70 = vector.multi_reduction <add>, %69, %cst_36 [1] : vector<8x32xf32> to vector<8xf32>
    %71 = vector.shape_cast %70 : vector<8xf32> to vector<8x1xf32>
    %cst_37 = arith.constant 3.200000e+01 : f32
    %72 = vector.broadcast %cst_37 : f32 to vector<8x1xf32>
    %73 = arith.divf %71, %72 : vector<8x1xf32>
    %74 = vector.broadcast %66 : vector<8x1xf32> to vector<8x32xf32>
    %75 = arith.subf %60, %74 : vector<8x32xf32>
    %cst_38 = arith.constant 9.99999974E-6 : f32
    %76 = vector.broadcast %cst_38 : f32 to vector<8x1xf32>
    %77 = arith.addf %73, %76 : vector<8x1xf32>
    %78 = math.rsqrt %77 : vector<8x1xf32>
    %79 = vector.broadcast %78 : vector<8x1xf32> to vector<8x32xf32>
    %80 = arith.mulf %75, %79 : vector<8x32xf32>
    %81 = vector.broadcast %61 : vector<1x32xf32> to vector<8x32xf32>
    %82 = arith.mulf %80, %81 : vector<8x32xf32>
    %83 = vector.broadcast %62 : vector<1x32xf32> to vector<8x32xf32>
    %84 = arith.addf %82, %83 : vector<8x32xf32>
    %85 = arith.truncf %84 : vector<8x32xf32> to vector<8x32xbf16>
    %c0_39 = arith.constant 0 : index
    %c0_40 = arith.constant 0 : index
    %86 = vector.load %arg14[%c0_39, %c0_40] : memref<32x64xbf16, #tpu.memory_space<vmem>>, vector<32x64xbf16>
    %cst_41 = arith.constant dense<0.000000e+00> : vector<8x64xf32>
    %87 = tpu.matmul %85, %86, %cst_41 {dimension_numbers = #tpu.dot_dimension_numbers<[1], [0], [0], [1], [0, 0, 1, 1], [], []>} : vector<8x32xbf16>, vector<32x64xbf16>, vector<8x64xf32> -> vector<8x64xf32>
    %c0_42 = arith.constant 0 : index
    %c0_43 = arith.constant 0 : index
    %88 = vector.load %arg15[%c0_42, %c0_43] : memref<1x64xf32, #tpu.memory_space<vmem>>, vector<1x64xf32>
    %89 = vector.broadcast %88 : vector<1x64xf32> to vector<8x64xf32>
    %90 = arith.addf %87, %89 : vector<8x64xf32>
    %cst_44 = arith.constant 5.000000e-01 : f32
    %91 = vector.broadcast %cst_44 : f32 to vector<8x64xf32>
    %92 = arith.mulf %91, %90 : vector<8x64xf32>
    %cst_45 = arith.constant 0.707106769 : f32
    %93 = vector.broadcast %cst_45 : f32 to vector<8x64xf32>
    %94 = arith.mulf %90, %93 : vector<8x64xf32>
    %95 = math.erf %94 : vector<8x64xf32>
    %cst_46 = arith.constant 1.000000e+00 : f32
    %96 = vector.broadcast %cst_46 : f32 to vector<8x64xf32>
    %97 = arith.addf %96, %95 : vector<8x64xf32>
    %98 = arith.mulf %92, %97 : vector<8x64xf32>
    %99 = arith.truncf %98 : vector<8x64xf32> to vector<8x64xbf16>
    %c0_47 = arith.constant 0 : index
    %c0_48 = arith.constant 0 : index
    %100 = vector.load %arg16[%c0_47, %c0_48] : memref<64x32xbf16, #tpu.memory_space<vmem>>, vector<64x32xbf16>
    %cst_49 = arith.constant dense<0.000000e+00> : vector<8x32xf32>
    %101 = tpu.matmul %99, %100, %cst_49 {dimension_numbers = #tpu.dot_dimension_numbers<[1], [0], [0], [1], [0, 0, 1, 1], [], []>} : vector<8x64xbf16>, vector<64x32xbf16>, vector<8x32xf32> -> vector<8x32xf32>
    %c0_50 = arith.constant 0 : index
    %c0_51 = arith.constant 0 : index
    %102 = vector.load %arg17[%c0_50, %c0_51] : memref<1x32xf32, #tpu.memory_space<vmem>>, vector<1x32xf32>
    %103 = vector.broadcast %102 : vector<1x32xf32> to vector<8x32xf32>
    %104 = arith.addf %101, %103 : vector<8x32xf32>
    %105 = arith.addf %84, %104 : vector<8x32xf32>
    %c0_52 = arith.constant 0 : index
    %c0_53 = arith.constant 0 : index
    %106 = vector.load %arg18[%c0_52, %c0_53] : memref<1x32xf32, #tpu.memory_space<vmem>>, vector<1x32xf32>
    %c0_54 = arith.constant 0 : index
    %c0_55 = arith.constant 0 : index
    %107 = vector.load %arg19[%c0_54, %c0_55] : memref<1x32xf32, #tpu.memory_space<vmem>>, vector<1x32xf32>
    %cst_56 = arith.constant dense<0.000000e+00> : vector<8xf32>
    %108 = vector.multi_reduction <add>, %105, %cst_56 [1] : vector<8x32xf32> to vector<8xf32>
    %109 = vector.shape_cast %108 : vector<8xf32> to vector<8x1xf32>
    %cst_57 = arith.constant 3.200000e+01 : f32
    %110 = vector.broadcast %cst_57 : f32 to vector<8x1xf32>
    %111 = arith.divf %109, %110 : vector<8x1xf32>
    %112 = vector.broadcast %111 : vector<8x1xf32> to vector<8x32xf32>
    %113 = arith.subf %105, %112 : vector<8x32xf32>
    %114 = arith.mulf %113, %113 : vector<8x32xf32>
    %cst_58 = arith.constant dense<0.000000e+00> : vector<8xf32>
    %115 = vector.multi_reduction <add>, %114, %cst_58 [1] : vector<8x32xf32> to vector<8xf32>
    %116 = vector.shape_cast %115 : vector<8xf32> to vector<8x1xf32>
    %cst_59 = arith.constant 3.200000e+01 : f32
    %117 = vector.broadcast %cst_59 : f32 to vector<8x1xf32>
    %118 = arith.divf %116, %117 : vector<8x1xf32>
    %119 = vector.broadcast %111 : vector<8x1xf32> to vector<8x32xf32>
    %120 = arith.subf %105, %119 : vector<8x32xf32>
    %cst_60 = arith.constant 9.99999974E-6 : f32
    %121 = vector.broadcast %cst_60 : f32 to vector<8x1xf32>
    %122 = arith.addf %118, %121 : vector<8x1xf32>
    %123 = math.rsqrt %122 : vector<8x1xf32>
    %124 = vector.broadcast %123 : vector<8x1xf32> to vector<8x32xf32>
    %125 = arith.mulf %120, %124 : vector<8x32xf32>
    %126 = vector.broadcast %106 : vector<1x32xf32> to vector<8x32xf32>
    %127 = arith.mulf %125, %126 : vector<8x32xf32>
    %128 = vector.broadcast %107 : vector<1x32xf32> to vector<8x32xf32>
    %129 = arith.addf %127, %128 : vector<8x32xf32>
    %c0_61 = arith.constant 0 : index
    %c0_62 = arith.constant 0 : index
    %c0_63 = arith.constant 0 : index
    %130 = vector.load %arg20[%c0_61, %c0_62, %c0_63] : memref<1x8x32xf32, #tpu.memory_space<vmem>>, vector<1x8x32xf32>
    %131 = vector.shape_cast %130 : vector<1x8x32xf32> to vector<8x32xf32>
    %132 = vector.shape_cast %129 : vector<8x32xf32> to vector<1x8x32xf32>
    tpu.vector_store %arg20[%c0_61, %c0_62, %c0_63], %132 {strides = array<i32>} : memref<1x8x32xf32, #tpu.memory_space<vmem>>, vector<1x8x32xf32>,
    return
  }
  func.func @transform_0(%arg0: i32, %arg1: i32) -> (i32, i32, i32) {
    %c0_i32 = arith.constant 0 : i32
    %c0_i32_0 = arith.constant 0 : i32
    %c0_i32_1 = arith.constant 0 : i32
    return %arg0, %c0_i32, %c0_i32_0 : i32, i32, i32
  }
  func.func @transform_1(%arg0: i32, %arg1: i32) -> (i32, i32, i32) {
    %c0_i32 = arith.constant 0 : i32
    %c0_i32_0 = arith.constant 0 : i32
    %c0_i32_1 = arith.constant 0 : i32
    return %arg0, %c0_i32, %c0_i32_0 : i32, i32, i32
  }
  func.func @transform_2(%arg0: i32, %arg1: i32) -> (i32, i32) {
    %c0_i32 = arith.constant 0 : i32
    %c0_i32_0 = arith.constant 0 : i32
    %c0_i32_1 = arith.constant 0 : i32
    return %c0_i32, %c0_i32_0 : i32, i32
  }
  func.func @transform_3(%arg0: i32, %arg1: i32) -> (i32, i32) {
    %c0_i32 = arith.constant 0 : i32
    %c0_i32_0 = arith.constant 0 : i32
    %c0_i32_1 = arith.constant 0 : i32
    return %c0_i32, %c0_i32_0 : i32, i32
  }
  func.func @transform_4(%arg0: i32, %arg1: i32) -> (i32, i32) {
    %c0_i32 = arith.constant 0 : i32
    %c0_i32_0 = arith.constant 0 : i32
    %c0_i32_1 = arith.constant 0 : i32
    return %c0_i32, %c0_i32_0 : i32, i32
  }
  func.func @transform_5(%arg0: i32, %arg1: i32) -> (i32, i32) {
    %c0_i32 = arith.constant 0 : i32
    %c0_i32_0 = arith.constant 0 : i32
    %c0_i32_1 = arith.constant 0 : i32
    return %c0_i32, %c0_i32_0 : i32, i32
  }
  func.func @transform_6(%arg0: i32, %arg1: i32) -> (i32, i32) {
    %c0_i32 = arith.constant 0 : i32
    %c0_i32_0 = arith.constant 0 : i32
    %c0_i32_1 = arith.constant 0 : i32
    return %c0_i32, %c0_i32_0 : i32, i32
  }
  func.func @transform_7(%arg0: i32, %arg1: i32) -> (i32, i32) {
    %c0_i32 = arith.constant 0 : i32
    %c0_i32_0 = arith.constant 0 : i32
    %c0_i32_1 = arith.constant 0 : i32
    return %c0_i32, %c0_i32_0 : i32, i32
  }
  func.func @transform_8(%arg0: i32, %arg1: i32) -> (i32, i32) {
    %c0_i32 = arith.constant 0 : i32
    %c0_i32_0 = arith.constant 0 : i32
    %c0_i32_1 = arith.constant 0 : i32
    return %c0_i32, %c0_i32_0 : i32, i32
  }
  func.func @transform_9(%arg0: i32, %arg1: i32) -> (i32, i32) {
    %c0_i32 = arith.constant 0 : i32
    %c0_i32_0 = arith.constant 0 : i32
    %c0_i32_1 = arith.constant 0 : i32
    return %c0_i32, %c0_i32_0 : i32, i32
  }
  func.func @transform_10(%arg0: i32, %arg1: i32) -> (i32, i32) {
    %c0_i32 = arith.constant 0 : i32
    %c0_i32_0 = arith.constant 0 : i32
    %c0_i32_1 = arith.constant 0 : i32
    return %c0_i32, %c0_i32_0 : i32, i32
  }
  func.func @transform_11(%arg0: i32, %arg1: i32) -> (i32, i32) {
    %c0_i32 = arith.constant 0 : i32
    %c0_i32_0 = arith.constant 0 : i32
    %c0_i32_1 = arith.constant 0 : i32
    return %c0_i32, %c0_i32_0 : i32, i32
  }
  func.func @transform_12(%arg0: i32, %arg1: i32) -> (i32, i32) {
    %c0_i32 = arith.constant 0 : i32
    %c0_i32_0 = arith.constant 0 : i32
    %c0_i32_1 = arith.constant 0 : i32
    return %c0_i32, %c0_i32_0 : i32, i32
  }
  func.func @transform_13(%arg0: i32, %arg1: i32) -> (i32, i32) {
    %c0_i32 = arith.constant 0 : i32
    %c0_i32_0 = arith.constant 0 : i32
    %c0_i32_1 = arith.constant 0 : i32
    return %c0_i32, %c0_i32_0 : i32, i32
  }
  func.func @transform_14(%arg0: i32, %arg1: i32) -> (i32, i32) {
    %c0_i32 = arith.constant 0 : i32
    %c0_i32_0 = arith.constant 0 : i32
    %c0_i32_1 = arith.constant 0 : i32
    return %c0_i32, %c0_i32_0 : i32, i32
  }
  func.func @transform_15(%arg0: i32, %arg1: i32) -> (i32, i32) {
    %c0_i32 = arith.constant 0 : i32
    %c0_i32_0 = arith.constant 0 : i32
    %c0_i32_1 = arith.constant 0 : i32
    return %c0_i32, %c0_i32_0 : i32, i32
  }
  func.func @transform_16(%arg0: i32, %arg1: i32) -> (i32, i32) {
    %c0_i32 = arith.constant 0 : i32
    %c0_i32_0 = arith.constant 0 : i32
    %c0_i32_1 = arith.constant 0 : i32
    return %c0_i32, %c0_i32_0 : i32, i32
  }
  func.func @transform_17(%arg0: i32, %arg1: i32) -> (i32, i32) {
    %c0_i32 = arith.constant 0 : i32
    %c0_i32_0 = arith.constant 0 : i32
    %c0_i32_1 = arith.constant 0 : i32
    return %c0_i32, %c0_i32_0 : i32, i32
  }
  func.func @transform_18(%arg0: i32, %arg1: i32) -> (i32, i32, i32) {
    %c0_i32 = arith.constant 0 : i32
    %c0_i32_0 = arith.constant 0 : i32
    return %arg0, %arg1, %c0_i32 : i32, i32, i32
  }
  func.func @transform_19(%arg0: i32, %arg1: i32) -> (i32, i32, i32, i32) {
    %c0_i32 = arith.constant 0 : i32
    %c0_i32_0 = arith.constant 0 : i32
    %c0_i32_1 = arith.constant 0 : i32
    return %arg0, %c0_i32, %arg1, %c0_i32_0 : i32, i32, i32, i32
  }
}

</mosaic_0001>

<llo_original>
// kernel: tpu_custom_call.1
$region0: #{tpu_custom_call.1}
  #allocation0 [shape = 'u32[]', space=smem, size = 0x4, offset = 0x4, fixed_abs, tag = 'smem constant byte address 0x4 - core index']
  #allocation1 [shape = 'u32[144,128]{1,0:T(1,128)}', space=vmem, size = 0x12000, scoped, tag = 'internal scratch']
  #allocation2 [shape = 'bf16[4,8,8]{2,1,0:T(8,128)(2,1)}', space=vmem, size = 0x2000, scoped, tag = 'scratch operand']
  #allocation3 [shape = 'bf16[4,8,8]{2,1,0:T(8,128)(2,1)}', space=vmem, size = 0x2000, scoped, tag = 'scratch operand']
  %s0 = inlined_call_operand.vmem [shape: f32[2,8,32], index: 0, kind: input, shape index: {}]
  %s1 = inlined_call_operand.hbm [shape: f32[2,1,8], index: 1, kind: input, shape index: {}]
  %s2 = inlined_call_operand.vmem [shape: bf16[32,32], index: 2, kind: input, shape index: {}]
  %s3 = inlined_call_operand.vmem [shape: f32[1,32], index: 3, kind: input, shape index: {}]
  %s4 = inlined_call_operand.vmem [shape: bf16[32,32], index: 4, kind: input, shape index: {}]
  %s5 = inlined_call_operand.vmem [shape: f32[1,32], index: 5, kind: input, shape index: {}]
  %s6 = inlined_call_operand.hbm [shape: bf16[32,32], index: 6, kind: input, shape index: {}]
  %s7 = inlined_call_operand.vmem [shape: f32[1,32], index: 7, kind: input, shape index: {}]
  %s8 = inlined_call_operand.hbm [shape: bf16[32,32], index: 8, kind: input, shape index: {}]
  %s9 = inlined_call_operand.vmem [shape: f32[1,32], index: 9, kind: input, shape index: {}]
  %s10 = inlined_call_operand.vmem [shape: f32[1,32], index: 10, kind: input, shape index: {}]
  %s11 = inlined_call_operand.vmem [shape: f32[1,32], index: 11, kind: input, shape index: {}]
  %s12 = inlined_call_operand.hbm [shape: bf16[32,64], index: 12, kind: input, shape index: {}]
  %s13 = inlined_call_operand.vmem [shape: f32[1,64], index: 13, kind: input, shape index: {}]
  %s14 = inlined_call_operand.vmem [shape: bf16[64,32], index: 14, kind: input, shape index: {}]
  %s15 = inlined_call_operand.vmem [shape: f32[1,32], index: 15, kind: input, shape index: {}]
  %s16 = inlined_call_operand.vmem [shape: f32[1,32], index: 16, kind: input, shape index: {}]
  %s17 = inlined_call_operand.vmem [shape: f32[1,32], index: 17, kind: input, shape index: {}]
  %s18 = inlined_call_operand.hbm [shape: f32[2,8,32], index: 18, kind: output, shape index: {0}]
  %s19 = inlined_call_operand.hbm [shape: bf16[2,4,8,8], index: 19, kind: output, shape index: {1}]
  %20 = xla_tuple %s18, %s19
  %s21 = sld [smem:[#allocation0]]
  $region133: #{tpu_custom_call.1} parent=0
    _
  %s23 = ssub.s32 1, %s21
  %s24 = scalar_select 0, %s23, %s21
  $region1: #{tpu_custom_call.1} parent=0
    #allocation4 [shape = 'u8[1024]{0}', space=vmem, size = 0x400, scoped, tag = 'input window, operand 1']
    #allocation5 [shape = 's32[2]{0}', space=sflag, size = 0x8, scoped, tag = 'scoped memory for tpu_custom_call.1']
    #allocation6 [shape = 's32[2]{0}', space=sflag, size = 0x8, scoped, tag = 'scoped memory for tpu_custom_call.1']
    #allocation7 [shape = 'u8[8192]{0}', space=vmem, size = 0x2000, scoped, tag = 'input window, operand 6, single buffered']
    #allocation8 [shape = 's32[1]{0}', space=sflag, size = 0x4, scoped, tag = 'scoped memory for tpu_custom_call.1']
    #allocation9 [shape = 'u8[8192]{0}', space=vmem, size = 0x2000, scoped, tag = 'input window, operand 8, single buffered']
    #allocation10 [shape = 'u8[8192]{0}', space=vmem, size = 0x2000, scoped, tag = 'input window, operand 12, single buffered']
    #allocation11 [shape = 's32[1]{0}', space=sflag, size = 0x4, scoped, tag = 'scoped memory for tpu_custom_call.1']
    #allocation12 [shape = 'u8[8192]{0}', space=vmem, size = 0x2000, scoped, tag = 'output window, operand 0']
    #allocation13 [shape = 'u8[16384]{0}', space=vmem, size = 0x4000, scoped, tag = 'output window, operand 1']
    #allocation14 [shape = 's32[2]{0}', space=sflag, size = 0x8, scoped, tag = 'scoped memory for tpu_custom_call.1']
    %25 = vsyncpa [#allocation5], 0
    %s26 = scalar_lea.sflag [#allocation5], 1
    %27 = vsyncpa %s26, 0
    %28 = vsyncpa [#allocation8], 0
    %29 = vsyncpa [#allocation11], 0
    %30 = vsyncpa [#allocation6], 0
    %s31 = scalar_lea.sflag [#allocation6], 1
    %32 = vsyncpa %s31, 0
    %33 = vsyncpa [#allocation14], 0
    %s34 = scalar_lea.sflag [#allocation14], 1
    %35 = vsyncpa %s34, 0
    loop: start=0, step=1, limit=4
    $region2: #{tpu_custom_call.1} parent=1 // loop_pre_header
      _
    $region3: #{tpu_custom_call.1} parent=1 // loop_header
      %s37 = sphi 0, %s41
      %p38 = scmp.ge.s32.totalorder %s37, 4
      %s44 = sphi 0, %s56
      %s45 = sphi 0, %s52
      %s46 = sphi 0, %s44
      %s47 = sphi 0, %s45
      %s48 = sphi 0, %s46
      %s49 = sphi 0, %s47
      %s59 = sphi 0, %s61
      %s62 = sphi 0, %s59
      %s63 = sphi 0, %s62
      %s79 = sphi 0, %s63
      %s85 = sphi 0, %s87
      %s88 = sphi 0, %s85
      %s89 = sphi 0, %s88
      %s105 = sphi 0, %s89
      %s109 = sphi 0, %s109
      %s111 = sphi 0, %s109
      %s112 = sphi 0, %s111
      %s126 = sphi 0, %s112
      %s130 = sphi 0, %s130
      %s132 = sphi 0, %s130
      %s133 = sphi 0, %s132
      %s147 = sphi 0, %s133
      %s151 = sphi 0, %s151
      %s153 = sphi 0, %s151
      %s154 = sphi 0, %s153
      %s168 = sphi 0, %s154
      %s172 = sphi 0, %s172
      %s174 = sphi 0, %s172
      %s175 = sphi 0, %s174
      %s189 = sphi 0, %s175
      %s193 = sphi 0, %s193
      %s195 = sphi 0, %s193
      %s196 = sphi 0, %s195
      %s210 = sphi 0, %s196
      %s214 = sphi 0, %s214
      %s216 = sphi 0, %s214
      %s217 = sphi 0, %s216
      %s231 = sphi 0, %s217
      %s235 = sphi 0, %s235
      %s237 = sphi 0, %s235
      %s238 = sphi 0, %s237
      %s252 = sphi 0, %s238
      %s256 = sphi 0, %s256
      %s258 = sphi 0, %s256
      %s259 = sphi 0, %s258
      %s273 = sphi 0, %s259
      %s277 = sphi 0, %s277
      %s279 = sphi 0, %s277
      %s280 = sphi 0, %s279
      %s294 = sphi 0, %s280
      %s298 = sphi 0, %s298
      %s300 = sphi 0, %s298
      %s301 = sphi 0, %s300
      %s315 = sphi 0, %s301
      %s319 = sphi 0, %s319
      %s321 = sphi 0, %s319
      %s322 = sphi 0, %s321
      %s336 = sphi 0, %s322
      %s340 = sphi 0, %s340
      %s342 = sphi 0, %s340
      %s343 = sphi 0, %s342
      %s357 = sphi 0, %s343
      %s361 = sphi 0, %s361
      %s363 = sphi 0, %s361
      %s364 = sphi 0, %s363
      %s378 = sphi 0, %s364
      %s382 = sphi 0, %s382
      %s384 = sphi 0, %s382
      %s385 = sphi 0, %s384
      %s399 = sphi 0, %s385
      %s403 = sphi 0, %s403
      %s405 = sphi 0, %s403
      %s406 = sphi 0, %s405
      %s420 = sphi 0, %s406
      %s424 = sphi 0, %s424
      %s426 = sphi 0, %s424
      %s427 = sphi 0, %s426
      %s441 = sphi 0, %s427
      %s449 = sphi 0, %s451
      %s452 = sphi 0, %s449
      %s453 = sphi 0, %s452
      %s469 = sphi 0, %s453
      %s477 = sphi 0, %s479
      %s480 = sphi 0, %s477
      %s481 = sphi 0, %s480
      %s497 = sphi 0, %s481
    $region4: #{tpu_custom_call.1} parent=1 // loop_header_branch
      %40 = sbr.rel (%p38) target = $region8
    $region5: #{tpu_custom_call.1} parent=1 // loop_body
      %s42 = ssub.s32 %s37, 1
      %s43 = ssub.s32 %s37, 2
      %s50 = sadd.s32 1, %s45
      %p51 = scmp.ge.s32.totalorder %s50, 1
      %s52 = scalar_select %p51, 0, %s50
      %s53 = sadd.s32 1, %s44
      %s54 = scalar_select %p51, %s53, %s44
      %p55 = scmp.ge.s32.totalorder %s54, 2
      %s56 = scalar_select %p55, 0, %s54
      %s57 = ssub.s32 %s44, %s56
      %p58 = scmp.eq.s32.totalorder %s57, 0
      %s60 = sadd.s32 %s59, 1
      %s61 = scalar_select %p58, %s59, %s60
      %p64 = pneg %p58
      %p65 = scmp.eq.s32.totalorder %s37, 1
      %p66 = por %p64, %p65
      %p67 = scmp.ne.s32.totalorder %s59, %s62
      %p68 = scmp.eq.s32.totalorder %s37, 0
      %p69 = por %p67, %p68
      %p70 = scmp.ne.s32.totalorder %s59, %s62
      %p71 = scmp.eq.s32.totalorder %s42, 1
      %p72 = por %p70, %p71
      %p73 = scmp.ne.s32.totalorder %s62, %s63
      %p74 = scmp.eq.s32.totalorder %s42, 0
      %p75 = por %p73, %p74
      %p76 = scmp.ne.s32.totalorder %s62, %s63
      %p77 = scmp.eq.s32.totalorder %s43, 1
      %p78 = por %p76, %p77
      %p80 = scmp.ne.s32.totalorder %s63, %s79
      %p81 = scmp.eq.s32.totalorder %s43, 0
      %p82 = por %p80, %p81
      %s83 = ssub.s32 %s44, %s56
      %p84 = scmp.eq.s32.totalorder %s83, 0
      %s86 = sadd.s32 %s85, 1
      %s87 = scalar_select %p84, %s85, %s86
      %p90 = pneg %p84
      %p91 = scmp.eq.s32.totalorder %s37, 1
      %p92 = por %p90, %p91
      %p93 = scmp.ne.s32.totalorder %s85, %s88
      %p94 = scmp.eq.s32.totalorder %s37, 0
      %p95 = por %p93, %p94
      %p96 = scmp.ne.s32.totalorder %s85, %s88
      %p97 = scmp.eq.s32.totalorder %s42, 1
      %p98 = por %p96, %p97
      %p99 = scmp.ne.s32.totalorder %s88, %s89
      %p100 = scmp.eq.s32.totalorder %s42, 0
      %p101 = por %p99, %p100
      %p102 = scmp.ne.s32.totalorder %s88, %s89
      %p103 = scmp.eq.s32.totalorder %s43, 1
      %p104 = por %p102, %p103
      %p106 = scmp.ne.s32.totalorder %s89, %s105
      %p107 = scmp.eq.s32.totalorder %s43, 0
      %p108 = por %p106, %p107
      %s110 = sadd.s32 %s109, 1
      %p113 = scmp.eq.s32.totalorder %s37, 1
      %p114 = scmp.ne.s32.totalorder %s109, %s111
      %p115 = scmp.eq.s32.totalorder %s37, 0
      %p116 = por %p114, %p115
      %p117 = scmp.ne.s32.totalorder %s109, %s111
      %p118 = scmp.eq.s32.totalorder %s42, 1
      %p119 = por %p117, %p118
      %p120 = scmp.ne.s32.totalorder %s111, %s112
      %p121 = scmp.eq.s32.totalorder %s42, 0
      %p122 = por %p120, %p121
      %p123 = scmp.ne.s32.totalorder %s111, %s112
      %p124 = scmp.eq.s32.totalorder %s43, 1
      %p125 = por %p123, %p124
      %p127 = scmp.ne.s32.totalorder %s112, %s126
      %p128 = scmp.eq.s32.totalorder %s43, 0
      %p129 = por %p127, %p128
      %s131 = sadd.s32 %s130, 1
      %p134 = scmp.eq.s32.totalorder %s37, 1
      %p135 = scmp.ne.s32.totalorder %s130, %s132
      %p136 = scmp.eq.s32.totalorder %s37, 0
      %p137 = por %p135, %p136
      %p138 = scmp.ne.s32.totalorder %s130, %s132
      %p139 = scmp.eq.s32.totalorder %s42, 1
      %p140 = por %p138, %p139
      %p141 = scmp.ne.s32.totalorder %s132, %s133
      %p142 = scmp.eq.s32.totalorder %s42, 0
      %p143 = por %p141, %p142
      %p144 = scmp.ne.s32.totalorder %s132, %s133
      %p145 = scmp.eq.s32.totalorder %s43, 1
      %p146 = por %p144, %p145
      %p148 = scmp.ne.s32.totalorder %s133, %s147
      %p149 = scmp.eq.s32.totalorder %s43, 0
      %p150 = por %p148, %p149
      %s152 = sadd.s32 %s151, 1
      %p155 = scmp.eq.s32.totalorder %s37, 1
      %p156 = scmp.ne.s32.totalorder %s151, %s153
      %p157 = scmp.eq.s32.totalorder %s37, 0
      %p158 = por %p156, %p157
      %p159 = scmp.ne.s32.totalorder %s151, %s153
      %p160 = scmp.eq.s32.totalorder %s42, 1
      %p161 = por %p159, %p160
      %p162 = scmp.ne.s32.totalorder %s153, %s154
      %p163 = scmp.eq.s32.totalorder %s42, 0
      %p164 = por %p162, %p163
      %p165 = scmp.ne.s32.totalorder %s153, %s154
      %p166 = scmp.eq.s32.totalorder %s43, 1
      %p167 = por %p165, %p166
      %p169 = scmp.ne.s32.totalorder %s154, %s168
      %p170 = scmp.eq.s32.totalorder %s43, 0
      %p171 = por %p169, %p170
      %s173 = sadd.s32 %s172, 1
      %p176 = scmp.eq.s32.totalorder %s37, 1
      %p177 = scmp.ne.s32.totalorder %s172, %s174
      %p178 = scmp.eq.s32.totalorder %s37, 0
      %p179 = por %p177, %p178
      %p180 = scmp.ne.s32.totalorder %s172, %s174
      %p181 = scmp.eq.s32.totalorder %s42, 1
      %p182 = por %p180, %p181
      %p183 = scmp.ne.s32.totalorder %s174, %s175
      %p184 = scmp.eq.s32.totalorder %s42, 0
      %p185 = por %p183, %p184
      %p186 = scmp.ne.s32.totalorder %s174, %s175
      %p187 = scmp.eq.s32.totalorder %s43, 1
      %p188 = por %p186, %p187
      %p190 = scmp.ne.s32.totalorder %s175, %s189
      %p191 = scmp.eq.s32.totalorder %s43, 0
      %p192 = por %p190, %p191
      %s194 = sadd.s32 %s193, 1
      %p197 = scmp.eq.s32.totalorder %s37, 1
      %p198 = scmp.ne.s32.totalorder %s193, %s195
      %p199 = scmp.eq.s32.totalorder %s37, 0
      %p200 = por %p198, %p199
      %p201 = scmp.ne.s32.totalorder %s193, %s195
      %p202 = scmp.eq.s32.totalorder %s42, 1
      %p203 = por %p201, %p202
      %p204 = scmp.ne.s32.totalorder %s195, %s196
      %p205 = scmp.eq.s32.totalorder %s42, 0
      %p206 = por %p204, %p205
      %p207 = scmp.ne.s32.totalorder %s195, %s196
      %p208 = scmp.eq.s32.totalorder %s43, 1
      %p209 = por %p207, %p208
      %p211 = scmp.ne.s32.totalorder %s196, %s210
      %p212 = scmp.eq.s32.totalorder %s43, 0
      %p213 = por %p211, %p212
      %s215 = sadd.s32 %s214, 1
      %p218 = scmp.eq.s32.totalorder %s37, 1
      %p219 = scmp.ne.s32.totalorder %s214, %s216
      %p220 = scmp.eq.s32.totalorder %s37, 0
      %p221 = por %p219, %p220
      %p222 = scmp.ne.s32.totalorder %s214, %s216
      %p223 = scmp.eq.s32.totalorder %s42, 1
      %p224 = por %p222, %p223
      %p225 = scmp.ne.s32.totalorder %s216, %s217
      %p226 = scmp.eq.s32.totalorder %s42, 0
      %p227 = por %p225, %p226
      %p228 = scmp.ne.s32.totalorder %s216, %s217
      %p229 = scmp.eq.s32.totalorder %s43, 1
      %p230 = por %p228, %p229
      %p232 = scmp.ne.s32.totalorder %s217, %s231
      %p233 = scmp.eq.s32.totalorder %s43, 0
      %p234 = por %p232, %p233
      %s236 = sadd.s32 %s235, 1
      %p239 = scmp.eq.s32.totalorder %s37, 1
      %p240 = scmp.ne.s32.totalorder %s235, %s237
      %p241 = scmp.eq.s32.totalorder %s37, 0
      %p242 = por %p240, %p241
      %p243 = scmp.ne.s32.totalorder %s235, %s237
      %p244 = scmp.eq.s32.totalorder %s42, 1
      %p245 = por %p243, %p244
      %p246 = scmp.ne.s32.totalorder %s237, %s238
      %p247 = scmp.eq.s32.totalorder %s42, 0
      %p248 = por %p246, %p247
      %p249 = scmp.ne.s32.totalorder %s237, %s238
      %p250 = scmp.eq.s32.totalorder %s43, 1
      %p251 = por %p249, %p250
      %p253 = scmp.ne.s32.totalorder %s238, %s252
      %p254 = scmp.eq.s32.totalorder %s43, 0
      %p255 = por %p253, %p254
      %s257 = sadd.s32 %s256, 1
      %p260 = scmp.eq.s32.totalorder %s37, 1
      %p261 = scmp.ne.s32.totalorder %s256, %s258
      %p262 = scmp.eq.s32.totalorder %s37, 0
      %p263 = por %p261, %p262
      %p264 = scmp.ne.s32.totalorder %s256, %s258
      %p265 = scmp.eq.s32.totalorder %s42, 1
      %p266 = por %p264, %p265
      %p267 = scmp.ne.s32.totalorder %s258, %s259
      %p268 = scmp.eq.s32.totalorder %s42, 0
      %p269 = por %p267, %p268
      %p270 = scmp.ne.s32.totalorder %s258, %s259
      %p271 = scmp.eq.s32.totalorder %s43, 1
      %p272 = por %p270, %p271
      %p274 = scmp.ne.s32.totalorder %s259, %s273
      %p275 = scmp.eq.s32.totalorder %s43, 0
      %p276 = por %p274, %p275
      %s278 = sadd.s32 %s277, 1
      %p281 = scmp.eq.s32.totalorder %s37, 1
      %p282 = scmp.ne.s32.totalorder %s277, %s279
      %p283 = scmp.eq.s32.totalorder %s37, 0
      %p284 = por %p282, %p283
      %p285 = scmp.ne.s32.totalorder %s277, %s279
      %p286 = scmp.eq.s32.totalorder %s42, 1
      %p287 = por %p285, %p286
      %p288 = scmp.ne.s32.totalorder %s279, %s280
      %p289 = scmp.eq.s32.totalorder %s42, 0
      %p290 = por %p288, %p289
      %p291 = scmp.ne.s32.totalorder %s279, %s280
      %p292 = scmp.eq.s32.totalorder %s43, 1
      %p293 = por %p291, %p292
      %p295 = scmp.ne.s32.totalorder %s280, %s294
      %p296 = scmp.eq.s32.totalorder %s43, 0
      %p297 = por %p295, %p296
      %s299 = sadd.s32 %s298, 1
      %p302 = scmp.eq.s32.totalorder %s37, 1
      %p303 = scmp.ne.s32.totalorder %s298, %s300
      %p304 = scmp.eq.s32.totalorder %s37, 0
      %p305 = por %p303, %p304
      %p306 = scmp.ne.s32.totalorder %s298, %s300
      %p307 = scmp.eq.s32.totalorder %s42, 1
      %p308 = por %p306, %p307
      %p309 = scmp.ne.s32.totalorder %s300, %s301
      %p310 = scmp.eq.s32.totalorder %s42, 0
      %p311 = por %p309, %p310
      %p312 = scmp.ne.s32.totalorder %s300, %s301
      %p313 = scmp.eq.s32.totalorder %s43, 1
      %p314 = por %p312, %p313
      %p316 = scmp.ne.s32.totalorder %s301, %s315
      %p317 = scmp.eq.s32.totalorder %s43, 0
      %p318 = por %p316, %p317
      %s320 = sadd.s32 %s319, 1
      %p323 = scmp.eq.s32.totalorder %s37, 1
      %p324 = scmp.ne.s32.totalorder %s319, %s321
      %p325 = scmp.eq.s32.totalorder %s37, 0
      %p326 = por %p324, %p325
      %p327 = scmp.ne.s32.totalorder %s319, %s321
      %p328 = scmp.eq.s32.totalorder %s42, 1
      %p329 = por %p327, %p328
      %p330 = scmp.ne.s32.totalorder %s321, %s322
      %p331 = scmp.eq.s32.totalorder %s42, 0
      %p332 = por %p330, %p331
      %p333 = scmp.ne.s32.totalorder %s321, %s322
      %p334 = scmp.eq.s32.totalorder %s43, 1
      %p335 = por %p333, %p334
      %p337 = scmp.ne.s32.totalorder %s322, %s336
      %p338 = scmp.eq.s32.totalorder %s43, 0
      %p339 = por %p337, %p338
      %s341 = sadd.s32 %s340, 1
      %p344 = scmp.eq.s32.totalorder %s37, 1
      %p345 = scmp.ne.s32.totalorder %s340, %s342
      %p346 = scmp.eq.s32.totalorder %s37, 0
      %p347 = por %p345, %p346
      %p348 = scmp.ne.s32.totalorder %s340, %s342
      %p349 = scmp.eq.s32.totalorder %s42, 1
      %p350 = por %p348, %p349
      %p351 = scmp.ne.s32.totalorder %s342, %s343
      %p352 = scmp.eq.s32.totalorder %s42, 0
      %p353 = por %p351, %p352
      %p354 = scmp.ne.s32.totalorder %s342, %s343
      %p355 = scmp.eq.s32.totalorder %s43, 1
      %p356 = por %p354, %p355
      %p358 = scmp.ne.s32.totalorder %s343, %s357
      %p359 = scmp.eq.s32.totalorder %s43, 0
      %p360 = por %p358, %p359
      %s362 = sadd.s32 %s361, 1
      %p365 = scmp.eq.s32.totalorder %s37, 1
      %p366 = scmp.ne.s32.totalorder %s361, %s363
      %p367 = scmp.eq.s32.totalorder %s37, 0
      %p368 = por %p366, %p367
      %p369 = scmp.ne.s32.totalorder %s361, %s363
      %p370 = scmp.eq.s32.totalorder %s42, 1
      %p371 = por %p369, %p370
      %p372 = scmp.ne.s32.totalorder %s363, %s364
      %p373 = scmp.eq.s32.totalorder %s42, 0
      %p374 = por %p372, %p373
      %p375 = scmp.ne.s32.totalorder %s363, %s364
      %p376 = scmp.eq.s32.totalorder %s43, 1
      %p377 = por %p375, %p376
      %p379 = scmp.ne.s32.totalorder %s364, %s378
      %p380 = scmp.eq.s32.totalorder %s43, 0
      %p381 = por %p379, %p380
      %s383 = sadd.s32 %s382, 1
      %p386 = scmp.eq.s32.totalorder %s37, 1
      %p387 = scmp.ne.s32.totalorder %s382, %s384
      %p388 = scmp.eq.s32.totalorder %s37, 0
      %p389 = por %p387, %p388
      %p390 = scmp.ne.s32.totalorder %s382, %s384
      %p391 = scmp.eq.s32.totalorder %s42, 1
      %p392 = por %p390, %p391
      %p393 = scmp.ne.s32.totalorder %s384, %s385
      %p394 = scmp.eq.s32.totalorder %s42, 0
      %p395 = por %p393, %p394
      %p396 = scmp.ne.s32.totalorder %s384, %s385
      %p397 = scmp.eq.s32.totalorder %s43, 1
      %p398 = por %p396, %p397
      %p400 = scmp.ne.s32.totalorder %s385, %s399
      %p401 = scmp.eq.s32.totalorder %s43, 0
      %p402 = por %p400, %p401
      %s404 = sadd.s32 %s403, 1
      %p407 = scmp.eq.s32.totalorder %s37, 1
      %p408 = scmp.ne.s32.totalorder %s403, %s405
      %p409 = scmp.eq.s32.totalorder %s37, 0
      %p410 = por %p408, %p409
      %p411 = scmp.ne.s32.totalorder %s403, %s405
      %p412 = scmp.eq.s32.totalorder %s42, 1
      %p413 = por %p411, %p412
      %p414 = scmp.ne.s32.totalorder %s405, %s406
      %p415 = scmp.eq.s32.totalorder %s42, 0
      %p416 = por %p414, %p415
      %p417 = scmp.ne.s32.totalorder %s405, %s406
      %p418 = scmp.eq.s32.totalorder %s43, 1
      %p419 = por %p417, %p418
      %p421 = scmp.ne.s32.totalorder %s406, %s420
      %p422 = scmp.eq.s32.totalorder %s43, 0
      %p423 = por %p421, %p422
      %s425 = sadd.s32 %s424, 1
      %p428 = scmp.eq.s32.totalorder %s37, 1
      %p429 = scmp.ne.s32.totalorder %s424, %s426
      %p430 = scmp.eq.s32.totalorder %s37, 0
      %p431 = por %p429, %p430
      %p432 = scmp.ne.s32.totalorder %s424, %s426
      %p433 = scmp.eq.s32.totalorder %s42, 1
      %p434 = por %p432, %p433
      %p435 = scmp.ne.s32.totalorder %s426, %s427
      %p436 = scmp.eq.s32.totalorder %s42, 0
      %p437 = por %p435, %p436
      %p438 = scmp.ne.s32.totalorder %s426, %s427
      %p439 = scmp.eq.s32.totalorder %s43, 1
      %p440 = por %p438, %p439
      %p442 = scmp.ne.s32.totalorder %s427, %s441
      %p443 = scmp.eq.s32.totalorder %s43, 0
      %p444 = por %p442, %p443
      %s445 = ssub.s32 %s44, %s56
      %s446 = ssub.s32 %s45, %s52
      %s447 = sor.u32 %s445, %s446
      %p448 = scmp.eq.s32.totalorder %s447, 0
      %s450 = sadd.s32 %s449, 1
      %s451 = scalar_select %p448, %s449, %s450
      %p454 = pneg %p448
      %p455 = scmp.eq.s32.totalorder %s37, 1
      %p456 = por %p454, %p455
      %p457 = scmp.ne.s32.totalorder %s449, %s452
      %p458 = scmp.eq.s32.totalorder %s37, 0
      %p459 = por %p457, %p458
      %p460 = scmp.ne.s32.totalorder %s449, %s452
      %p461 = scmp.eq.s32.totalorder %s42, 1
      %p462 = por %p460, %p461
      %p463 = scmp.ne.s32.totalorder %s452, %s453
      %p464 = scmp.eq.s32.totalorder %s42, 0
      %p465 = por %p463, %p464
      %p466 = scmp.ne.s32.totalorder %s452, %s453
      %p467 = scmp.eq.s32.totalorder %s43, 1
      %p468 = por %p466, %p467
      %p470 = scmp.ne.s32.totalorder %s453, %s469
      %p471 = scmp.eq.s32.totalorder %s43, 0
      %p472 = por %p470, %p471
      %s473 = ssub.s32 %s44, %s56
      %s474 = ssub.s32 %s45, %s52
      %s475 = sor.u32 %s473, %s474
      %p476 = scmp.eq.s32.totalorder %s475, 0
      %s478 = sadd.s32 %s477, 1
      %s479 = scalar_select %p476, %s477, %s478
      %p482 = pneg %p476
      %p483 = scmp.eq.s32.totalorder %s37, 1
      %p484 = por %p482, %p483
      %p485 = scmp.ne.s32.totalorder %s477, %s480
      %p486 = scmp.eq.s32.totalorder %s37, 0
      %p487 = por %p485, %p486
      %p488 = scmp.ne.s32.totalorder %s477, %s480
      %p489 = scmp.eq.s32.totalorder %s42, 1
      %p490 = por %p488, %p489
      %p491 = scmp.ne.s32.totalorder %s480, %s481
      %p492 = scmp.eq.s32.totalorder %s42, 0
      %p493 = por %p491, %p492
      %p494 = scmp.ne.s32.totalorder %s480, %s481
      %p495 = scmp.eq.s32.totalorder %s43, 1
      %p496 = por %p494, %p495
      %p498 = scmp.ne.s32.totalorder %s481, %s497
      %p499 = scmp.eq.s32.totalorder %s43, 0
      %p500 = por %p498, %p499
      %p501 = scmp.le.s32.totalorder 1, %s37
      %p502 = scmp.lt.s32.totalorder %s37, 3
      %p503 = pnand %p501, %p502
      %p504 = pneg %p503
      // Predicated region
      $region9: #{tpu_custom_call.1} parent=5 // pred_check
        _
      $region10: #{tpu_custom_call.1} parent=5 // pred_check_branch
        %506 = sbr.rel (%p503) target = $region12
      $region11: #{tpu_custom_call.1} parent=5 // pred_region
        %s507 = ssub.s32 %s37, 1
        // Predicated region
        $region13: #{tpu_custom_call.1} parent=11 // pred_check
          %p508 = pneg %p122
        $region14: #{tpu_custom_call.1} parent=11 // pred_check_branch
          %510 = sbr.rel (%p508) target = $region16
        $region15: #{tpu_custom_call.1} parent=11 // pred_region
          _
        $region16: #{tpu_custom_call.1} parent=11 // pred_fallthru
          _
        // Predicated region
        $region17: #{tpu_custom_call.1} parent=11 // pred_check
          %p511 = pneg %p143
        $region18: #{tpu_custom_call.1} parent=11 // pred_check_branch
          %513 = sbr.rel (%p511) target = $region20
        $region19: #{tpu_custom_call.1} parent=11 // pred_region
          _
        $region20: #{tpu_custom_call.1} parent=11 // pred_fallthru
          _
        // Predicated region
        $region21: #{tpu_custom_call.1} parent=11 // pred_check
          %p514 = pneg %p164
        $region22: #{tpu_custom_call.1} parent=11 // pred_check_branch
          %516 = sbr.rel (%p514) target = $region24
        $region23: #{tpu_custom_call.1} parent=11 // pred_region
          _
        $region24: #{tpu_custom_call.1} parent=11 // pred_fallthru
          _
        // Predicated region
        $region25: #{tpu_custom_call.1} parent=11 // pred_check
          %p517 = pneg %p185
        $region26: #{tpu_custom_call.1} parent=11 // pred_check_branch
          %519 = sbr.rel (%p517) target = $region28
        $region27: #{tpu_custom_call.1} parent=11 // pred_region
          _
        $region28: #{tpu_custom_call.1} parent=11 // pred_fallthru
          _
        // Predicated region
        $region29: #{tpu_custom_call.1} parent=11 // pred_check
          %p520 = pneg %p206
        $region30: #{tpu_custom_call.1} parent=11 // pred_check_branch
          %522 = sbr.rel (%p520) target = $region32
        $region31: #{tpu_custom_call.1} parent=11 // pred_region
          %s524 = ssub.s32 256, 256
          %525 = vsyncadd [#allocation8], %s524
          %s526 = sshll.u32 [#allocation7], 4
          %s527 = int_to_ptr.vmem [resolvable:$true] %s526
          %532 = dma.hbm_to_vmem [thread:$0]  %s6, 256, %s527, [#allocation8], 64, 64, 4
        $region32: #{tpu_custom_call.1} parent=11 // pred_fallthru
          _
        // Predicated region
        $region33: #{tpu_custom_call.1} parent=11 // pred_check
          %p533 = pneg %p227
        $region34: #{tpu_custom_call.1} parent=11 // pred_check_branch
          %535 = sbr.rel (%p533) target = $region36
        $region35: #{tpu_custom_call.1} parent=11 // pred_region
          _
        $region36: #{tpu_custom_call.1} parent=11 // pred_fallthru
          _
        // Predicated region
        $region37: #{tpu_custom_call.1} parent=11 // pred_check
          %p536 = pneg %p248
        $region38: #{tpu_custom_call.1} parent=11 // pred_check_branch
          %538 = sbr.rel (%p536) target = $region40
        $region39: #{tpu_custom_call.1} parent=11 // pred_region
          %s540 = ssub.s32 256, 256
          %541 = vsyncadd [#allocation8], %s540
          %s542 = sshll.u32 [#allocation9], 4
          %s543 = int_to_ptr.vmem [resolvable:$true] %s542
          %548 = dma.hbm_to_vmem [thread:$0]  %s8, 256, %s543, [#allocation8], 64, 64, 4
        $region40: #{tpu_custom_call.1} parent=11 // pred_fallthru
          _
        // Predicated region
        $region41: #{tpu_custom_call.1} parent=11 // pred_check
          %p549 = pneg %p269
        $region42: #{tpu_custom_call.1} parent=11 // pred_check_branch
          %551 = sbr.rel (%p549) target = $region44
        $region43: #{tpu_custom_call.1} parent=11 // pred_region
          _
        $region44: #{tpu_custom_call.1} parent=11 // pred_fallthru
          _
        // Predicated region
        $region45: #{tpu_custom_call.1} parent=11 // pred_check
          %p552 = pneg %p290
        $region46: #{tpu_custom_call.1} parent=11 // pred_check_branch
          %554 = sbr.rel (%p552) target = $region48
        $region47: #{tpu_custom_call.1} parent=11 // pred_region
          _
        $region48: #{tpu_custom_call.1} parent=11 // pred_fallthru
          _
        // Predicated region
        $region49: #{tpu_custom_call.1} parent=11 // pred_check
          %p555 = pneg %p311
        $region50: #{tpu_custom_call.1} parent=11 // pred_check_branch
          %557 = sbr.rel (%p555) target = $region52
        $region51: #{tpu_custom_call.1} parent=11 // pred_region
          _
        $region52: #{tpu_custom_call.1} parent=11 // pred_fallthru
          _
        // Predicated region
        $region53: #{tpu_custom_call.1} parent=11 // pred_check
          %p558 = pneg %p332
        $region54: #{tpu_custom_call.1} parent=11 // pred_check_branch
          %560 = sbr.rel (%p558) target = $region56
        $region55: #{tpu_custom_call.1} parent=11 // pred_region
          %s562 = ssub.s32 256, 256
          %563 = vsyncadd [#allocation11], %s562
          %s564 = sshll.u32 [#allocation10], 4
          %s565 = int_to_ptr.vmem [resolvable:$true] %s564
          %570 = dma.hbm_to_vmem [thread:$0]  %s12, 256, %s565, [#allocation11], 64, 64, 4
        $region56: #{tpu_custom_call.1} parent=11 // pred_fallthru
          _
        // Predicated region
        $region57: #{tpu_custom_call.1} parent=11 // pred_check
          %p571 = pneg %p353
        $region58: #{tpu_custom_call.1} parent=11 // pred_check_branch
          %573 = sbr.rel (%p571) target = $region60
        $region59: #{tpu_custom_call.1} parent=11 // pred_region
          _
        $region60: #{tpu_custom_call.1} parent=11 // pred_fallthru
          _
        // Predicated region
        $region61: #{tpu_custom_call.1} parent=11 // pred_check
          %p574 = pneg %p374
        $region62: #{tpu_custom_call.1} parent=11 // pred_check_branch
          %576 = sbr.rel (%p574) target = $region64
        $region63: #{tpu_custom_call.1} parent=11 // pred_region
          _
        $region64: #{tpu_custom_call.1} parent=11 // pred_fallthru
          _
        // Predicated region
        $region65: #{tpu_custom_call.1} parent=11 // pred_check
          %p577 = pneg %p395
        $region66: #{tpu_custom_call.1} parent=11 // pred_check_branch
          %579 = sbr.rel (%p577) target = $region68
        $region67: #{tpu_custom_call.1} parent=11 // pred_region
          _
        $region68: #{tpu_custom_call.1} parent=11 // pred_fallthru
          _
        // Predicated region
        $region69: #{tpu_custom_call.1} parent=11 // pred_check
          %p580 = pneg %p416
        $region70: #{tpu_custom_call.1} parent=11 // pred_check_branch
          %582 = sbr.rel (%p580) target = $region72
        $region71: #{tpu_custom_call.1} parent=11 // pred_region
          _
        $region72: #{tpu_custom_call.1} parent=11 // pred_fallthru
          _
        // Predicated region
        $region73: #{tpu_custom_call.1} parent=11 // pred_check
          %p583 = pneg %p437
        $region74: #{tpu_custom_call.1} parent=11 // pred_check_branch
          %585 = sbr.rel (%p583) target = $region76
        $region75: #{tpu_custom_call.1} parent=11 // pred_region
          _
        $region76: #{tpu_custom_call.1} parent=11 // pred_fallthru
          _
      $region12: #{tpu_custom_call.1} parent=5 // pred_fallthru
        _
      %p586 = scmp.lt.s32.totalorder %s37, 2
      // Predicated region
      $region77: #{tpu_custom_call.1} parent=5 // pred_check
        %p587 = pneg %p586
      $region78: #{tpu_custom_call.1} parent=5 // pred_check_branch
        %589 = sbr.rel (%p587) target = $region80
      $region79: #{tpu_custom_call.1} parent=5 // pred_region
        // Predicated region
        $region81: #{tpu_custom_call.1} parent=79 // pred_check
          %p590 = pneg %p69
        $region82: #{tpu_custom_call.1} parent=79 // pred_check_branch
          %592 = sbr.rel (%p590) target = $region84
        $region83: #{tpu_custom_call.1} parent=79 // pred_region
          %p593 = scmp.lt.s32.totalorder %s44, 1
          %s594 = scalar_select %p593, %s44, 1
          %s595 = smul.addr %s594, 8
          %s596 = scalar_lea.vmem %s0, %s595
        $region84: #{tpu_custom_call.1} parent=79 // pred_fallthru
          _
        // Predicated region
        $region85: #{tpu_custom_call.1} parent=79 // pred_check
          %p597 = pneg %p95
        $region86: #{tpu_custom_call.1} parent=79 // pred_check_branch
          %599 = sbr.rel (%p597) target = $region88
        $region87: #{tpu_custom_call.1} parent=79 // pred_region
          %s600 = sand.u32 %s85, 1
          %s601 = scalar_lea.sflag [#allocation5], %s600
          %s602 = sand.u32 %s85, 1
          %s603 = scalar_lea.vmem [#allocation4], %s602
          %s605 = ssub.s32 16, 16
          %606 = vsyncadd %s601, %s605
          %s607 = smul.addr %s44, 16
          %s608 = scalar_lea.hbm %s1, %s607
          %s610 = sshll.u32 %s603, 4
          %s611 = int_to_ptr.vmem [resolvable:$true] %s610
          %613 = dma.hbm_to_vmem [thread:$0]  %s608, 16, %s611, %s601
        $region88: #{tpu_custom_call.1} parent=79 // pred_fallthru
          _
      $region80: #{tpu_custom_call.1} parent=5 // pred_fallthru
        _
      %p614 = scmp.le.s32.totalorder 1, %s37
      %p615 = scmp.lt.s32.totalorder %s37, 3
      %p616 = pnand %p614, %p615
      %p617 = pneg %p616
      // Predicated region
      $region89: #{tpu_custom_call.1} parent=5 // pred_check
        _
      $region90: #{tpu_custom_call.1} parent=5 // pred_check_branch
        %619 = sbr.rel (%p616) target = $region92
      $region91: #{tpu_custom_call.1} parent=5 // pred_region
        %s620 = ssub.s32 %s37, 1
        %s621 = sand.u32 %s88, 1
        %s622 = scalar_lea.sflag [#allocation5], %s621
        %s623 = sand.u32 %s88, 1
        %s624 = scalar_lea.vmem [#allocation4], %s623
        // Predicated region
        $region93: #{tpu_custom_call.1} parent=91 // pred_check
          %p625 = pneg %p101
        $region94: #{tpu_custom_call.1} parent=91 // pred_check_branch
          %627 = sbr.rel (%p625) target = $region96
        $region95: #{tpu_custom_call.1} parent=91 // pred_region
          %628 = dma.done %s622, 16
        $region96: #{tpu_custom_call.1} parent=91 // pred_fallthru
          _
        // Predicated region
        $region97: #{tpu_custom_call.1} parent=91 // pred_check
          %p629 = pneg %p206
        $region98: #{tpu_custom_call.1} parent=91 // pred_check_branch
          %631 = sbr.rel (%p629) target = $region100
        $region99: #{tpu_custom_call.1} parent=91 // pred_region
          %632 = dma.done [#allocation8], 256
        $region100: #{tpu_custom_call.1} parent=91 // pred_fallthru
          _
        // Predicated region
        $region101: #{tpu_custom_call.1} parent=91 // pred_check
          %p633 = pneg %p248
        $region102: #{tpu_custom_call.1} parent=91 // pred_check_branch
          %635 = sbr.rel (%p633) target = $region104
        $region103: #{tpu_custom_call.1} parent=91 // pred_region
          %636 = dma.done [#allocation8], 256
        $region104: #{tpu_custom_call.1} parent=91 // pred_fallthru
          _
        // Predicated region
        $region105: #{tpu_custom_call.1} parent=91 // pred_check
          %p637 = pneg %p332
        $region106: #{tpu_custom_call.1} parent=91 // pred_check_branch
          %639 = sbr.rel (%p637) target = $region108
        $region107: #{tpu_custom_call.1} parent=91 // pred_region
          %640 = dma.done [#allocation11], 256
        $region108: #{tpu_custom_call.1} parent=91 // pred_fallthru
          _
        %p641 = scmp.lt.s32.totalorder %s46, 1
        %s642 = scalar_select %p641, %s46, 1
        %s643 = smul.addr %s642, 8
        %s644 = scalar_lea.vmem %s0, %s643
        %p645 = pneg %p75
        %p646 = pneg %p72
        %s647 = sand.u32 %s88, 1
        %s648 = scalar_lea.sflag [#allocation5], %s647
        %s649 = sand.u32 %s88, 1
        %s650 = scalar_lea.vmem [#allocation4], %s649
        %p651 = pneg %p101
        %p652 = pneg %p98
        %p653 = pneg %p122
        %p654 = pneg %p119
        %p655 = pneg %p143
        %p656 = pneg %p140
        %p657 = pneg %p164
        %p658 = pneg %p161
        %p659 = pneg %p185
        %p660 = pneg %p182
        %p661 = pneg %p206
        %p662 = pneg %p203
        %p663 = pneg %p227
        %p664 = pneg %p224
        %p665 = pneg %p248
        %p666 = pneg %p245
        %p667 = pneg %p269
        %p668 = pneg %p266
        %p669 = pneg %p290
        %p670 = pneg %p287
        %p671 = pneg %p311
        %p672 = pneg %p308
        %p673 = pneg %p332
        %p674 = pneg %p329
        %p675 = pneg %p353
        %p676 = pneg %p350
        %p677 = pneg %p374
        %p678 = pneg %p371
        %p679 = pneg %p395
        %p680 = pneg %p392
        %p681 = pneg %p416
        %p682 = pneg %p413
        %p683 = pneg %p437
        %p684 = pneg %p434
        %p685 = pneg %p465
        %p686 = pneg %p462
        %s687 = sand.u32 %s452, 1
        %s688 = scalar_lea.sflag [#allocation6], %s687
        %s689 = sand.u32 %s452, 1
        %s690 = smul.addr %s689, 8
        %s691 = scalar_lea.vmem [#allocation12], %s690
        %p692 = pneg %p493
        %p693 = pneg %p490
        %s694 = sand.u32 %s480, 1
        %s695 = scalar_lea.sflag [#allocation14], %s694
        %s696 = sand.u32 %s480, 1
        %s697 = smul.addr %s696, 16
        %s698 = scalar_lea.vmem [#allocation13], %s697
        %p699 = scmp.lt.s32.totalorder %s46, 1
        %s700 = scalar_select %p699, %s46, 1
        %s701 = smul.addr %s700, 8
        %s702 = scalar_lea.vmem %s0, %s701
        %s704 = smul.u32 %s47, 8
        %p705 = scmp.eq.s32.totalorder %s47, 0
        // Predicated region
        $region109: #{tpu_custom_call.1} parent=91 // pred_check
          %p706 = pneg %p705
        $region110: #{tpu_custom_call.1} parent=91 // pred_check_branch
          %708 = sbr.rel (%p706) target = $region112
        $region111: #{tpu_custom_call.1} parent=91 // pred_region
          %v709 = vld [vmem:[%s702] sm:$0xff]
          %v710 = vpack.c.bf16 %v709, %v709
          %v711 = vld [vmem:[%s4] sm:$0xf]
          %v712 = vld [vmem:[%s4 + $0x4] sm:$0xf]
          %v713 = vld [vmem:[%s4 + $0x8] sm:$0xf]
          %v714 = vld [vmem:[%s4 + $0xc] sm:$0xf]
          %v715 = vld [vmem:[%s5] sm:$0x1]
          %v717 = vlaneseq
          %v718 = vshrl.u32 %v717, 7
          %v719 = vsub.s32 0, %v718
          %v720 = vrot.slane %v715, %v719
          %v726 = vunpack.c.l.b16 %v711
          %v727 = vunpack.c.l.b16 %v712
          %v728 = vunpack.c.l.b16 %v713
          %v729 = vunpack.c.l.b16 %v714
          %v730 = vpack.c.b16 %v727, %v726
          %v731 = vpack.c.b16 %v729, %v728
          %vm734 = vcmask 261120
          %v736 = vsel %vm734, %v710, 0
          %738 = vmatprep.subr.bf16.mxu0 0
          %739 = vmatpush1.bf16.msra.mxu0 0
          %740 = vmatprep.subr.bf16.mxu0 0
          %741 = vmatpush1.bf16.msra.mxu0 0
          %742 = vmatprep.subr.bf16.mxu0 0
          %743 = vmatpush1.bf16.msra.mxu0 0
          %744 = vmatprep.subr.bf16.mxu0 0
          %745 = vmatpush1.bf16.msra.mxu0 0
          %746 = vmatprep.subr.bf16.mxu0 0
          %747 = vmatpush1.bf16.msra.mxu0 0
          %748 = vmatprep.subr.bf16.mxu0 0
          %749 = vmatpush1.bf16.msra.mxu0 0
          %750 = vmatprep.subr.bf16.mxu0 0
          %751 = vmatpush1.bf16.msra.mxu0 %v731
          %752 = vmatprep.subr.bf16.mxu0 0
          %753 = vmatpush1.bf16.msra.mxu0 %v730
          %754 = vmatprep.subr.bf16.mxu0 0
          %755 = vmatpush2.bf16.msra.mxu0 0
          %756 = vmatprep.subr.bf16.mxu0 0
          %757 = vmatpush2.bf16.msra.mxu0 0
          %758 = vmatprep.subr.bf16.mxu0 0
          %759 = vmatpush2.bf16.msra.mxu0 0
          %760 = vmatprep.subr.bf16.mxu0 0
          %761 = vmatpush2.bf16.msra.mxu0 0
          %762 = vmatprep.subr.bf16.mxu0 0
          %763 = vmatpush2.bf16.msra.mxu0 0
          %764 = vmatprep.subr.bf16.mxu0 0
          %765 = vmatpush2.bf16.msra.mxu0 0
          %766 = vmatprep.subr.bf16.mxu0 0
          %767 = vmatpush2.bf16.msra.mxu0 0
          %768 = vmatprep.subr.bf16.mxu0 0
          %769 = vmatpush2.bf16.msra.mxu0 0
          %770 = vmatprep.mubr.bf16.mxu0 0
          %771 = vmatmul.mubr.bf16.gmra.mxu0 %v736
          %v772 = vpop.f32.mrf.mxu0
          %v773 = vadd.f32 %v720, %v772
          %v774 = vpop.f32.mrf.mxu0
          %v775 = vpop.f32.mrf.mxu0
          %v776 = vpop.f32.mrf.mxu0
          %777 = vdwg.mxu0
          %v778 = vld [vmem:[#allocation7] sm:$0xf]
          %v779 = vld [vmem:[#allocation7 + $0x4] sm:$0xf]
          %v780 = vld [vmem:[#allocation7 + $0x8] sm:$0xf]
          %v781 = vld [vmem:[#allocation7 + $0xc] sm:$0xf]
          %v782 = vld [vmem:[%s7] sm:$0x1]
          %v784 = vlaneseq
          %v785 = vshrl.u32 %v784, 7
          %v786 = vsub.s32 0, %v785
          %v787 = vrot.slane %v782, %v786
          %v793 = vunpack.c.l.b16 %v778
          %v794 = vunpack.c.l.b16 %v779
          %v795 = vunpack.c.l.b16 %v780
          %v796 = vunpack.c.l.b16 %v781
          %v797 = vpack.c.b16 %v794, %v793
          %v798 = vpack.c.b16 %v796, %v795
          %801 = vmatprep.subr.bf16.mxu0 0
          %802 = vmatpush1.bf16.msra.mxu0 0
          %803 = vmatprep.subr.bf16.mxu0 0
          %804 = vmatpush1.bf16.msra.mxu0 0
          %805 = vmatprep.subr.bf16.mxu0 0
          %806 = vmatpush1.bf16.msra.mxu0 0
          %807 = vmatprep.subr.bf16.mxu0 0
          %808 = vmatpush1.bf16.msra.mxu0 0
          %809 = vmatprep.subr.bf16.mxu0 0
          %810 = vmatpush1.bf16.msra.mxu0 0
          %811 = vmatprep.subr.bf16.mxu0 0
          %812 = vmatpush1.bf16.msra.mxu0 0
          %813 = vmatprep.subr.bf16.mxu0 0
          %814 = vmatpush1.bf16.msra.mxu0 %v798
          %815 = vmatprep.subr.bf16.mxu0 0
          %816 = vmatpush1.bf16.msra.mxu0 %v797
          %817 = vmatprep.subr.bf16.mxu0 0
          %818 = vmatpush2.bf16.msra.mxu0 0
          %819 = vmatprep.subr.bf16.mxu0 0
          %820 = vmatpush2.bf16.msra.mxu0 0
          %821 = vmatprep.subr.bf16.mxu0 0
          %822 = vmatpush2.bf16.msra.mxu0 0
          %823 = vmatprep.subr.bf16.mxu0 0
          %824 = vmatpush2.bf16.msra.mxu0 0
          %825 = vmatprep.subr.bf16.mxu0 0
          %826 = vmatpush2.bf16.msra.mxu0 0
          %827 = vmatprep.subr.bf16.mxu0 0
          %828 = vmatpush2.bf16.msra.mxu0 0
          %829 = vmatprep.subr.bf16.mxu0 0
          %830 = vmatpush2.bf16.msra.mxu0 0
          %831 = vmatprep.subr.bf16.mxu0 0
          %832 = vmatpush2.bf16.msra.mxu0 0
          %833 = vmatprep.mubr.bf16.mxu0 0
          %834 = vmatmul.mubr.bf16.gmra.mxu0 %v736
          %v835 = vpop.f32.mrf.mxu0
          %v836 = vadd.f32 %v787, %v835
          %v837 = vpop.f32.mrf.mxu0
          %v838 = vpop.f32.mrf.mxu0
          %v839 = vpop.f32.mrf.mxu0
          %840 = vdwg.mxu0
          %842 = vrot.lane.b32.xlu0 %v773, 120
          %v843 = vpop.permute.xlu0 %842
          %845 = vrot.lane.b32.xlu0 %v773, 112
          %v846 = vpop.permute.xlu0 %845
          %848 = vrot.lane.b32.xlu0 %v773, 104
          %v849 = vpop.permute.xlu0 %848
          %v851 = vcombine.low %v773, %v846
          %v852 = vcombine.high %v773, %v846
          %v854 = vunpack.c.l.s4 1983009808
          %v855 = vunpack.c.0.s8 %v854
          %v856 = vlaneseq
          %v857 = vshrl.u32 %v856, 7
          %v858 = vsub.s32 %v855, %v857
          %v859 = vrot.slane %v851, %v858
          %v861 = vunpack.c.l.s4 1983009808
          %v862 = vunpack.c.0.s8 %v861
          %v863 = vlaneseq
          %v864 = vshrl.u32 %v863, 7
          %v865 = vsub.s32 %v862, %v864
          %v866 = vrot.slane %v852, %v865
          %v867 = vcombine.low %v843, %v849
          %v868 = vcombine.high %v843, %v849
          %v870 = vunpack.c.l.s4 1983009808
          %v871 = vunpack.c.0.s8 %v870
          %v872 = vlaneseq
          %v873 = vshrl.u32 %v872, 7
          %v874 = vsub.s32 %v871, %v873
          %v875 = vrot.slane %v867, %v874
          %v877 = vunpack.c.l.s4 1983009808
          %v878 = vunpack.c.0.s8 %v877
          %v879 = vlaneseq
          %v880 = vshrl.u32 %v879, 7
          %v881 = vsub.s32 %v878, %v880
          %v882 = vrot.slane %v868, %v881
          %v883 = vcombine.low %v859, %v875
          %v884 = vcombine.high %v859, %v875
          %v886 = vunpack.c.l.s4 1934713408
          %v887 = vunpack.c.0.s8 %v886
          %v888 = vlaneseq
          %v889 = vshrl.u32 %v888, 7
          %v890 = vsub.s32 %v887, %v889
          %v891 = vrot.slane %v883, %v890
          %v893 = vunpack.c.l.s4 1934713408
          %v894 = vunpack.c.0.s8 %v893
          %v895 = vlaneseq
          %v896 = vshrl.u32 %v895, 7
          %v897 = vsub.s32 %v894, %v896
          %v898 = vrot.slane %v884, %v897
          %v899 = vcombine.low %v866, %v882
          %v900 = vcombine.high %v866, %v882
          %v902 = vunpack.c.l.s4 1934713408
          %v903 = vunpack.c.0.s8 %v902
          %v904 = vlaneseq
          %v905 = vshrl.u32 %v904, 7
          %v906 = vsub.s32 %v903, %v905
          %v907 = vrot.slane %v899, %v906
          %v909 = vunpack.c.l.s4 1934713408
          %v910 = vunpack.c.0.s8 %v909
          %v911 = vlaneseq
          %v912 = vshrl.u32 %v911, 7
          %v913 = vsub.s32 %v910, %v912
          %v914 = vrot.slane %v900, %v913
          %v915 = vcombine.high %v891, 0.0
          %v916 = vcombine.high %v898, 0.0
          %v917 = vcombine.high %v907, 0.0
          %v918 = vcombine.high %v914, 0.0
          %v919 = vcombine.low %v891, %v898
          %v921 = vunpack.c.l.s4 1983009808
          %v922 = vunpack.c.0.s8 %v921
          %v923 = vlaneseq
          %v924 = vshrl.u32 %v923, 7
          %v925 = vsub.s32 %v922, %v924
          %v926 = vrot.slane %v919, %v925
          %v927 = vcombine.low %v915, %v916
          %v929 = vunpack.c.l.s4 1983009808
          %v930 = vunpack.c.0.s8 %v929
          %v931 = vlaneseq
          %v932 = vshrl.u32 %v931, 7
          %v933 = vsub.s32 %v930, %v932
          %v934 = vrot.slane %v927, %v933
          %v935 = vcombine.low %v907, %v914
          %v937 = vunpack.c.l.s4 1983009808
          %v938 = vunpack.c.0.s8 %v937
          %v939 = vlaneseq
          %v940 = vshrl.u32 %v939, 7
          %v941 = vsub.s32 %v938, %v940
          %v942 = vrot.slane %v935, %v941
          %v943 = vcombine.low %v917, %v918
          %v945 = vunpack.c.l.s4 1983009808
          %v946 = vunpack.c.0.s8 %v945
          %v947 = vlaneseq
          %v948 = vshrl.u32 %v947, 7
          %v949 = vsub.s32 %v946, %v948
          %v950 = vrot.slane %v943, %v949
          %v951 = vcombine.low %v926, %v934
          %v952 = vcombine.high %v926, %v934
          %v954 = vunpack.c.l.s4 1934713408
          %v955 = vunpack.c.0.s8 %v954
          %v956 = vlaneseq
          %v957 = vshrl.u32 %v956, 7
          %v958 = vsub.s32 %v955, %v957
          %v959 = vrot.slane %v951, %v958
          %v961 = vunpack.c.l.s4 1934713408
          %v962 = vunpack.c.0.s8 %v961
          %v963 = vlaneseq
          %v964 = vshrl.u32 %v963, 7
          %v965 = vsub.s32 %v962, %v964
          %v966 = vrot.slane %v952, %v965
          %v967 = vcombine.low %v942, %v950
          %v968 = vcombine.high %v942, %v950
          %v970 = vunpack.c.l.s4 1934713408
          %v971 = vunpack.c.0.s8 %v970
          %v972 = vlaneseq
          %v973 = vshrl.u32 %v972, 7
          %v974 = vsub.s32 %v971, %v973
          %v975 = vrot.slane %v967, %v974
          %v977 = vunpack.c.l.s4 1934713408
          %v978 = vunpack.c.0.s8 %v977
          %v979 = vlaneseq
          %v980 = vshrl.u32 %v979, 7
          %v981 = vsub.s32 %v978, %v980
          %v982 = vrot.slane %v968, %v981
          %v983 = vcombine.low %v959, %v975
          %v984 = vcombine.high %v959, %v975
          %v985 = vcombine.low %v966, %v982
          %v986 = vcombine.high %v966, %v982
          %v987 = vpack.c.bf16 %v983, %v983
          %v988 = vpack.c.bf16 %v984, %v984
          %v989 = vpack.c.bf16 %v985, %v985
          %v990 = vpack.c.bf16 %v986, %v986
          %vm991 = vcmask 60416
          %992 = vst.msk [vmem:[#allocation2] sm:$0xf] %vm991, %v987
          %993 = vst.msk [vmem:[#allocation2 + $0x4] sm:$0xf] %vm991, %v988
          %994 = vst.msk [vmem:[#allocation2 + $0x8] sm:$0xf] %vm991, %v989
          %995 = vst.msk [vmem:[#allocation2 + $0xc] sm:$0xf] %vm991, %v990
          %997 = vrot.lane.b32.xlu0 %v836, 120
          %v998 = vpop.permute.xlu0 %997
          %1000 = vrot.lane.b32.xlu0 %v836, 112
          %v1001 = vpop.permute.xlu0 %1000
          %1003 = vrot.lane.b32.xlu0 %v836, 104
          %v1004 = vpop.permute.xlu0 %1003
          %v1006 = vcombine.low %v836, %v1001
          %v1007 = vcombine.high %v836, %v1001
          %v1009 = vunpack.c.l.s4 1983009808
          %v1010 = vunpack.c.0.s8 %v1009
          %v1011 = vlaneseq
          %v1012 = vshrl.u32 %v1011, 7
          %v1013 = vsub.s32 %v1010, %v1012
          %v1014 = vrot.slane %v1006, %v1013
          %v1016 = vunpack.c.l.s4 1983009808
          %v1017 = vunpack.c.0.s8 %v1016
          %v1018 = vlaneseq
          %v1019 = vshrl.u32 %v1018, 7
          %v1020 = vsub.s32 %v1017, %v1019
          %v1021 = vrot.slane %v1007, %v1020
          %v1022 = vcombine.low %v998, %v1004
          %v1023 = vcombine.high %v998, %v1004
          %v1025 = vunpack.c.l.s4 1983009808
          %v1026 = vunpack.c.0.s8 %v1025
          %v1027 = vlaneseq
          %v1028 = vshrl.u32 %v1027, 7
          %v1029 = vsub.s32 %v1026, %v1028
          %v1030 = vrot.slane %v1022, %v1029
          %v1032 = vunpack.c.l.s4 1983009808
          %v1033 = vunpack.c.0.s8 %v1032
          %v1034 = vlaneseq
          %v1035 = vshrl.u32 %v1034, 7
          %v1036 = vsub.s32 %v1033, %v1035
          %v1037 = vrot.slane %v1023, %v1036
          %v1038 = vcombine.low %v1014, %v1030
          %v1039 = vcombine.high %v1014, %v1030
          %v1041 = vunpack.c.l.s4 1934713408
          %v1042 = vunpack.c.0.s8 %v1041
          %v1043 = vlaneseq
          %v1044 = vshrl.u32 %v1043, 7
          %v1045 = vsub.s32 %v1042, %v1044
          %v1046 = vrot.slane %v1038, %v1045
          %v1048 = vunpack.c.l.s4 1934713408
          %v1049 = vunpack.c.0.s8 %v1048
          %v1050 = vlaneseq
          %v1051 = vshrl.u32 %v1050, 7
          %v1052 = vsub.s32 %v1049, %v1051
          %v1053 = vrot.slane %v1039, %v1052
          %v1054 = vcombine.low %v1021, %v1037
          %v1055 = vcombine.high %v1021, %v1037
          %v1057 = vunpack.c.l.s4 1934713408
          %v1058 = vunpack.c.0.s8 %v1057
          %v1059 = vlaneseq
          %v1060 = vshrl.u32 %v1059, 7
          %v1061 = vsub.s32 %v1058, %v1060
          %v1062 = vrot.slane %v1054, %v1061
          %v1064 = vunpack.c.l.s4 1934713408
          %v1065 = vunpack.c.0.s8 %v1064
          %v1066 = vlaneseq
          %v1067 = vshrl.u32 %v1066, 7
          %v1068 = vsub.s32 %v1065, %v1067
          %v1069 = vrot.slane %v1055, %v1068
          %v1070 = vcombine.high %v1046, 0.0
          %v1071 = vcombine.high %v1053, 0.0
          %v1072 = vcombine.high %v1062, 0.0
          %v1073 = vcombine.high %v1069, 0.0
          %v1074 = vcombine.low %v1046, %v1053
          %v1076 = vunpack.c.l.s4 1983009808
          %v1077 = vunpack.c.0.s8 %v1076
          %v1078 = vlaneseq
          %v1079 = vshrl.u32 %v1078, 7
          %v1080 = vsub.s32 %v1077, %v1079
          %v1081 = vrot.slane %v1074, %v1080
          %v1082 = vcombine.low %v1070, %v1071
          %v1084 = vunpack.c.l.s4 1983009808
          %v1085 = vunpack.c.0.s8 %v1084
          %v1086 = vlaneseq
          %v1087 = vshrl.u32 %v1086, 7
          %v1088 = vsub.s32 %v1085, %v1087
          %v1089 = vrot.slane %v1082, %v1088
          %v1090 = vcombine.low %v1062, %v1069
          %v1092 = vunpack.c.l.s4 1983009808
          %v1093 = vunpack.c.0.s8 %v1092
          %v1094 = vlaneseq
          %v1095 = vshrl.u32 %v1094, 7
          %v1096 = vsub.s32 %v1093, %v1095
          %v1097 = vrot.slane %v1090, %v1096
          %v1098 = vcombine.low %v1072, %v1073
          %v1100 = vunpack.c.l.s4 1983009808
          %v1101 = vunpack.c.0.s8 %v1100
          %v1102 = vlaneseq
          %v1103 = vshrl.u32 %v1102, 7
          %v1104 = vsub.s32 %v1101, %v1103
          %v1105 = vrot.slane %v1098, %v1104
          %v1106 = vcombine.low %v1081, %v1089
          %v1107 = vcombine.high %v1081, %v1089
          %v1109 = vunpack.c.l.s4 1934713408
          %v1110 = vunpack.c.0.s8 %v1109
          %v1111 = vlaneseq
          %v1112 = vshrl.u32 %v1111, 7
          %v1113 = vsub.s32 %v1110, %v1112
          %v1114 = vrot.slane %v1106, %v1113
          %v1116 = vunpack.c.l.s4 1934713408
          %v1117 = vunpack.c.0.s8 %v1116
          %v1118 = vlaneseq
          %v1119 = vshrl.u32 %v1118, 7
          %v1120 = vsub.s32 %v1117, %v1119
          %v1121 = vrot.slane %v1107, %v1120
          %v1122 = vcombine.low %v1097, %v1105
          %v1123 = vcombine.high %v1097, %v1105
          %v1125 = vunpack.c.l.s4 1934713408
          %v1126 = vunpack.c.0.s8 %v1125
          %v1127 = vlaneseq
          %v1128 = vshrl.u32 %v1127, 7
          %v1129 = vsub.s32 %v1126, %v1128
          %v1130 = vrot.slane %v1122, %v1129
          %v1132 = vunpack.c.l.s4 1934713408
          %v1133 = vunpack.c.0.s8 %v1132
          %v1134 = vlaneseq
          %v1135 = vshrl.u32 %v1134, 7
          %v1136 = vsub.s32 %v1133, %v1135
          %v1137 = vrot.slane %v1123, %v1136
          %v1138 = vcombine.low %v1114, %v1130
          %v1139 = vcombine.high %v1114, %v1130
          %v1140 = vcombine.low %v1121, %v1137
          %v1141 = vcombine.high %v1121, %v1137
          %v1142 = vpack.c.bf16 %v1138, %v1138
          %v1143 = vpack.c.bf16 %v1139, %v1139
          %v1144 = vpack.c.bf16 %v1140, %v1140
          %v1145 = vpack.c.bf16 %v1141, %v1141
          %1146 = vst.msk [vmem:[#allocation3] sm:$0xf] %vm991, %v1142
          %1147 = vst.msk [vmem:[#allocation3 + $0x4] sm:$0xf] %vm991, %v1143
          %1148 = vst.msk [vmem:[#allocation3 + $0x8] sm:$0xf] %vm991, %v1144
          %1149 = vst.msk [vmem:[#allocation3 + $0xc] sm:$0xf] %vm991, %v1145
        $region112: #{tpu_custom_call.1} parent=91 // pred_fallthru
          _
        %s1150 = scalar_lea.vmem %s702, %s704
        %v1151 = vld [vmem:[%s1150] sm:$0xff]
        %v1152 = vpack.c.bf16 %v1151, %v1151
        %v1153 = vld [vmem:[%s2] sm:$0xf]
        %v1154 = vld [vmem:[%s2 + $0x4] sm:$0xf]
        %v1155 = vld [vmem:[%s2 + $0x8] sm:$0xf]
        %v1156 = vld [vmem:[%s2 + $0xc] sm:$0xf]
        %v1157 = vld [vmem:[%s3] sm:$0x1]
        %v1159 = vlaneseq
        %v1160 = vshrl.u32 %v1159, 7
        %v1161 = vsub.s32 0, %v1160
        %v1162 = vrot.slane %v1157, %v1161
        %v1168 = vunpack.c.l.b16 %v1153
        %v1169 = vunpack.c.l.b16 %v1154
        %v1170 = vunpack.c.l.b16 %v1155
        %v1171 = vunpack.c.l.b16 %v1156
        %v1172 = vpack.c.b16 %v1169, %v1168
        %v1173 = vpack.c.b16 %v1171, %v1170
        %vm1176 = vcmask 261120
        %v1178 = vsel %vm1176, %v1152, 0
        %1180 = vmatprep.subr.bf16.mxu0 0
        %1181 = vmatpush1.bf16.msra.mxu0 0
        %1182 = vmatprep.subr.bf16.mxu0 0
        %1183 = vmatpush1.bf16.msra.mxu0 0
        %1184 = vmatprep.subr.bf16.mxu0 0
        %1185 = vmatpush1.bf16.msra.mxu0 0
        %1186 = vmatprep.subr.bf16.mxu0 0
        %1187 = vmatpush1.bf16.msra.mxu0 0
        %1188 = vmatprep.subr.bf16.mxu0 0
        %1189 = vmatpush1.bf16.msra.mxu0 0
        %1190 = vmatprep.subr.bf16.mxu0 0
        %1191 = vmatpush1.bf16.msra.mxu0 0
        %1192 = vmatprep.subr.bf16.mxu0 0
        %1193 = vmatpush1.bf16.msra.mxu0 %v1173
        %1194 = vmatprep.subr.bf16.mxu0 0
        %1195 = vmatpush1.bf16.msra.mxu0 %v1172
        %1196 = vmatprep.subr.bf16.mxu0 0
        %1197 = vmatpush2.bf16.msra.mxu0 0
        %1198 = vmatprep.subr.bf16.mxu0 0
        %1199 = vmatpush2.bf16.msra.mxu0 0
        %1200 = vmatprep.subr.bf16.mxu0 0
        %1201 = vmatpush2.bf16.msra.mxu0 0
        %1202 = vmatprep.subr.bf16.mxu0 0
        %1203 = vmatpush2.bf16.msra.mxu0 0
        %1204 = vmatprep.subr.bf16.mxu0 0
        %1205 = vmatpush2.bf16.msra.mxu0 0
        %1206 = vmatprep.subr.bf16.mxu0 0
        %1207 = vmatpush2.bf16.msra.mxu0 0
        %1208 = vmatprep.subr.bf16.mxu0 0
        %1209 = vmatpush2.bf16.msra.mxu0 0
        %1210 = vmatprep.subr.bf16.mxu0 0
        %1211 = vmatpush2.bf16.msra.mxu0 0
        %1212 = vmatprep.mubr.bf16.mxu0 0
        %1213 = vmatmul.mubr.bf16.gmra.mxu0 %v1178
        %v1214 = vpop.f32.mrf.mxu0
        %v1215 = vadd.f32 %v1162, %v1214
        %v1216 = vpop.f32.mrf.mxu0
        %v1217 = vpop.f32.mrf.mxu0
        %v1218 = vpop.f32.mrf.mxu0
        %1219 = vdwg.mxu0
        %1221 = vrot.lane.b32.xlu0 %v1215, 120
        %v1222 = vpop.permute.xlu0 %1221
        %1224 = vrot.lane.b32.xlu0 %v1215, 112
        %v1225 = vpop.permute.xlu0 %1224
        %1227 = vrot.lane.b32.xlu0 %v1215, 104
        %v1228 = vpop.permute.xlu0 %1227
        %v1230 = vcombine.low %v1215, %v1225
        %v1231 = vcombine.high %v1215, %v1225
        %v1233 = vunpack.c.l.s4 1983009808
        %v1234 = vunpack.c.0.s8 %v1233
        %v1235 = vlaneseq
        %v1236 = vshrl.u32 %v1235, 7
        %v1237 = vsub.s32 %v1234, %v1236
        %v1238 = vrot.slane %v1230, %v1237
        %v1240 = vunpack.c.l.s4 1983009808
        %v1241 = vunpack.c.0.s8 %v1240
        %v1242 = vlaneseq
        %v1243 = vshrl.u32 %v1242, 7
        %v1244 = vsub.s32 %v1241, %v1243
        %v1245 = vrot.slane %v1231, %v1244
        %v1246 = vcombine.low %v1222, %v1228
        %v1247 = vcombine.high %v1222, %v1228
        %v1249 = vunpack.c.l.s4 1983009808
        %v1250 = vunpack.c.0.s8 %v1249
        %v1251 = vlaneseq
        %v1252 = vshrl.u32 %v1251, 7
        %v1253 = vsub.s32 %v1250, %v1252
        %v1254 = vrot.slane %v1246, %v1253
        %v1256 = vunpack.c.l.s4 1983009808
        %v1257 = vunpack.c.0.s8 %v1256
        %v1258 = vlaneseq
        %v1259 = vshrl.u32 %v1258, 7
        %v1260 = vsub.s32 %v1257, %v1259
        %v1261 = vrot.slane %v1247, %v1260
        %v1262 = vcombine.low %v1238, %v1254
        %v1263 = vcombine.high %v1238, %v1254
        %v1265 = vunpack.c.l.s4 1934713408
        %v1266 = vunpack.c.0.s8 %v1265
        %v1267 = vlaneseq
        %v1268 = vshrl.u32 %v1267, 7
        %v1269 = vsub.s32 %v1266, %v1268
        %v1270 = vrot.slane %v1262, %v1269
        %v1272 = vunpack.c.l.s4 1934713408
        %v1273 = vunpack.c.0.s8 %v1272
        %v1274 = vlaneseq
        %v1275 = vshrl.u32 %v1274, 7
        %v1276 = vsub.s32 %v1273, %v1275
        %v1277 = vrot.slane %v1263, %v1276
        %v1278 = vcombine.low %v1245, %v1261
        %v1279 = vcombine.high %v1245, %v1261
        %v1281 = vunpack.c.l.s4 1934713408
        %v1282 = vunpack.c.0.s8 %v1281
        %v1283 = vlaneseq
        %v1284 = vshrl.u32 %v1283, 7
        %v1285 = vsub.s32 %v1282, %v1284
        %v1286 = vrot.slane %v1278, %v1285
        %v1288 = vunpack.c.l.s4 1934713408
        %v1289 = vunpack.c.0.s8 %v1288
        %v1290 = vlaneseq
        %v1291 = vshrl.u32 %v1290, 7
        %v1292 = vsub.s32 %v1289, %v1291
        %v1293 = vrot.slane %v1279, %v1292
        %v1294 = vcombine.high %v1270, 0.0
        %v1295 = vcombine.high %v1277, 0.0
        %v1296 = vcombine.high %v1286, 0.0
        %v1297 = vcombine.high %v1293, 0.0
        %v1298 = vcombine.low %v1270, %v1277
        %v1300 = vunpack.c.l.s4 1983009808
        %v1301 = vunpack.c.0.s8 %v1300
        %v1302 = vlaneseq
        %v1303 = vshrl.u32 %v1302, 7
        %v1304 = vsub.s32 %v1301, %v1303
        %v1305 = vrot.slane %v1298, %v1304
        %v1306 = vcombine.low %v1294, %v1295
        %v1308 = vunpack.c.l.s4 1983009808
        %v1309 = vunpack.c.0.s8 %v1308
        %v1310 = vlaneseq
        %v1311 = vshrl.u32 %v1310, 7
        %v1312 = vsub.s32 %v1309, %v1311
        %v1313 = vrot.slane %v1306, %v1312
        %v1314 = vcombine.low %v1286, %v1293
        %v1316 = vunpack.c.l.s4 1983009808
        %v1317 = vunpack.c.0.s8 %v1316
        %v1318 = vlaneseq
        %v1319 = vshrl.u32 %v1318, 7
        %v1320 = vsub.s32 %v1317, %v1319
        %v1321 = vrot.slane %v1314, %v1320
        %v1322 = vcombine.low %v1296, %v1297
        %v1324 = vunpack.c.l.s4 1983009808
        %v1325 = vunpack.c.0.s8 %v1324
        %v1326 = vlaneseq
        %v1327 = vshrl.u32 %v1326, 7
        %v1328 = vsub.s32 %v1325, %v1327
        %v1329 = vrot.slane %v1322, %v1328
        %v1330 = vcombine.low %v1305, %v1313
        %v1331 = vcombine.high %v1305, %v1313
        %v1333 = vunpack.c.l.s4 1934713408
        %v1334 = vunpack.c.0.s8 %v1333
        %v1335 = vlaneseq
        %v1336 = vshrl.u32 %v1335, 7
        %v1337 = vsub.s32 %v1334, %v1336
        %v1338 = vrot.slane %v1330, %v1337
        %v1340 = vunpack.c.l.s4 1934713408
        %v1341 = vunpack.c.0.s8 %v1340
        %v1342 = vlaneseq
        %v1343 = vshrl.u32 %v1342, 7
        %v1344 = vsub.s32 %v1341, %v1343
        %v1345 = vrot.slane %v1331, %v1344
        %v1346 = vcombine.low %v1321, %v1329
        %v1347 = vcombine.high %v1321, %v1329
        %v1349 = vunpack.c.l.s4 1934713408
        %v1350 = vunpack.c.0.s8 %v1349
        %v1351 = vlaneseq
        %v1352 = vshrl.u32 %v1351, 7
        %v1353 = vsub.s32 %v1350, %v1352
        %v1354 = vrot.slane %v1346, %v1353
        %v1356 = vunpack.c.l.s4 1934713408
        %v1357 = vunpack.c.0.s8 %v1356
        %v1358 = vlaneseq
        %v1359 = vshrl.u32 %v1358, 7
        %v1360 = vsub.s32 %v1357, %v1359
        %v1361 = vrot.slane %v1347, %v1360
        %v1362 = vcombine.low %v1338, %v1354
        %v1363 = vcombine.high %v1338, %v1354
        %v1364 = vcombine.low %v1345, %v1361
        %v1365 = vcombine.high %v1345, %v1361
        %v1366 = vpack.c.bf16 %v1362, %v1362
        %v1367 = vpack.c.bf16 %v1363, %v1363
        %v1368 = vpack.c.bf16 %v1364, %v1364
        %v1369 = vpack.c.bf16 %v1365, %v1365
        %v1370 = vld [vmem:[#allocation2] sm:$0xf]
        %v1371 = vld [vmem:[#allocation2 + $0x4] sm:$0xf]
        %v1372 = vld [vmem:[#allocation2 + $0x8] sm:$0xf]
        %v1373 = vld [vmem:[#allocation2 + $0xc] sm:$0xf]
        %vm1374 = vcmask 64512
        %v1376 = vsel %vm1374, %v1366, 0
        %v1379 = vsel %vm1374, %v1370, 0
        %1381 = vmatprep.subr.bf16.mxu0 0
        %1382 = vmatpush1.bf16.xpose.msra.mxu0 0
        %1383 = vmatprep.subr.bf16.mxu0 0
        %1384 = vmatpush1.bf16.xpose.msra.mxu0 0
        %1385 = vmatprep.subr.bf16.mxu0 0
        %1386 = vmatpush1.bf16.xpose.msra.mxu0 0
        %1387 = vmatprep.subr.bf16.mxu0 0
        %1388 = vmatpush1.bf16.xpose.msra.mxu0 0
        %1389 = vmatprep.subr.bf16.mxu0 0
        %1390 = vmatpush1.bf16.xpose.msra.mxu0 0
        %1391 = vmatprep.subr.bf16.mxu0 0
        %1392 = vmatpush1.bf16.xpose.msra.mxu0 0
        %1393 = vmatprep.subr.bf16.mxu0 0
        %1394 = vmatpush1.bf16.xpose.msra.mxu0 0
        %1395 = vmatprep.subr.bf16.mxu0 0
        %1396 = vmatpush1.bf16.xpose.msra.mxu0 %v1379
        %1397 = vmatprep.subr.bf16.mxu0 0
        %1398 = vmatpush2.bf16.xpose.msra.mxu0 0
        %1399 = vmatprep.subr.bf16.mxu0 0
        %1400 = vmatpush2.bf16.xpose.msra.mxu0 0
        %1401 = vmatprep.subr.bf16.mxu0 0
        %1402 = vmatpush2.bf16.xpose.msra.mxu0 0
        %1403 = vmatprep.subr.bf16.mxu0 0
        %1404 = vmatpush2.bf16.xpose.msra.mxu0 0
        %1405 = vmatprep.subr.bf16.mxu0 0
        %1406 = vmatpush2.bf16.xpose.msra.mxu0 0
        %1407 = vmatprep.subr.bf16.mxu0 0
        %1408 = vmatpush2.bf16.xpose.msra.mxu0 0
        %1409 = vmatprep.subr.bf16.mxu0 0
        %1410 = vmatpush2.bf16.xpose.msra.mxu0 0
        %1411 = vmatprep.subr.bf16.mxu0 0
        %1412 = vmatpush2.bf16.xpose.msra.mxu0 0
        %1413 = vmatprep.mubr.bf16.mxu0 0
        %1414 = vmatmul.mubr.bf16.gmra.mxu0 %v1376
        %v1415 = vpop.f32.mrf.mxu0
        %v1416 = vadd.f32 0.0, %v1415
        %v1417 = vpop.f32.mrf.mxu0
        %v1418 = vpop.f32.mrf.mxu0
        %v1419 = vpop.f32.mrf.mxu0
        %1420 = vdwg.mxu0
        %v1422 = vsel %vm1374, %v1367, 0
        %v1425 = vsel %vm1374, %v1371, 0
        %1427 = vmatprep.subr.bf16.mxu0 0
        %1428 = vmatpush1.bf16.xpose.msra.mxu0 0
        %1429 = vmatprep.subr.bf16.mxu0 0
        %1430 = vmatpush1.bf16.xpose.msra.mxu0 0
        %1431 = vmatprep.subr.bf16.mxu0 0
        %1432 = vmatpush1.bf16.xpose.msra.mxu0 0
        %1433 = vmatprep.subr.bf16.mxu0 0
        %1434 = vmatpush1.bf16.xpose.msra.mxu0 0
        %1435 = vmatprep.subr.bf16.mxu0 0
        %1436 = vmatpush1.bf16.xpose.msra.mxu0 0
        %1437 = vmatprep.subr.bf16.mxu0 0
        %1438 = vmatpush1.bf16.xpose.msra.mxu0 0
        %1439 = vmatprep.subr.bf16.mxu0 0
        %1440 = vmatpush1.bf16.xpose.msra.mxu0 0
        %1441 = vmatprep.subr.bf16.mxu0 0
        %1442 = vmatpush1.bf16.xpose.msra.mxu0 %v1425
        %1443 = vmatprep.subr.bf16.mxu0 0
        %1444 = vmatpush2.bf16.xpose.msra.mxu0 0
        %1445 = vmatprep.subr.bf16.mxu0 0
        %1446 = vmatpush2.bf16.xpose.msra.mxu0 0
        %1447 = vmatprep.subr.bf16.mxu0 0
        %1448 = vmatpush2.bf16.xpose.msra.mxu0 0
        %1449 = vmatprep.subr.bf16.mxu0 0
        %1450 = vmatpush2.bf16.xpose.msra.mxu0 0
        %1451 = vmatprep.subr.bf16.mxu0 0
        %1452 = vmatpush2.bf16.xpose.msra.mxu0 0
        %1453 = vmatprep.subr.bf16.mxu0 0
        %1454 = vmatpush2.bf16.xpose.msra.mxu0 0
        %1455 = vmatprep.subr.bf16.mxu0 0
        %1456 = vmatpush2.bf16.xpose.msra.mxu0 0
        %1457 = vmatprep.subr.bf16.mxu0 0
        %1458 = vmatpush2.bf16.xpose.msra.mxu0 0
        %1459 = vmatprep.mubr.bf16.mxu0 0
        %1460 = vmatmul.mubr.bf16.gmra.mxu0 %v1422
        %v1461 = vpop.f32.mrf.mxu0
        %v1462 = vadd.f32 0.0, %v1461
        %v1463 = vpop.f32.mrf.mxu0
        %v1464 = vpop.f32.mrf.mxu0
        %v1465 = vpop.f32.mrf.mxu0
        %1466 = vdwg.mxu0
        %v1468 = vsel %vm1374, %v1368, 0
        %v1471 = vsel %vm1374, %v1372, 0
        %1473 = vmatprep.subr.bf16.mxu0 0
        %1474 = vmatpush1.bf16.xpose.msra.mxu0 0
        %1475 = vmatprep.subr.bf16.mxu0 0
        %1476 = vmatpush1.bf16.xpose.msra.mxu0 0
        %1477 = vmatprep.subr.bf16.mxu0 0
        %1478 = vmatpush1.bf16.xpose.msra.mxu0 0
        %1479 = vmatprep.subr.bf16.mxu0 0
        %1480 = vmatpush1.bf16.xpose.msra.mxu0 0
        %1481 = vmatprep.subr.bf16.mxu0 0
        %1482 = vmatpush1.bf16.xpose.msra.mxu0 0
        %1483 = vmatprep.subr.bf16.mxu0 0
        %1484 = vmatpush1.bf16.xpose.msra.mxu0 0
        %1485 = vmatprep.subr.bf16.mxu0 0
        %1486 = vmatpush1.bf16.xpose.msra.mxu0 0
        %1487 = vmatprep.subr.bf16.mxu0 0
        %1488 = vmatpush1.bf16.xpose.msra.mxu0 %v1471
        %1489 = vmatprep.subr.bf16.mxu0 0
        %1490 = vmatpush2.bf16.xpose.msra.mxu0 0
        %1491 = vmatprep.subr.bf16.mxu0 0
        %1492 = vmatpush2.bf16.xpose.msra.mxu0 0
        %1493 = vmatprep.subr.bf16.mxu0 0
        %1494 = vmatpush2.bf16.xpose.msra.mxu0 0
        %1495 = vmatprep.subr.bf16.mxu0 0
        %1496 = vmatpush2.bf16.xpose.msra.mxu0 0
        %1497 = vmatprep.subr.bf16.mxu0 0
        %1498 = vmatpush2.bf16.xpose.msra.mxu0 0
        %1499 = vmatprep.subr.bf16.mxu0 0
        %1500 = vmatpush2.bf16.xpose.msra.mxu0 0
        %1501 = vmatprep.subr.bf16.mxu0 0
        %1502 = vmatpush2.bf16.xpose.msra.mxu0 0
        %1503 = vmatprep.subr.bf16.mxu0 0
        %1504 = vmatpush2.bf16.xpose.msra.mxu0 0
        %1505 = vmatprep.mubr.bf16.mxu0 0
        %1506 = vmatmul.mubr.bf16.gmra.mxu0 %v1468
        %v1507 = vpop.f32.mrf.mxu0
        %v1508 = vadd.f32 0.0, %v1507
        %v1509 = vpop.f32.mrf.mxu0
        %v1510 = vpop.f32.mrf.mxu0
        %v1511 = vpop.f32.mrf.mxu0
        %1512 = vdwg.mxu0
        %v1514 = vsel %vm1374, %v1369, 0
        %v1517 = vsel %vm1374, %v1373, 0
        %1519 = vmatprep.subr.bf16.mxu0 0
        %1520 = vmatpush1.bf16.xpose.msra.mxu0 0
        %1521 = vmatprep.subr.bf16.mxu0 0
        %1522 = vmatpush1.bf16.xpose.msra.mxu0 0
        %1523 = vmatprep.subr.bf16.mxu0 0
        %1524 = vmatpush1.bf16.xpose.msra.mxu0 0
        %1525 = vmatprep.subr.bf16.mxu0 0
        %1526 = vmatpush1.bf16.xpose.msra.mxu0 0
        %1527 = vmatprep.subr.bf16.mxu0 0
        %1528 = vmatpush1.bf16.xpose.msra.mxu0 0
        %1529 = vmatprep.subr.bf16.mxu0 0
        %1530 = vmatpush1.bf16.xpose.msra.mxu0 0
        %1531 = vmatprep.subr.bf16.mxu0 0
        %1532 = vmatpush1.bf16.xpose.msra.mxu0 0
        %1533 = vmatprep.subr.bf16.mxu0 0
        %1534 = vmatpush1.bf16.xpose.msra.mxu0 %v1517
        %1535 = vmatprep.subr.bf16.mxu0 0
        %1536 = vmatpush2.bf16.xpose.msra.mxu0 0
        %1537 = vmatprep.subr.bf16.mxu0 0
        %1538 = vmatpush2.bf16.xpose.msra.mxu0 0
        %1539 = vmatprep.subr.bf16.mxu0 0
        %1540 = vmatpush2.bf16.xpose.msra.mxu0 0
        %1541 = vmatprep.subr.bf16.mxu0 0
        %1542 = vmatpush2.bf16.xpose.msra.mxu0 0
        %1543 = vmatprep.subr.bf16.mxu0 0
        %1544 = vmatpush2.bf16.xpose.msra.mxu0 0
        %1545 = vmatprep.subr.bf16.mxu0 0
        %1546 = vmatpush2.bf16.xpose.msra.mxu0 0
        %1547 = vmatprep.subr.bf16.mxu0 0
        %1548 = vmatpush2.bf16.xpose.msra.mxu0 0
        %1549 = vmatprep.subr.bf16.mxu0 0
        %1550 = vmatpush2.bf16.xpose.msra.mxu0 0
        %1551 = vmatprep.mubr.bf16.mxu0 0
        %1552 = vmatmul.mubr.bf16.gmra.mxu0 %v1514
        %v1553 = vpop.f32.mrf.mxu0
        %v1554 = vadd.f32 0.0, %v1553
        %v1555 = vpop.f32.mrf.mxu0
        %v1556 = vpop.f32.mrf.mxu0
        %v1557 = vpop.f32.mrf.mxu0
        %1558 = vdwg.mxu0
        %v1559 = vlaneseq
        %v1560 = vshrl.u32 %v1559, 7
        %v1561 = vstv %s704
        %v1562 = vadd.s32 %v1561, %v1560
        %v1563 = vlaneseq
        %v1564 = vand.u32 %v1563, 127
        %vm1565 = vcmp.gt.s32.totalorder %v1564, %v1562
        %v1566 = vld [vmem:[%s624] sm:$0x1]
        %vm1567 = vcmp.gt.f32.partialorder %v1566, 0.0
        %v1568 = vsel %vm1567, 1, 0
        %v1569 = vlaneseq
        %v1570 = vshrl.u32 %v1569, 7
        %v1571 = vsub.s32 0, %v1570
        %v1572 = vrot.slane %v1568, %v1571
        %vm1573 = vcmp.eq.s32.totalorder %v1572, 1
        %vm1574 = vmor %vm1565, %vm1573
        %v1575 = vsel %vm1574, 1, 0
        %vm1576 = vcmp.eq.s32.totalorder %v1575, 1
        %v1577 = vsel %vm1576, -1e+09, %v1416
        %v1578 = vsel %vm1576, -1e+09, %v1462
        %v1579 = vsel %vm1576, -1e+09, %v1508
        %v1580 = vsel %vm1576, -1e+09, %v1554
        %v1581 = vsel %vm1374, %v1577, -inf
        %1582 = vmax.xlane.f32.xlu0 %v1581
        %v1583 = vpop.xlane.xlu0 %1582
        %v1584 = vsel %vm1374, %v1578, -inf
        %1585 = vmax.xlane.f32.xlu0 %v1584
        %v1586 = vpop.xlane.xlu0 %1585
        %v1587 = vsel %vm1374, %v1579, -inf
        %1588 = vmax.xlane.f32.xlu0 %v1587
        %v1589 = vpop.xlane.xlu0 %1588
        %v1590 = vsel %vm1374, %v1580, -inf
        %1591 = vmax.xlane.f32.xlu0 %v1590
        %v1592 = vpop.xlane.xlu0 %1591
        %v1593 = vsub.f32 %v1577, %v1583
        %v1594 = vsub.f32 %v1578, %v1586
        %v1595 = vsub.f32 %v1579, %v1589
        %v1596 = vsub.f32 %v1580, %v1592
        %v1597 = vmul.f32 %v1593, 1.442695
        %v1598 = vpow.pop %v1597
        %v1599 = vmul.f32 %v1594, 1.442695
        %v1600 = vpow.pop %v1599
        %v1601 = vmul.f32 %v1595, 1.442695
        %v1602 = vpow.pop %v1601
        %v1603 = vmul.f32 %v1596, 1.442695
        %v1604 = vpow.pop %v1603
        %v1605 = vsel %vm1374, %v1598, 0.0
        %1606 = vadd.xlane.f32.xlu0 %v1605
        %v1607 = vpop.xlane.xlu0 %1606
        %v1608 = vsel %vm1374, %v1600, 0.0
        %1609 = vadd.xlane.f32.xlu0 %v1608
        %v1610 = vpop.xlane.xlu0 %1609
        %v1611 = vsel %vm1374, %v1602, 0.0
        %1612 = vadd.xlane.f32.xlu0 %v1611
        %v1613 = vpop.xlane.xlu0 %1612
        %v1614 = vsel %vm1374, %v1604, 0.0
        %1615 = vadd.xlane.f32.xlu0 %v1614
        %v1616 = vpop.xlane.xlu0 %1615
        %v1617 = vrcp.pop %v1607
        %v1618 = vrcp.pop %v1610
        %v1619 = vrcp.pop %v1613
        %v1620 = vrcp.pop %v1616
        %v1621 = vmul.f32 %v1598, %v1617
        %v1622 = vmul.f32 %v1600, %v1618
        %v1623 = vmul.f32 %v1602, %v1619
        %v1624 = vmul.f32 %v1604, %v1620
        %v1625 = vpack.c.bf16 %v1621, %v1621
        %v1626 = vpack.c.bf16 %v1622, %v1622
        %v1627 = vpack.c.bf16 %v1623, %v1623
        %v1628 = vpack.c.bf16 %v1624, %v1624
        %vm1629 = vcmask 60416
        %1630 = vst.msk [vmem:[%s698] sm:$0xf] %vm1629, %v1625
        %1631 = vst.msk [vmem:[%s698 + $0x4] sm:$0xf] %vm1629, %v1626
        %1632 = vst.msk [vmem:[%s698 + $0x8] sm:$0xf] %vm1629, %v1627
        %1633 = vst.msk [vmem:[%s698 + $0xc] sm:$0xf] %vm1629, %v1628
        %v1634 = vld [vmem:[#allocation3] sm:$0xf]
        %v1635 = vld [vmem:[#allocation3 + $0x4] sm:$0xf]
        %v1636 = vld [vmem:[#allocation3 + $0x8] sm:$0xf]
        %v1637 = vld [vmem:[#allocation3 + $0xc] sm:$0xf]
        %v1639 = vsel %vm1374, %v1625, 0
        %vm1641 = vcmask 1043456
        %v1643 = vsel %vm1641, %v1634, 0
        %1645 = vmatprep.subr.bf16.mxu0 0
        %1646 = vmatpush1.bf16.msra.mxu0 0
        %1647 = vmatprep.subr.bf16.mxu0 0
        %1648 = vmatpush1.bf16.msra.mxu0 0
        %1649 = vmatprep.subr.bf16.mxu0 0
        %1650 = vmatpush1.bf16.msra.mxu0 0
        %1651 = vmatprep.subr.bf16.mxu0 0
        %1652 = vmatpush1.bf16.msra.mxu0 0
        %1653 = vmatprep.subr.bf16.mxu0 0
        %1654 = vmatpush1.bf16.msra.mxu0 0
        %1655 = vmatprep.subr.bf16.mxu0 0
        %1656 = vmatpush1.bf16.msra.mxu0 0
        %1657 = vmatprep.subr.bf16.mxu0 0
        %1658 = vmatpush1.bf16.msra.mxu0 0
        %1659 = vmatprep.subr.bf16.mxu0 0
        %1660 = vmatpush1.bf16.msra.mxu0 %v1643
        %1661 = vmatprep.subr.bf16.mxu0 0
        %1662 = vmatpush2.bf16.msra.mxu0 0
        %1663 = vmatprep.subr.bf16.mxu0 0
        %1664 = vmatpush2.bf16.msra.mxu0 0
        %1665 = vmatprep.subr.bf16.mxu0 0
        %1666 = vmatpush2.bf16.msra.mxu0 0
        %1667 = vmatprep.subr.bf16.mxu0 0
        %1668 = vmatpush2.bf16.msra.mxu0 0
        %1669 = vmatprep.subr.bf16.mxu0 0
        %1670 = vmatpush2.bf16.msra.mxu0 0
        %1671 = vmatprep.subr.bf16.mxu0 0
        %1672 = vmatpush2.bf16.msra.mxu0 0
        %1673 = vmatprep.subr.bf16.mxu0 0
        %1674 = vmatpush2.bf16.msra.mxu0 0
        %1675 = vmatprep.subr.bf16.mxu0 0
        %1676 = vmatpush2.bf16.msra.mxu0 0
        %1677 = vmatprep.mubr.bf16.mxu0 0
        %1678 = vmatmul.mubr.bf16.gmra.mxu0 %v1639
        %v1679 = vpop.f32.mrf.mxu0
        %v1680 = vadd.f32 0.0, %v1679
        %v1681 = vpop.f32.mrf.mxu0
        %v1682 = vpop.f32.mrf.mxu0
        %v1683 = vpop.f32.mrf.mxu0
        %1684 = vdwg.mxu0
        %v1686 = vsel %vm1374, %v1626, 0
        %v1689 = vsel %vm1641, %v1635, 0
        %1691 = vmatprep.subr.bf16.mxu0 0
        %1692 = vmatpush1.bf16.msra.mxu0 0
        %1693 = vmatprep.subr.bf16.mxu0 0
        %1694 = vmatpush1.bf16.msra.mxu0 0
        %1695 = vmatprep.subr.bf16.mxu0 0
        %1696 = vmatpush1.bf16.msra.mxu0 0
        %1697 = vmatprep.subr.bf16.mxu0 0
        %1698 = vmatpush1.bf16.msra.mxu0 0
        %1699 = vmatprep.subr.bf16.mxu0 0
        %1700 = vmatpush1.bf16.msra.mxu0 0
        %1701 = vmatprep.subr.bf16.mxu0 0
        %1702 = vmatpush1.bf16.msra.mxu0 0
        %1703 = vmatprep.subr.bf16.mxu0 0
        %1704 = vmatpush1.bf16.msra.mxu0 0
        %1705 = vmatprep.subr.bf16.mxu0 0
        %1706 = vmatpush1.bf16.msra.mxu0 %v1689
        %1707 = vmatprep.subr.bf16.mxu0 0
        %1708 = vmatpush2.bf16.msra.mxu0 0
        %1709 = vmatprep.subr.bf16.mxu0 0
        %1710 = vmatpush2.bf16.msra.mxu0 0
        %1711 = vmatprep.subr.bf16.mxu0 0
        %1712 = vmatpush2.bf16.msra.mxu0 0
        %1713 = vmatprep.subr.bf16.mxu0 0
        %1714 = vmatpush2.bf16.msra.mxu0 0
        %1715 = vmatprep.subr.bf16.mxu0 0
        %1716 = vmatpush2.bf16.msra.mxu0 0
        %1717 = vmatprep.subr.bf16.mxu0 0
        %1718 = vmatpush2.bf16.msra.mxu0 0
        %1719 = vmatprep.subr.bf16.mxu0 0
        %1720 = vmatpush2.bf16.msra.mxu0 0
        %1721 = vmatprep.subr.bf16.mxu0 0
        %1722 = vmatpush2.bf16.msra.mxu0 0
        %1723 = vmatprep.mubr.bf16.mxu0 0
        %1724 = vmatmul.mubr.bf16.gmra.mxu0 %v1686
        %v1725 = vpop.f32.mrf.mxu0
        %v1726 = vadd.f32 0.0, %v1725
        %v1727 = vpop.f32.mrf.mxu0
        %v1728 = vpop.f32.mrf.mxu0
        %v1729 = vpop.f32.mrf.mxu0
        %1730 = vdwg.mxu0
        %v1732 = vsel %vm1374, %v1627, 0
        %v1735 = vsel %vm1641, %v1636, 0
        %1737 = vmatprep.subr.bf16.mxu0 0
        %1738 = vmatpush1.bf16.msra.mxu0 0
        %1739 = vmatprep.subr.bf16.mxu0 0
        %1740 = vmatpush1.bf16.msra.mxu0 0
        %1741 = vmatprep.subr.bf16.mxu0 0
        %1742 = vmatpush1.bf16.msra.mxu0 0
        %1743 = vmatprep.subr.bf16.mxu0 0
        %1744 = vmatpush1.bf16.msra.mxu0 0
        %1745 = vmatprep.subr.bf16.mxu0 0
        %1746 = vmatpush1.bf16.msra.mxu0 0
        %1747 = vmatprep.subr.bf16.mxu0 0
        %1748 = vmatpush1.bf16.msra.mxu0 0
        %1749 = vmatprep.subr.bf16.mxu0 0
        %1750 = vmatpush1.bf16.msra.mxu0 0
        %1751 = vmatprep.subr.bf16.mxu0 0
        %1752 = vmatpush1.bf16.msra.mxu0 %v1735
        %1753 = vmatprep.subr.bf16.mxu0 0
        %1754 = vmatpush2.bf16.msra.mxu0 0
        %1755 = vmatprep.subr.bf16.mxu0 0
        %1756 = vmatpush2.bf16.msra.mxu0 0
        %1757 = vmatprep.subr.bf16.mxu0 0
        %1758 = vmatpush2.bf16.msra.mxu0 0
        %1759 = vmatprep.subr.bf16.mxu0 0
        %1760 = vmatpush2.bf16.msra.mxu0 0
        %1761 = vmatprep.subr.bf16.mxu0 0
        %1762 = vmatpush2.bf16.msra.mxu0 0
        %1763 = vmatprep.subr.bf16.mxu0 0
        %1764 = vmatpush2.bf16.msra.mxu0 0
        %1765 = vmatprep.subr.bf16.mxu0 0
        %1766 = vmatpush2.bf16.msra.mxu0 0
        %1767 = vmatprep.subr.bf16.mxu0 0
        %1768 = vmatpush2.bf16.msra.mxu0 0
        %1769 = vmatprep.mubr.bf16.mxu0 0
        %1770 = vmatmul.mubr.bf16.gmra.mxu0 %v1732
        %v1771 = vpop.f32.mrf.mxu0
        %v1772 = vadd.f32 0.0, %v1771
        %v1773 = vpop.f32.mrf.mxu0
        %v1774 = vpop.f32.mrf.mxu0
        %v1775 = vpop.f32.mrf.mxu0
        %1776 = vdwg.mxu0
        %v1778 = vsel %vm1374, %v1628, 0
        %v1781 = vsel %vm1641, %v1637, 0
        %1783 = vmatprep.subr.bf16.mxu0 0
        %1784 = vmatpush1.bf16.msra.mxu0 0
        %1785 = vmatprep.subr.bf16.mxu0 0
        %1786 = vmatpush1.bf16.msra.mxu0 0
        %1787 = vmatprep.subr.bf16.mxu0 0
        %1788 = vmatpush1.bf16.msra.mxu0 0
        %1789 = vmatprep.subr.bf16.mxu0 0
        %1790 = vmatpush1.bf16.msra.mxu0 0
        %1791 = vmatprep.subr.bf16.mxu0 0
        %1792 = vmatpush1.bf16.msra.mxu0 0
        %1793 = vmatprep.subr.bf16.mxu0 0
        %1794 = vmatpush1.bf16.msra.mxu0 0
        %1795 = vmatprep.subr.bf16.mxu0 0
        %1796 = vmatpush1.bf16.msra.mxu0 0
        %1797 = vmatprep.subr.bf16.mxu0 0
        %1798 = vmatpush1.bf16.msra.mxu0 %v1781
        %1799 = vmatprep.subr.bf16.mxu0 0
        %1800 = vmatpush2.bf16.msra.mxu0 0
        %1801 = vmatprep.subr.bf16.mxu0 0
        %1802 = vmatpush2.bf16.msra.mxu0 0
        %1803 = vmatprep.subr.bf16.mxu0 0
        %1804 = vmatpush2.bf16.msra.mxu0 0
        %1805 = vmatprep.subr.bf16.mxu0 0
        %1806 = vmatpush2.bf16.msra.mxu0 0
        %1807 = vmatprep.subr.bf16.mxu0 0
        %1808 = vmatpush2.bf16.msra.mxu0 0
        %1809 = vmatprep.subr.bf16.mxu0 0
        %1810 = vmatpush2.bf16.msra.mxu0 0
        %1811 = vmatprep.subr.bf16.mxu0 0
        %1812 = vmatpush2.bf16.msra.mxu0 0
        %1813 = vmatprep.subr.bf16.mxu0 0
        %1814 = vmatpush2.bf16.msra.mxu0 0
        %1815 = vmatprep.mubr.bf16.mxu0 0
        %1816 = vmatmul.mubr.bf16.gmra.mxu0 %v1778
        %v1817 = vpop.f32.mrf.mxu0
        %v1818 = vadd.f32 0.0, %v1817
        %v1819 = vpop.f32.mrf.mxu0
        %v1820 = vpop.f32.mrf.mxu0
        %v1821 = vpop.f32.mrf.mxu0
        %1822 = vdwg.mxu0
        %v1823 = vcombine.low %v1680, %v1772
        %v1824 = vcombine.high %v1680, %v1772
        %v1826 = vunpack.c.l.s4 1983009808
        %v1827 = vunpack.c.0.s8 %v1826
        %v1828 = vlaneseq
        %v1829 = vshrl.u32 %v1828, 7
        %v1830 = vsub.s32 %v1827, %v1829
        %v1831 = vrot.slane %v1823, %v1830
        %v1833 = vunpack.c.l.s4 1983009808
        %v1834 = vunpack.c.0.s8 %v1833
        %v1835 = vlaneseq
        %v1836 = vshrl.u32 %v1835, 7
        %v1837 = vsub.s32 %v1834, %v1836
        %v1838 = vrot.slane %v1824, %v1837
        %v1839 = vcombine.low %v1726, %v1818
        %v1840 = vcombine.high %v1726, %v1818
        %v1842 = vunpack.c.l.s4 1983009808
        %v1843 = vunpack.c.0.s8 %v1842
        %v1844 = vlaneseq
        %v1845 = vshrl.u32 %v1844, 7
        %v1846 = vsub.s32 %v1843, %v1845
        %v1847 = vrot.slane %v1839, %v1846
        %v1849 = vunpack.c.l.s4 1983009808
        %v1850 = vunpack.c.0.s8 %v1849
        %v1851 = vlaneseq
        %v1852 = vshrl.u32 %v1851, 7
        %v1853 = vsub.s32 %v1850, %v1852
        %v1854 = vrot.slane %v1840, %v1853
        %v1855 = vcombine.low %v1831, %v1847
        %v1856 = vcombine.high %v1831, %v1847
        %v1858 = vunpack.c.l.s4 1934713408
        %v1859 = vunpack.c.0.s8 %v1858
        %v1860 = vlaneseq
        %v1861 = vshrl.u32 %v1860, 7
        %v1862 = vsub.s32 %v1859, %v1861
        %v1863 = vrot.slane %v1855, %v1862
        %v1865 = vunpack.c.l.s4 1934713408
        %v1866 = vunpack.c.0.s8 %v1865
        %v1867 = vlaneseq
        %v1868 = vshrl.u32 %v1867, 7
        %v1869 = vsub.s32 %v1866, %v1868
        %v1870 = vrot.slane %v1856, %v1869
        %v1871 = vcombine.low %v1838, %v1854
        %v1872 = vcombine.high %v1838, %v1854
        %v1874 = vunpack.c.l.s4 1934713408
        %v1875 = vunpack.c.0.s8 %v1874
        %v1876 = vlaneseq
        %v1877 = vshrl.u32 %v1876, 7
        %v1878 = vsub.s32 %v1875, %v1877
        %v1879 = vrot.slane %v1871, %v1878
        %v1881 = vunpack.c.l.s4 1934713408
        %v1882 = vunpack.c.0.s8 %v1881
        %v1883 = vlaneseq
        %v1884 = vshrl.u32 %v1883, 7
        %v1885 = vsub.s32 %v1882, %v1884
        %v1886 = vrot.slane %v1872, %v1885
        %v1887 = vcombine.high %v1863, 0.0
        %v1888 = vcombine.high %v1870, 0.0
        %v1889 = vcombine.high %v1879, 0.0
        %v1890 = vcombine.high %v1886, 0.0
        %v1891 = vcombine.low %v1863, %v1870
        %v1893 = vunpack.c.l.s4 1983009808
        %v1894 = vunpack.c.0.s8 %v1893
        %v1895 = vlaneseq
        %v1896 = vshrl.u32 %v1895, 7
        %v1897 = vsub.s32 %v1894, %v1896
        %v1898 = vrot.slane %v1891, %v1897
        %v1899 = vcombine.low %v1887, %v1888
        %v1901 = vunpack.c.l.s4 1983009808
        %v1902 = vunpack.c.0.s8 %v1901
        %v1903 = vlaneseq
        %v1904 = vshrl.u32 %v1903, 7
        %v1905 = vsub.s32 %v1902, %v1904
        %v1906 = vrot.slane %v1899, %v1905
        %v1907 = vcombine.low %v1879, %v1886
        %v1909 = vunpack.c.l.s4 1983009808
        %v1910 = vunpack.c.0.s8 %v1909
        %v1911 = vlaneseq
        %v1912 = vshrl.u32 %v1911, 7
        %v1913 = vsub.s32 %v1910, %v1912
        %v1914 = vrot.slane %v1907, %v1913
        %v1915 = vcombine.low %v1889, %v1890
        %v1917 = vunpack.c.l.s4 1983009808
        %v1918 = vunpack.c.0.s8 %v1917
        %v1919 = vlaneseq
        %v1920 = vshrl.u32 %v1919, 7
        %v1921 = vsub.s32 %v1918, %v1920
        %v1922 = vrot.slane %v1915, %v1921
        %v1923 = vcombine.low %v1898, %v1906
        %v1924 = vcombine.high %v1898, %v1906
        %v1926 = vunpack.c.l.s4 1934713408
        %v1927 = vunpack.c.0.s8 %v1926
        %v1928 = vlaneseq
        %v1929 = vshrl.u32 %v1928, 7
        %v1930 = vsub.s32 %v1927, %v1929
        %v1931 = vrot.slane %v1923, %v1930
        %v1933 = vunpack.c.l.s4 1934713408
        %v1934 = vunpack.c.0.s8 %v1933
        %v1935 = vlaneseq
        %v1936 = vshrl.u32 %v1935, 7
        %v1937 = vsub.s32 %v1934, %v1936
        %v1938 = vrot.slane %v1924, %v1937
        %v1939 = vcombine.low %v1914, %v1922
        %v1940 = vcombine.high %v1914, %v1922
        %v1942 = vunpack.c.l.s4 1934713408
        %v1943 = vunpack.c.0.s8 %v1942
        %v1944 = vlaneseq
        %v1945 = vshrl.u32 %v1944, 7
        %v1946 = vsub.s32 %v1943, %v1945
        %v1947 = vrot.slane %v1939, %v1946
        %v1949 = vunpack.c.l.s4 1934713408
        %v1950 = vunpack.c.0.s8 %v1949
        %v1951 = vlaneseq
        %v1952 = vshrl.u32 %v1951, 7
        %v1953 = vsub.s32 %v1950, %v1952
        %v1954 = vrot.slane %v1940, %v1953
        %v1955 = vcombine.low %v1931, %v1947
        %v1956 = vcombine.high %v1931, %v1947
        %v1957 = vcombine.low %v1938, %v1954
        %v1958 = vcombine.high %v1938, %v1954
        %1960 = vrot.lane.b32.xlu0 %v1956, 8
        %v1961 = vpop.permute.xlu0 %1960
        %1964 = vrot.lane.b32.xlu0 %v1957, 16
        %v1965 = vpop.permute.xlu0 %1964
        %1968 = vrot.lane.b32.xlu0 %v1958, 24
        %v1969 = vpop.permute.xlu0 %1968
        %v1971 = vsel %vm1374, %v1955, %v1961
        %vm1972 = vcmask 130048
        %v1973 = vsel %vm1972, %v1971, %v1965
        %vm1974 = vcmask 195584
        %v1975 = vsel %vm1974, %v1973, %v1969
        %v1976 = vpack.c.bf16 %v1975, %v1975
        %v1977 = vld [vmem:[#allocation9] sm:$0xf]
        %v1978 = vld [vmem:[#allocation9 + $0x4] sm:$0xf]
        %v1979 = vld [vmem:[#allocation9 + $0x8] sm:$0xf]
        %v1980 = vld [vmem:[#allocation9 + $0xc] sm:$0xf]
        %v1981 = vld [vmem:[%s9] sm:$0x1]
        %v1983 = vlaneseq
        %v1984 = vshrl.u32 %v1983, 7
        %v1985 = vsub.s32 0, %v1984
        %v1986 = vrot.slane %v1981, %v1985
        %v1992 = vunpack.c.l.b16 %v1977
        %v1993 = vunpack.c.l.b16 %v1978
        %v1994 = vunpack.c.l.b16 %v1979
        %v1995 = vunpack.c.l.b16 %v1980
        %v1996 = vpack.c.b16 %v1993, %v1992
        %v1997 = vpack.c.b16 %v1995, %v1994
        %v2001 = vsel %vm1176, %v1976, 0
        %2003 = vmatprep.subr.bf16.mxu0 0
        %2004 = vmatpush1.bf16.msra.mxu0 0
        %2005 = vmatprep.subr.bf16.mxu0 0
        %2006 = vmatpush1.bf16.msra.mxu0 0
        %2007 = vmatprep.subr.bf16.mxu0 0
        %2008 = vmatpush1.bf16.msra.mxu0 0
        %2009 = vmatprep.subr.bf16.mxu0 0
        %2010 = vmatpush1.bf16.msra.mxu0 0
        %2011 = vmatprep.subr.bf16.mxu0 0
        %2012 = vmatpush1.bf16.msra.mxu0 0
        %2013 = vmatprep.subr.bf16.mxu0 0
        %2014 = vmatpush1.bf16.msra.mxu0 0
        %2015 = vmatprep.subr.bf16.mxu0 0
        %2016 = vmatpush1.bf16.msra.mxu0 %v1997
        %2017 = vmatprep.subr.bf16.mxu0 0
        %2018 = vmatpush1.bf16.msra.mxu0 %v1996
        %2019 = vmatprep.subr.bf16.mxu0 0
        %2020 = vmatpush2.bf16.msra.mxu0 0
        %2021 = vmatprep.subr.bf16.mxu0 0
        %2022 = vmatpush2.bf16.msra.mxu0 0
        %2023 = vmatprep.subr.bf16.mxu0 0
        %2024 = vmatpush2.bf16.msra.mxu0 0
        %2025 = vmatprep.subr.bf16.mxu0 0
        %2026 = vmatpush2.bf16.msra.mxu0 0
        %2027 = vmatprep.subr.bf16.mxu0 0
        %2028 = vmatpush2.bf16.msra.mxu0 0
        %2029 = vmatprep.subr.bf16.mxu0 0
        %2030 = vmatpush2.bf16.msra.mxu0 0
        %2031 = vmatprep.subr.bf16.mxu0 0
        %2032 = vmatpush2.bf16.msra.mxu0 0
        %2033 = vmatprep.subr.bf16.mxu0 0
        %2034 = vmatpush2.bf16.msra.mxu0 0
        %2035 = vmatprep.mubr.bf16.mxu0 0
        %2036 = vmatmul.mubr.bf16.gmra.mxu0 %v2001
        %v2037 = vpop.f32.mrf.mxu0
        %v2038 = vadd.f32 %v1986, %v2037
        %v2039 = vpop.f32.mrf.mxu0
        %v2040 = vpop.f32.mrf.mxu0
        %v2041 = vpop.f32.mrf.mxu0
        %2042 = vdwg.mxu0
        %v2043 = vadd.f32 %v1151, %v2038
        %v2044 = vld [vmem:[%s10] sm:$0x1]
        %v2045 = vld [vmem:[%s11] sm:$0x1]
        %v2046 = vsel %vm1176, %v2043, 0.0
        %2047 = vadd.xlane.f32.xlu0 %v2046
        %v2048 = vpop.xlane.xlu0 %2047
        %v2049 = vrcp.pop 32.0
        %v2050 = vmul.f32 %v2048, %v2049
        %v2051 = vsub.f32 %v2043, %v2050
        %v2052 = vmul.f32 %v2051, %v2051
        %v2053 = vsel %vm1176, %v2052, 0.0
        %2054 = vadd.xlane.f32.xlu0 %v2053
        %v2055 = vpop.xlane.xlu0 %2054
        %v2056 = vmul.f32 %v2055, %v2049
        %v2057 = vadd.f32 %v2056, 1e-05
        %v2058 = vrsqrt.pop %v2057
        %v2059 = vmul.f32 %v2051, %v2058
        %v2061 = vlaneseq
        %v2062 = vshrl.u32 %v2061, 7
        %v2063 = vsub.s32 0, %v2062
        %v2064 = vrot.slane %v2044, %v2063
        %v2066 = vmul.f32 %v2059, %v2064
        %v2068 = vlaneseq
        %v2069 = vshrl.u32 %v2068, 7
        %v2070 = vsub.s32 0, %v2069
        %v2071 = vrot.slane %v2045, %v2070
        %v2073 = vadd.f32 %v2066, %v2071
        %v2074 = vpack.c.bf16 %v2073, %v2073
        %v2075 = vld [vmem:[#allocation10] sm:$0xf]
        %v2076 = vld [vmem:[#allocation10 + $0x4] sm:$0xf]
        %v2077 = vld [vmem:[#allocation10 + $0x8] sm:$0xf]
        %v2078 = vld [vmem:[#allocation10 + $0xc] sm:$0xf]
        %v2079 = vld [vmem:[%s13] sm:$0x1]
        %v2081 = vlaneseq
        %v2082 = vshrl.u32 %v2081, 7
        %v2083 = vsub.s32 0, %v2082
        %v2084 = vrot.slane %v2079, %v2083
        %v2090 = vunpack.c.l.b16 %v2075
        %v2091 = vunpack.c.l.b16 %v2076
        %v2092 = vunpack.c.l.b16 %v2077
        %v2093 = vunpack.c.l.b16 %v2078
        %v2094 = vpack.c.b16 %v2091, %v2090
        %v2095 = vpack.c.b16 %v2093, %v2092
        %v2099 = vsel %vm1176, %v2074, 0
        %2101 = vmatprep.subr.bf16.mxu0 0
        %2102 = vmatpush1.bf16.msra.mxu0 0
        %2103 = vmatprep.subr.bf16.mxu0 0
        %2104 = vmatpush1.bf16.msra.mxu0 0
        %2105 = vmatprep.subr.bf16.mxu0 0
        %2106 = vmatpush1.bf16.msra.mxu0 0
        %2107 = vmatprep.subr.bf16.mxu0 0
        %2108 = vmatpush1.bf16.msra.mxu0 0
        %2109 = vmatprep.subr.bf16.mxu0 0
        %2110 = vmatpush1.bf16.msra.mxu0 0
        %2111 = vmatprep.subr.bf16.mxu0 0
        %2112 = vmatpush1.bf16.msra.mxu0 0
        %2113 = vmatprep.subr.bf16.mxu0 0
        %2114 = vmatpush1.bf16.msra.mxu0 %v2095
        %2115 = vmatprep.subr.bf16.mxu0 0
        %2116 = vmatpush1.bf16.msra.mxu0 %v2094
        %2117 = vmatprep.subr.bf16.mxu0 0
        %2118 = vmatpush2.bf16.msra.mxu0 0
        %2119 = vmatprep.subr.bf16.mxu0 0
        %2120 = vmatpush2.bf16.msra.mxu0 0
        %2121 = vmatprep.subr.bf16.mxu0 0
        %2122 = vmatpush2.bf16.msra.mxu0 0
        %2123 = vmatprep.subr.bf16.mxu0 0
        %2124 = vmatpush2.bf16.msra.mxu0 0
        %2125 = vmatprep.subr.bf16.mxu0 0
        %2126 = vmatpush2.bf16.msra.mxu0 0
        %2127 = vmatprep.subr.bf16.mxu0 0
        %2128 = vmatpush2.bf16.msra.mxu0 0
        %2129 = vmatprep.subr.bf16.mxu0 0
        %2130 = vmatpush2.bf16.msra.mxu0 0
        %2131 = vmatprep.subr.bf16.mxu0 0
        %2132 = vmatpush2.bf16.msra.mxu0 0
        %2133 = vmatprep.mubr.bf16.mxu0 0
        %2134 = vmatmul.mubr.bf16.gmra.mxu0 %v2099
        %v2135 = vpop.f32.mrf.mxu0
        %v2136 = vadd.f32 %v2084, %v2135
        %v2137 = vpop.f32.mrf.mxu0
        %v2138 = vpop.f32.mrf.mxu0
        %v2139 = vpop.f32.mrf.mxu0
        %2140 = vdwg.mxu0
        %v2141 = vmul.f32 %v2136, 0.5
        %v2142 = vmul.f32 %v2136, 0.70710677
        %v2143 = verf.f32.pop %v2142
        %v2144 = vadd.f32 %v2143, 1.0
        %v2145 = vmul.f32 %v2141, %v2144
        %v2146 = vpack.c.bf16 %v2145, %v2145
        %v2147 = vld [vmem:[%s14] sm:$0xf]
        %v2148 = vld [vmem:[%s14 + $0x4] sm:$0xf]
        %v2149 = vld [vmem:[%s14 + $0x8] sm:$0xf]
        %v2150 = vld [vmem:[%s14 + $0xc] sm:$0xf]
        %v2151 = vld [vmem:[%s14 + $0x10] sm:$0xf]
        %v2152 = vld [vmem:[%s14 + $0x14] sm:$0xf]
        %v2153 = vld [vmem:[%s14 + $0x18] sm:$0xf]
        %v2154 = vld [vmem:[%s14 + $0x1c] sm:$0xf]
        %v2155 = vld [vmem:[%s15] sm:$0x1]
        %v2157 = vlaneseq
        %v2158 = vshrl.u32 %v2157, 7
        %v2159 = vsub.s32 0, %v2158
        %v2160 = vrot.slane %v2155, %v2159
        %v2170 = vunpack.c.l.b16 %v2147
        %v2171 = vunpack.c.l.b16 %v2148
        %v2172 = vunpack.c.l.b16 %v2149
        %v2173 = vunpack.c.l.b16 %v2150
        %v2174 = vunpack.c.l.b16 %v2151
        %v2175 = vunpack.c.l.b16 %v2152
        %v2176 = vunpack.c.l.b16 %v2153
        %v2177 = vunpack.c.l.b16 %v2154
        %v2178 = vpack.c.b16 %v2171, %v2170
        %v2179 = vpack.c.b16 %v2173, %v2172
        %v2180 = vpack.c.b16 %v2175, %v2174
        %v2181 = vpack.c.b16 %v2177, %v2176
        %vm2186 = vcmask 523264
        %v2188 = vsel %vm2186, %v2146, 0
        %2190 = vmatprep.subr.bf16.mxu0 0
        %2191 = vmatpush1.bf16.msra.mxu0 0
        %2192 = vmatprep.subr.bf16.mxu0 0
        %2193 = vmatpush1.bf16.msra.mxu0 0
        %2194 = vmatprep.subr.bf16.mxu0 0
        %2195 = vmatpush1.bf16.msra.mxu0 0
        %2196 = vmatprep.subr.bf16.mxu0 0
        %2197 = vmatpush1.bf16.msra.mxu0 0
        %2198 = vmatprep.subr.bf16.mxu0 0
        %2199 = vmatpush1.bf16.msra.mxu0 %v2181
        %2200 = vmatprep.subr.bf16.mxu0 0
        %2201 = vmatpush1.bf16.msra.mxu0 %v2180
        %2202 = vmatprep.subr.bf16.mxu0 0
        %2203 = vmatpush1.bf16.msra.mxu0 %v2179
        %2204 = vmatprep.subr.bf16.mxu0 0
        %2205 = vmatpush1.bf16.msra.mxu0 %v2178
        %2206 = vmatprep.subr.bf16.mxu0 0
        %2207 = vmatpush2.bf16.msra.mxu0 0
        %2208 = vmatprep.subr.bf16.mxu0 0
        %2209 = vmatpush2.bf16.msra.mxu0 0
        %2210 = vmatprep.subr.bf16.mxu0 0
        %2211 = vmatpush2.bf16.msra.mxu0 0
        %2212 = vmatprep.subr.bf16.mxu0 0
        %2213 = vmatpush2.bf16.msra.mxu0 0
        %2214 = vmatprep.subr.bf16.mxu0 0
        %2215 = vmatpush2.bf16.msra.mxu0 0
        %2216 = vmatprep.subr.bf16.mxu0 0
        %2217 = vmatpush2.bf16.msra.mxu0 0
        %2218 = vmatprep.subr.bf16.mxu0 0
        %2219 = vmatpush2.bf16.msra.mxu0 0
        %2220 = vmatprep.subr.bf16.mxu0 0
        %2221 = vmatpush2.bf16.msra.mxu0 0
        %2222 = vmatprep.mubr.bf16.mxu0 0
        %2223 = vmatmul.mubr.bf16.gmra.mxu0 %v2188
        %v2224 = vpop.f32.mrf.mxu0
        %v2225 = vadd.f32 %v2160, %v2224
        %v2226 = vpop.f32.mrf.mxu0
        %v2227 = vpop.f32.mrf.mxu0
        %v2228 = vpop.f32.mrf.mxu0
        %2229 = vdwg.mxu0
        %v2230 = vadd.f32 %v2073, %v2225
        %v2231 = vld [vmem:[%s16] sm:$0x1]
        %v2232 = vld [vmem:[%s17] sm:$0x1]
        %v2233 = vsel %vm1176, %v2230, 0.0
        %2234 = vadd.xlane.f32.xlu0 %v2233
        %v2235 = vpop.xlane.xlu0 %2234
        %v2236 = vmul.f32 %v2235, %v2049
        %v2237 = vsub.f32 %v2230, %v2236
        %v2238 = vmul.f32 %v2237, %v2237
        %v2239 = vsel %vm1176, %v2238, 0.0
        %2240 = vadd.xlane.f32.xlu0 %v2239
        %v2241 = vpop.xlane.xlu0 %2240
        %v2242 = vmul.f32 %v2241, %v2049
        %v2243 = vadd.f32 %v2242, 1e-05
        %v2244 = vrsqrt.pop %v2243
        %v2245 = vmul.f32 %v2237, %v2244
        %v2247 = vlaneseq
        %v2248 = vshrl.u32 %v2247, 7
        %v2249 = vsub.s32 0, %v2248
        %v2250 = vrot.slane %v2231, %v2249
        %v2252 = vmul.f32 %v2245, %v2250
        %v2254 = vlaneseq
        %v2255 = vshrl.u32 %v2254, 7
        %v2256 = vsub.s32 0, %v2255
        %v2257 = vrot.slane %v2232, %v2256
        %v2259 = vadd.f32 %v2252, %v2257
        %2260 = vst.msk [vmem:[%s691] sm:$0xff] %vm1176, %v2259
        %s2261 = sand.u32 %s452, 1
        %s2262 = scalar_lea.sflag [#allocation6], %s2261
        %s2263 = sand.u32 %s452, 1
        %s2264 = smul.addr %s2263, 8
        %s2265 = scalar_lea.vmem [#allocation12], %s2264
        %s2266 = sand.u32 %s480, 1
        %s2267 = scalar_lea.sflag [#allocation14], %s2266
        %s2268 = sand.u32 %s480, 1
        %s2269 = smul.addr %s2268, 16
        %s2270 = scalar_lea.vmem [#allocation13], %s2269
        // Predicated region
        $region113: #{tpu_custom_call.1} parent=91 // pred_check
          %p2271 = pneg %p462
        $region114: #{tpu_custom_call.1} parent=91 // pred_check_branch
          %2273 = sbr.rel (%p2271) target = $region116
        $region115: #{tpu_custom_call.1} parent=91 // pred_region
          %s2275 = ssub.s32 128, 128
          %2276 = vsyncadd %s2262, %s2275
          %s2277 = sadd.s32 %s47, %s46
          %s2278 = smul.addr %s2277, 128
          %s2279 = scalar_lea.hbm %s18, %s2278
          %s2281 = sshll.u32 %s2265, 4
          %s2282 = int_to_ptr.vmem [resolvable:$true] %s2281
          %2284 = dma.vmem_to_hbm [thread:$0]  %s2282, 128, %s2279, %s2262
        $region116: #{tpu_custom_call.1} parent=91 // pred_fallthru
          _
        // Predicated region
        $region117: #{tpu_custom_call.1} parent=91 // pred_check
          %p2285 = pneg %p490
        $region118: #{tpu_custom_call.1} parent=91 // pred_check_branch
          %2287 = sbr.rel (%p2285) target = $region120
        $region119: #{tpu_custom_call.1} parent=91 // pred_region
          %s2289 = ssub.s32 256, 256
          %2290 = vsyncadd %s2267, %s2289
          %s2291 = smul.addr %s46, 4
          %s2292 = sadd.s32 %s47, %s2291
          %s2293 = smul.addr %s2292, 64
          %s2294 = scalar_lea.hbm %s19, %s2293
          %s2295 = sshll.u32 %s2270, 4
          %s2296 = int_to_ptr.vmem [resolvable:$true] %s2295
          %2301 = dma.vmem_to_hbm [thread:$0]  %s2296, 256, %s2294, %s2267, 64, 64, 4
        $region120: #{tpu_custom_call.1} parent=91 // pred_fallthru
          _
      $region92: #{tpu_custom_call.1} parent=5 // pred_fallthru
        _
      %p2302 = scmp.le.s32.totalorder 2, %s37
      // Predicated region
      $region121: #{tpu_custom_call.1} parent=5 // pred_check
        %p2303 = pneg %p2302
      $region122: #{tpu_custom_call.1} parent=5 // pred_check_branch
        %2305 = sbr.rel (%p2303) target = $region124
      $region123: #{tpu_custom_call.1} parent=5 // pred_region
        %s2306 = ssub.s32 %s37, 2
        // Predicated region
        $region125: #{tpu_custom_call.1} parent=123 // pred_check
          %p2307 = pneg %p468
        $region126: #{tpu_custom_call.1} parent=123 // pred_check_branch
          %2309 = sbr.rel (%p2307) target = $region128
        $region127: #{tpu_custom_call.1} parent=123 // pred_region
          %s2310 = sand.u32 %s453, 1
          %s2311 = scalar_lea.sflag [#allocation6], %s2310
          %s2312 = sand.u32 %s453, 1
          %s2313 = smul.addr %s2312, 8
          %s2314 = scalar_lea.vmem [#allocation12], %s2313
          %2315 = dma.done %s2311, 128
        $region128: #{tpu_custom_call.1} parent=123 // pred_fallthru
          _
        // Predicated region
        $region129: #{tpu_custom_call.1} parent=123 // pred_check
          %p2316 = pneg %p496
        $region130: #{tpu_custom_call.1} parent=123 // pred_check_branch
          %2318 = sbr.rel (%p2316) target = $region132
        $region131: #{tpu_custom_call.1} parent=123 // pred_region
          %s2319 = sand.u32 %s481, 1
          %s2320 = scalar_lea.sflag [#allocation14], %s2319
          %s2321 = sand.u32 %s481, 1
          %s2322 = smul.addr %s2321, 16
          %s2323 = scalar_lea.vmem [#allocation13], %s2322
          %2324 = dma.done %s2320, 256
        $region132: #{tpu_custom_call.1} parent=123 // pred_fallthru
          _
      $region124: #{tpu_custom_call.1} parent=5 // pred_fallthru
        _
    $region6: #{tpu_custom_call.1} parent=1 // loop_footer
      %s41 = sadd.s32 1, %s37
    $region7: #{tpu_custom_call.1} parent=1 // loop_footer_branch
      %36 = sbr.rel target = $region3
    $region8: #{tpu_custom_call.1} parent=1 // loop_exit
      _
    %2325 = vsyncpa [#allocation5], 1
    %s2326 = scalar_lea.sflag [#allocation5], 1
    %2327 = vsyncpa %s2326, 1
    %2328 = vsyncpa [#allocation8], 1
    %2329 = vsyncpa [#allocation11], 1
    %2330 = vsyncpa [#allocation6], 1
    %s2331 = scalar_lea.sflag [#allocation6], 1
    %2332 = vsyncpa %s2331, 1
    %2333 = vsyncpa [#allocation14], 1
    %s2334 = scalar_lea.sflag [#allocation14], 1
    %2335 = vsyncpa %s2334, 1

// kernel: tpu_custom_call.1
$region0: #{tpu_custom_call.1}
  #allocation0 [shape = 'u32[]', space=smem, size = 0x4, offset = 0x4, fixed_abs, tag = 'smem constant byte address 0x4 - core index']
  #allocation1 [shape = 'u32[144,128]{1,0:T(1,128)}', space=vmem, size = 0x12000, scoped, tag = 'internal scratch']
  #allocation2 [shape = 'bf16[4,8,8]{2,1,0:T(8,128)(2,1)}', space=vmem, size = 0x2000, scoped, tag = 'scratch operand']
  #allocation3 [shape = 'bf16[4,8,8]{2,1,0:T(8,128)(2,1)}', space=vmem, size = 0x2000, scoped, tag = 'scratch operand']
  %s0 = inlined_call_operand.vmem [shape: f32[2,8,32], index: 0, kind: input, shape index: {}]
  %s1 = inlined_call_operand.hbm [shape: f32[2,1,8], index: 1, kind: input, shape index: {}]
  %s2 = inlined_call_operand.vmem [shape: bf16[32,32], index: 2, kind: input, shape index: {}]
  %s3 = inlined_call_operand.vmem [shape: f32[1,32], index: 3, kind: input, shape index: {}]
  %s4 = inlined_call_operand.vmem [shape: bf16[32,32], index: 4, kind: input, shape index: {}]
  %s5 = inlined_call_operand.vmem [shape: f32[1,32], index: 5, kind: input, shape index: {}]
  %s6 = inlined_call_operand.hbm [shape: bf16[32,32], index: 6, kind: input, shape index: {}]
  %s7 = inlined_call_operand.vmem [shape: f32[1,32], index: 7, kind: input, shape index: {}]
  %s8 = inlined_call_operand.hbm [shape: bf16[32,32], index: 8, kind: input, shape index: {}]
  %s9 = inlined_call_operand.vmem [shape: f32[1,32], index: 9, kind: input, shape index: {}]
  %s10 = inlined_call_operand.vmem [shape: f32[1,32], index: 10, kind: input, shape index: {}]
  %s11 = inlined_call_operand.vmem [shape: f32[1,32], index: 11, kind: input, shape index: {}]
  %s12 = inlined_call_operand.hbm [shape: bf16[32,64], index: 12, kind: input, shape index: {}]
  %s13 = inlined_call_operand.vmem [shape: f32[1,64], index: 13, kind: input, shape index: {}]
  %s14 = inlined_call_operand.vmem [shape: bf16[64,32], index: 14, kind: input, shape index: {}]
  %s15 = inlined_call_operand.vmem [shape: f32[1,32], index: 15, kind: input, shape index: {}]
  %s16 = inlined_call_operand.vmem [shape: f32[1,32], index: 16, kind: input, shape index: {}]
  %s17 = inlined_call_operand.vmem [shape: f32[1,32], index: 17, kind: input, shape index: {}]
  %s18 = inlined_call_operand.hbm [shape: f32[2,8,32], index: 18, kind: output, shape index: {0}]
  %s19 = inlined_call_operand.hbm [shape: bf16[2,4,8,8], index: 19, kind: output, shape index: {1}]
  %20 = xla_tuple %s18, %s19
  %s21 = sld [smem:[#allocation0]]
  $region133: #{tpu_custom_call.1} parent=0
    _
  %s23 = ssub.s32 1, %s21
  %s24 = scalar_select 0, %s23, %s21
  $region1: #{tpu_custom_call.1} parent=0
    #allocation4 [shape = 'u8[1024]{0}', space=vmem, size = 0x400, scoped, tag = 'input window, operand 1']
    #allocation5 [shape = 's32[2]{0}', space=sflag, size = 0x8, scoped, tag = 'scoped memory for tpu_custom_call.1']
    #allocation6 [shape = 's32[2]{0}', space=sflag, size = 0x8, scoped, tag = 'scoped memory for tpu_custom_call.1']
    #allocation7 [shape = 'u8[8192]{0}', space=vmem, size = 0x2000, scoped, tag = 'input window, operand 6, single buffered']
    #allocation8 [shape = 's32[1]{0}', space=sflag, size = 0x4, scoped, tag = 'scoped memory for tpu_custom_call.1']
    #allocation9 [shape = 'u8[8192]{0}', space=vmem, size = 0x2000, scoped, tag = 'input window, operand 8, single buffered']
    #allocation10 [shape = 'u8[8192]{0}', space=vmem, size = 0x2000, scoped, tag = 'input window, operand 12, single buffered']
    #allocation11 [shape = 's32[1]{0}', space=sflag, size = 0x4, scoped, tag = 'scoped memory for tpu_custom_call.1']
    #allocation12 [shape = 'u8[8192]{0}', space=vmem, size = 0x2000, scoped, tag = 'output window, operand 0']
    #allocation13 [shape = 'u8[16384]{0}', space=vmem, size = 0x4000, scoped, tag = 'output window, operand 1']
    #allocation14 [shape = 's32[2]{0}', space=sflag, size = 0x8, scoped, tag = 'scoped memory for tpu_custom_call.1']
    %25 = vsyncpa [#allocation5], 0
    %s26 = scalar_lea.sflag [#allocation5], 1
    %27 = vsyncpa %s26, 0
    %28 = vsyncpa [#allocation8], 0
    %29 = vsyncpa [#allocation11], 0
    %30 = vsyncpa [#allocation6], 0
    %s31 = scalar_lea.sflag [#allocation6], 1
    %32 = vsyncpa %s31, 0
    %33 = vsyncpa [#allocation14], 0
    %s34 = scalar_lea.sflag [#allocation14], 1
    %35 = vsyncpa %s34, 0
    loop: start=0, step=1, limit=4
    $region2: #{tpu_custom_call.1} parent=1 // loop_pre_header
      _
    $region3: #{tpu_custom_call.1} parent=1 // loop_header
      %s37 = sphi 0, %s41
      %p38 = scmp.ge.s32.totalorder %s37, 4
      %s44 = sphi 0, %s56
      %s45 = sphi 0, %s52
      %s46 = sphi 0, %s44
      %s47 = sphi 0, %s45
      %s48 = sphi 0, %s46
      %s49 = sphi 0, %s47
      %s59 = sphi 0, %s61
      %s62 = sphi 0, %s59
      %s63 = sphi 0, %s62
      %s79 = sphi 0, %s63
      %s85 = sphi 0, %s87
      %s88 = sphi 0, %s85
      %s89 = sphi 0, %s88
      %s105 = sphi 0, %s89
      %s109 = sphi 0, %s109
      %s111 = sphi 0, %s109
      %s112 = sphi 0, %s111
      %s126 = sphi 0, %s112
      %s130 = sphi 0, %s130
      %s132 = sphi 0, %s130
      %s133 = sphi 0, %s132
      %s147 = sphi 0, %s133
      %s151 = sphi 0, %s151
      %s153 = sphi 0, %s151
      %s154 = sphi 0, %s153
      %s168 = sphi 0, %s154
      %s172 = sphi 0, %s172
      %s174 = sphi 0, %s172
      %s175 = sphi 0, %s174
      %s189 = sphi 0, %s175
      %s193 = sphi 0, %s193
      %s195 = sphi 0, %s193
      %s196 = sphi 0, %s195
      %s210 = sphi 0, %s196
      %s214 = sphi 0, %s214
      %s216 = sphi 0, %s214
      %s217 = sphi 0, %s216
      %s231 = sphi 0, %s217
      %s235 = sphi 0, %s235
      %s237 = sphi 0, %s235
      %s238 = sphi 0, %s237
      %s252 = sphi 0, %s238
      %s256 = sphi 0, %s256
      %s258 = sphi 0, %s256
      %s259 = sphi 0, %s258
      %s273 = sphi 0, %s259
      %s277 = sphi 0, %s277
      %s279 = sphi 0, %s277
      %s280 = sphi 0, %s279
      %s294 = sphi 0, %s280
      %s298 = sphi 0, %s298
      %s300 = sphi 0, %s298
      %s301 = sphi 0, %s300
      %s315 = sphi 0, %s301
      %s319 = sphi 0, %s319
      %s321 = sphi 0, %s319
      %s322 = sphi 0, %s321
      %s336 = sphi 0, %s322
      %s340 = sphi 0, %s340
      %s342 = sphi 0, %s340
      %s343 = sphi 0, %s342
      %s357 = sphi 0, %s343
      %s361 = sphi 0, %s361
      %s363 = sphi 0, %s361
      %s364 = sphi 0, %s363
      %s378 = sphi 0, %s364
      %s382 = sphi 0, %s382
      %s384 = sphi 0, %s382
      %s385 = sphi 0, %s384
      %s399 = sphi 0, %s385
      %s403 = sphi 0, %s403
      %s405 = sphi 0, %s403
      %s406 = sphi 0, %s405
      %s420 = sphi 0, %s406
      %s424 = sphi 0, %s424
      %s426 = sphi 0, %s424
      %s427 = sphi 0, %s426
      %s441 = sphi 0, %s427
      %s449 = sphi 0, %s451
      %s452 = sphi 0, %s449
      %s453 = sphi 0, %s452
      %s469 = sphi 0, %s453
      %s477 = sphi 0, %s479
      %s480 = sphi 0, %s477
      %s481 = sphi 0, %s480
      %s497 = sphi 0, %s481
    $region4: #{tpu_custom_call.1} parent=1 // loop_header_branch
      %40 = sbr.rel (%p38) target = $region8
    $region5: #{tpu_custom_call.1} parent=1 // loop_body
      %s42 = ssub.s32 %s37, 1
      %s43 = ssub.s32 %s37, 2
      %s50 = sadd.s32 1, %s45
      %p51 = scmp.ge.s32.totalorder %s50, 1
      %s52 = scalar_select %p51, 0, %s50
      %s53 = sadd.s32 1, %s44
      %s54 = scalar_select %p51, %s53, %s44
      %p55 = scmp.ge.s32.totalorder %s54, 2
      %s56 = scalar_select %p55, 0, %s54
      %s57 = ssub.s32 %s44, %s56
      %p58 = scmp.eq.s32.totalorder %s57, 0
      %s60 = sadd.s32 %s59, 1
      %s61 = scalar_select %p58, %s59, %s60
      %p64 = pneg %p58
      %p65 = scmp.eq.s32.totalorder %s37, 1
      %p66 = por %p64, %p65
      %p67 = scmp.ne.s32.totalorder %s59, %s62
      %p68 = scmp.eq.s32.totalorder %s37, 0
      %p69 = por %p67, %p68
      %p70 = scmp.ne.s32.totalorder %s59, %s62
      %p71 = scmp.eq.s32.totalorder %s42, 1
      %p72 = por %p70, %p71
      %p73 = scmp.ne.s32.totalorder %s62, %s63
      %p74 = scmp.eq.s32.totalorder %s42, 0
      %p75 = por %p73, %p74
      %p76 = scmp.ne.s32.totalorder %s62, %s63
      %p77 = scmp.eq.s32.totalorder %s43, 1
      %p78 = por %p76, %p77
      %p80 = scmp.ne.s32.totalorder %s63, %s79
      %p81 = scmp.eq.s32.totalorder %s43, 0
      %p82 = por %p80, %p81
      %s83 = ssub.s32 %s44, %s56
      %p84 = scmp.eq.s32.totalorder %s83, 0
      %s86 = sadd.s32 %s85, 1
      %s87 = scalar_select %p84, %s85, %s86
      %p90 = pneg %p84
      %p91 = scmp.eq.s32.totalorder %s37, 1
      %p92 = por %p90, %p91
      %p93 = scmp.ne.s32.totalorder %s85, %s88
      %p94 = scmp.eq.s32.totalorder %s37, 0
      %p95 = por %p93, %p94
      %p96 = scmp.ne.s32.totalorder %s85, %s88
      %p97 = scmp.eq.s32.totalorder %s42, 1
      %p98 = por %p96, %p97
      %p99 = scmp.ne.s32.totalorder %s88, %s89
      %p100 = scmp.eq.s32.totalorder %s42, 0
      %p101 = por %p99, %p100
      %p102 = scmp.ne.s32.totalorder %s88, %s89
      %p103 = scmp.eq.s32.totalorder %s43, 1
      %p104 = por %p102, %p103
      %p106 = scmp.ne.s32.totalorder %s89, %s105
      %p107 = scmp.eq.s32.totalorder %s43, 0
      %p108 = por %p106, %p107
      %s110 = sadd.s32 %s109, 1
      %p113 = scmp.eq.s32.totalorder %s37, 1
      %p114 = scmp.ne.s32.totalorder %s109, %s111
      %p115 = scmp.eq.s32.totalorder %s37, 0
      %p116 = por %p114, %p115
      %p117 = scmp.ne.s32.totalorder %s109, %s111
      %p118 = scmp.eq.s32.totalorder %s42, 1
      %p119 = por %p117, %p118
      %p120 = scmp.ne.s32.totalorder %s111, %s112
      %p121 = scmp.eq.s32.totalorder %s42, 0
      %p122 = por %p120, %p121
      %p123 = scmp.ne.s32.totalorder %s111, %s112
      %p124 = scmp.eq.s32.totalorder %s43, 1
      %p125 = por %p123, %p124
      %p127 = scmp.ne.s32.totalorder %s112, %s126
      %p128 = scmp.eq.s32.totalorder %s43, 0
      %p129 = por %p127, %p128
      %s131 = sadd.s32 %s130, 1
      %p134 = scmp.eq.s32.totalorder %s37, 1
      %p135 = scmp.ne.s32.totalorder %s130, %s132
      %p136 = scmp.eq.s32.totalorder %s37, 0
      %p137 = por %p135, %p136
      %p138 = scmp.ne.s32.totalorder %s130, %s132
      %p139 = scmp.eq.s32.totalorder %s42, 1
      %p140 = por %p138, %p139
      %p141 = scmp.ne.s32.totalorder %s132, %s133
      %p142 = scmp.eq.s32.totalorder %s42, 0
      %p143 = por %p141, %p142
      %p144 = scmp.ne.s32.totalorder %s132, %s133
      %p145 = scmp.eq.s32.totalorder %s43, 1
      %p146 = por %p144, %p145
      %p148 = scmp.ne.s32.totalorder %s133, %s147
      %p149 = scmp.eq.s32.totalorder %s43, 0
      %p150 = por %p148, %p149
      %s152 = sadd.s32 %s151, 1
      %p155 = scmp.eq.s32.totalorder %s37, 1
      %p156 = scmp.ne.s32.totalorder %s151, %s153
      %p157 = scmp.eq.s32.totalorder %s37, 0
      %p158 = por %p156, %p157
      %p159 = scmp.ne.s32.totalorder %s151, %s153
      %p160 = scmp.eq.s32.totalorder %s42, 1
      %p161 = por %p159, %p160
      %p162 = scmp.ne.s32.totalorder %s153, %s154
      %p163 = scmp.eq.s32.totalorder %s42, 0
      %p164 = por %p162, %p163
      %p165 = scmp.ne.s32.totalorder %s153, %s154
      %p166 = scmp.eq.s32.totalorder %s43, 1
      %p167 = por %p165, %p166
      %p169 = scmp.ne.s32.totalorder %s154, %s168
      %p170 = scmp.eq.s32.totalorder %s43, 0
      %p171 = por %p169, %p170
      %s173 = sadd.s32 %s172, 1
      %p176 = scmp.eq.s32.totalorder %s37, 1
      %p177 = scmp.ne.s32.totalorder %s172, %s174
      %p178 = scmp.eq.s32.totalorder %s37, 0
      %p179 = por %p177, %p178
      %p180 = scmp.ne.s32.totalorder %s172, %s174
      %p181 = scmp.eq.s32.totalorder %s42, 1
      %p182 = por %p180, %p181
      %p183 = scmp.ne.s32.totalorder %s174, %s175
      %p184 = scmp.eq.s32.totalorder %s42, 0
      %p185 = por %p183, %p184
      %p186 = scmp.ne.s32.totalorder %s174, %s175
      %p187 = scmp.eq.s32.totalorder %s43, 1
      %p188 = por %p186, %p187
      %p190 = scmp.ne.s32.totalorder %s175, %s189
      %p191 = scmp.eq.s32.totalorder %s43, 0
      %p192 = por %p190, %p191
      %s194 = sadd.s32 %s193, 1
      %p197 = scmp.eq.s32.totalorder %s37, 1
      %p198 = scmp.ne.s32.totalorder %s193, %s195
      %p199 = scmp.eq.s32.totalorder %s37, 0
      %p200 = por %p198, %p199
      %p201 = scmp.ne.s32.totalorder %s193, %s195
      %p202 = scmp.eq.s32.totalorder %s42, 1
      %p203 = por %p201, %p202
      %p204 = scmp.ne.s32.totalorder %s195, %s196
      %p205 = scmp.eq.s32.totalorder %s42, 0
      %p206 = por %p204, %p205
      %p207 = scmp.ne.s32.totalorder %s195, %s196
      %p208 = scmp.eq.s32.totalorder %s43, 1
      %p209 = por %p207, %p208
      %p211 = scmp.ne.s32.totalorder %s196, %s210
      %p212 = scmp.eq.s32.totalorder %s43, 0
      %p213 = por %p211, %p212
      %s215 = sadd.s32 %s214, 1
      %p218 = scmp.eq.s32.totalorder %s37, 1
      %p219 = scmp.ne.s32.totalorder %s214, %s216
      %p220 = scmp.eq.s32.totalorder %s37, 0
      %p221 = por %p219, %p220
      %p222 = scmp.ne.s32.totalorder %s214, %s216
      %p223 = scmp.eq.s32.totalorder %s42, 1
      %p224 = por %p222, %p223
      %p225 = scmp.ne.s32.totalorder %s216, %s217
      %p226 = scmp.eq.s32.totalorder %s42, 0
      %p227 = por %p225, %p226
      %p228 = scmp.ne.s32.totalorder %s216, %s217
      %p229 = scmp.eq.s32.totalorder %s43, 1
      %p230 = por %p228, %p229
      %p232 = scmp.ne.s32.totalorder %s217, %s231
      %p233 = scmp.eq.s32.totalorder %s43, 0
      %p234 = por %p232, %p233
      %s236 = sadd.s32 %s235, 1
      %p239 = scmp.eq.s32.totalorder %s37, 1
      %p240 = scmp.ne.s32.totalorder %s235, %s237
      %p241 = scmp.eq.s32.totalorder %s37, 0
      %p242 = por %p240, %p241
      %p243 = scmp.ne.s32.totalorder %s235, %s237
      %p244 = scmp.eq.s32.totalorder %s42, 1
      %p245 = por %p243, %p244
      %p246 = scmp.ne.s32.totalorder %s237, %s238
      %p247 = scmp.eq.s32.totalorder %s42, 0
      %p248 = por %p246, %p247
      %p249 = scmp.ne.s32.totalorder %s237, %s238
      %p250 = scmp.eq.s32.totalorder %s43, 1
      %p251 = por %p249, %p250
      %p253 = scmp.ne.s32.totalorder %s238, %s252
      %p254 = scmp.eq.s32.totalorder %s43, 0
      %p255 = por %p253, %p254
      %s257 = sadd.s32 %s256, 1
      %p260 = scmp.eq.s32.totalorder %s37, 1
      %p261 = scmp.ne.s32.totalorder %s256, %s258
      %p262 = scmp.eq.s32.totalorder %s37, 0
      %p263 = por %p261, %p262
      %p264 = scmp.ne.s32.totalorder %s256, %s258
      %p265 = scmp.eq.s32.totalorder %s42, 1
      %p266 = por %p264, %p265
      %p267 = scmp.ne.s32.totalorder %s258, %s259
      %p268 = scmp.eq.s32.totalorder %s42, 0
      %p269 = por %p267, %p268
      %p270 = scmp.ne.s32.totalorder %s258, %s259
      %p271 = scmp.eq.s32.totalorder %s43, 1
      %p272 = por %p270, %p271
      %p274 = scmp.ne.s32.totalorder %s259, %s273
      %p275 = scmp.eq.s32.totalorder %s43, 0
      %p276 = por %p274, %p275
      %s278 = sadd.s32 %s277, 1
      %p281 = scmp.eq.s32.totalorder %s37, 1
      %p282 = scmp.ne.s32.totalorder %s277, %s279
      %p283 = scmp.eq.s32.totalorder %s37, 0
      %p284 = por %p282, %p283
      %p285 = scmp.ne.s32.totalorder %s277, %s279
      %p286 = scmp.eq.s32.totalorder %s42, 1
      %p287 = por %p285, %p286
      %p288 = scmp.ne.s32.totalorder %s279, %s280
      %p289 = scmp.eq.s32.totalorder %s42, 0
      %p290 = por %p288, %p289
      %p291 = scmp.ne.s32.totalorder %s279, %s280
      %p292 = scmp.eq.s32.totalorder %s43, 1
      %p293 = por %p291, %p292
      %p295 = scmp.ne.s32.totalorder %s280, %s294
      %p296 = scmp.eq.s32.totalorder %s43, 0
      %p297 = por %p295, %p296
      %s299 = sadd.s32 %s298, 1
      %p302 = scmp.eq.s32.totalorder %s37, 1
      %p303 = scmp.ne.s32.totalorder %s298, %s300
      %p304 = scmp.eq.s32.totalorder %s37, 0
      %p305 = por %p303, %p304
      %p306 = scmp.ne.s32.totalorder %s298, %s300
      %p307 = scmp.eq.s32.totalorder %s42, 1
      %p308 = por %p306, %p307
      %p309 = scmp.ne.s32.totalorder %s300, %s301
      %p310 = scmp.eq.s32.totalorder %s42, 0
      %p311 = por %p309, %p310
      %p312 = scmp.ne.s32.totalorder %s300, %s301
      %p313 = scmp.eq.s32.totalorder %s43, 1
      %p314 = por %p312, %p313
      %p316 = scmp.ne.s32.totalorder %s301, %s315
      %p317 = scmp.eq.s32.totalorder %s43, 0
      %p318 = por %p316, %p317
      %s320 = sadd.s32 %s319, 1
      %p323 = scmp.eq.s32.totalorder %s37, 1
      %p324 = scmp.ne.s32.totalorder %s319, %s321
      %p325 = scmp.eq.s32.totalorder %s37, 0
      %p326 = por %p324, %p325
      %p327 = scmp.ne.s32.totalorder %s319, %s321
      %p328 = scmp.eq.s32.totalorder %s42, 1
      %p329 = por %p327, %p328
      %p330 = scmp.ne.s32.totalorder %s321, %s322
      %p331 = scmp.eq.s32.totalorder %s42, 0
      %p332 = por %p330, %p331
      %p333 = scmp.ne.s32.totalorder %s321, %s322
      %p334 = scmp.eq.s32.totalorder %s43, 1
      %p335 = por %p333, %p334
      %p337 = scmp.ne.s32.totalorder %s322, %s336
      %p338 = scmp.eq.s32.totalorder %s43, 0
      %p339 = por %p337, %p338
      %s341 = sadd.s32 %s340, 1
      %p344 = scmp.eq.s32.totalorder %s37, 1
      %p345 = scmp.ne.s32.totalorder %s340, %s342
      %p346 = scmp.eq.s32.totalorder %s37, 0
      %p347 = por %p345, %p346
      %p348 = scmp.ne.s32.totalorder %s340, %s342
      %p349 = scmp.eq.s32.totalorder %s42, 1
      %p350 = por %p348, %p349
      %p351 = scmp.ne.s32.totalorder %s342, %s343
      %p352 = scmp.eq.s32.totalorder %s42, 0
      %p353 = por %p351, %p352
      %p354 = scmp.ne.s32.totalorder %s342, %s343
      %p355 = scmp.eq.s32.totalorder %s43, 1
      %p356 = por %p354, %p355
      %p358 = scmp.ne.s32.totalorder %s343, %s357
      %p359 = scmp.eq.s32.totalorder %s43, 0
      %p360 = por %p358, %p359
      %s362 = sadd.s32 %s361, 1
      %p365 = scmp.eq.s32.totalorder %s37, 1
      %p366 = scmp.ne.s32.totalorder %s361, %s363
      %p367 = scmp.eq.s32.totalorder %s37, 0
      %p368 = por %p366, %p367
      %p369 = scmp.ne.s32.totalorder %s361, %s363
      %p370 = scmp.eq.s32.totalorder %s42, 1
      %p371 = por %p369, %p370
      %p372 = scmp.ne.s32.totalorder %s363, %s364
      %p373 = scmp.eq.s32.totalorder %s42, 0
      %p374 = por %p372, %p373
      %p375 = scmp.ne.s32.totalorder %s363, %s364
      %p376 = scmp.eq.s32.totalorder %s43, 1
      %p377 = por %p375, %p376
      %p379 = scmp.ne.s32.totalorder %s364, %s378
      %p380 = scmp.eq.s32.totalorder %s43, 0
      %p381 = por %p379, %p380
      %s383 = sadd.s32 %s382, 1
      %p386 = scmp.eq.s32.totalorder %s37, 1
      %p387 = scmp.ne.s32.totalorder %s382, %s384
      %p388 = scmp.eq.s32.totalorder %s37, 0
      %p389 = por %p387, %p388
      %p390 = scmp.ne.s32.totalorder %s382, %s384
      %p391 = scmp.eq.s32.totalorder %s42, 1
      %p392 = por %p390, %p391
      %p393 = scmp.ne.s32.totalorder %s384, %s385
      %p394 = scmp.eq.s32.totalorder %s42, 0
      %p395 = por %p393, %p394
      %p396 = scmp.ne.s32.totalorder %s384, %s385
      %p397 = scmp.eq.s32.totalorder %s43, 1
      %p398 = por %p396, %p397
      %p400 = scmp.ne.s32.totalorder %s385, %s399
      %p401 = scmp.eq.s32.totalorder %s43, 0
      %p402 = por %p400, %p401
      %s404 = sadd.s32 %s403, 1
      %p407 = scmp.eq.s32.totalorder %s37, 1
      %p408 = scmp.ne.s32.totalorder %s403, %s405
      %p409 = scmp.eq.s32.totalorder %s37, 0
      %p410 = por %p408, %p409
      %p411 = scmp.ne.s32.totalorder %s403, %s405
      %p412 = scmp.eq.s32.totalorder %s42, 1
      %p413 = por %p411, %p412
      %p414 = scmp.ne.s32.totalorder %s405, %s406
      %p415 = scmp.eq.s32.totalorder %s42, 0
      %p416 = por %p414, %p415
      %p417 = scmp.ne.s32.totalorder %s405, %s406
      %p418 = scmp.eq.s32.totalorder %s43, 1
      %p419 = por %p417, %p418
      %p421 = scmp.ne.s32.totalorder %s406, %s420
      %p422 = scmp.eq.s32.totalorder %s43, 0
      %p423 = por %p421, %p422
      %s425 = sadd.s32 %s424, 1
      %p428 = scmp.eq.s32.totalorder %s37, 1
      %p429 = scmp.ne.s32.totalorder %s424, %s426
      %p430 = scmp.eq.s32.totalorder %s37, 0
      %p431 = por %p429, %p430
      %p432 = scmp.ne.s32.totalorder %s424, %s426
      %p433 = scmp.eq.s32.totalorder %s42, 1
      %p434 = por %p432, %p433
      %p435 = scmp.ne.s32.totalorder %s426, %s427
      %p436 = scmp.eq.s32.totalorder %s42, 0
      %p437 = por %p435, %p436
      %p438 = scmp.ne.s32.totalorder %s426, %s427
      %p439 = scmp.eq.s32.totalorder %s43, 1
      %p440 = por %p438, %p439
      %p442 = scmp.ne.s32.totalorder %s427, %s441
      %p443 = scmp.eq.s32.totalorder %s43, 0
      %p444 = por %p442, %p443
      %s445 = ssub.s32 %s44, %s56
      %s446 = ssub.s32 %s45, %s52
      %s447 = sor.u32 %s445, %s446
      %p448 = scmp.eq.s32.totalorder %s447, 0
      %s450 = sadd.s32 %s449, 1
      %s451 = scalar_select %p448, %s449, %s450
      %p454 = pneg %p448
      %p455 = scmp.eq.s32.totalorder %s37, 1
      %p456 = por %p454, %p455
      %p457 = scmp.ne.s32.totalorder %s449, %s452
      %p458 = scmp.eq.s32.totalorder %s37, 0
      %p459 = por %p457, %p458
      %p460 = scmp.ne.s32.totalorder %s449, %s452
      %p461 = scmp.eq.s32.totalorder %s42, 1
      %p462 = por %p460, %p461
      %p463 = scmp.ne.s32.totalorder %s452, %s453
      %p464 = scmp.eq.s32.totalorder %s42, 0
      %p465 = por %p463, %p464
      %p466 = scmp.ne.s32.totalorder %s452, %s453
      %p467 = scmp.eq.s32.totalorder %s43, 1
      %p468 = por %p466, %p467
      %p470 = scmp.ne.s32.totalorder %s453, %s469
      %p471 = scmp.eq.s32.totalorder %s43, 0
      %p472 = por %p470, %p471
      %s473 = ssub.s32 %s44, %s56
      %s474 = ssub.s32 %s45, %s52
      %s475 = sor.u32 %s473, %s474
      %p476 = scmp.eq.s32.totalorder %s475, 0
      %s478 = sadd.s32 %s477, 1
      %s479 = scalar_select %p476, %s477, %s478
      %p482 = pneg %p476
      %p483 = scmp.eq.s32.totalorder %s37, 1
      %p484 = por %p482, %p483
      %p485 = scmp.ne.s32.totalorder %s477, %s480
      %p486 = scmp.eq.s32.totalorder %s37, 0
      %p487 = por %p485, %p486
      %p488 = scmp.ne.s32.totalorder %s477, %s480
      %p489 = scmp.eq.s32.totalorder %s42, 1
      %p490 = por %p488, %p489
      %p491 = scmp.ne.s32.totalorder %s480, %s481
      %p492 = scmp.eq.s32.totalorder %s42, 0
      %p493 = por %p491, %p492
      %p494 = scmp.ne.s32.totalorder %s480, %s481
      %p495 = scmp.eq.s32.totalorder %s43, 1
      %p496 = por %p494, %p495
      %p498 = scmp.ne.s32.totalorder %s481, %s497
      %p499 = scmp.eq.s32.totalorder %s43, 0
      %p500 = por %p498, %p499
      %p501 = scmp.le.s32.totalorder 1, %s37
      %p502 = scmp.lt.s32.totalorder %s37, 3
      %p503 = pnand %p501, %p502
      %p504 = pneg %p503
      // Predicated region
      $region9: #{tpu_custom_call.1} parent=5 // pred_check
        _
      $region10: #{tpu_custom_call.1} parent=5 // pred_check_branch
        %506 = sbr.rel (%p503) target = $region12
      $region11: #{tpu_custom_call.1} parent=5 // pred_region
        %s507 = ssub.s32 %s37, 1
        // Predicated region
        $region13: #{tpu_custom_call.1} parent=11 // pred_check
          %p508 = pneg %p122
        $region14: #{tpu_custom_call.1} parent=11 // pred_check_branch
          %510 = sbr.rel (%p508) target = $region16
        $region15: #{tpu_custom_call.1} parent=11 // pred_region
          _
        $region16: #{tpu_custom_call.1} parent=11 // pred_fallthru
          _
        // Predicated region
        $region17: #{tpu_custom_call.1} parent=11 // pred_check
          %p511 = pneg %p143
        $region18: #{tpu_custom_call.1} parent=11 // pred_check_branch
          %513 = sbr.rel (%p511) target = $region20
        $region19: #{tpu_custom_call.1} parent=11 // pred_region
          _
        $region20: #{tpu_custom_call.1} parent=11 // pred_fallthru
          _
        // Predicated region
        $region21: #{tpu_custom_call.1} parent=11 // pred_check
          %p514 = pneg %p164
        $region22: #{tpu_custom_call.1} parent=11 // pred_check_branch
          %516 = sbr.rel (%p514) target = $region24
        $region23: #{tpu_custom_call.1} parent=11 // pred_region
          _
        $region24: #{tpu_custom_call.1} parent=11 // pred_fallthru
          _
        // Predicated region
        $region25: #{tpu_custom_call.1} parent=11 // pred_check
          %p517 = pneg %p185
        $region26: #{tpu_custom_call.1} parent=11 // pred_check_branch
          %519 = sbr.rel (%p517) target = $region28
        $region27: #{tpu_custom_call.1} parent=11 // pred_region
          _
        $region28: #{tpu_custom_call.1} parent=11 // pred_fallthru
          _
        // Predicated region
        $region29: #{tpu_custom_call.1} parent=11 // pred_check
          %p520 = pneg %p206
        $region30: #{tpu_custom_call.1} parent=11 // pred_check_branch
          %522 = sbr.rel (%p520) target = $region32
        $region31: #{tpu_custom_call.1} parent=11 // pred_region
          %s524 = ssub.s32 256, 256
          %525 = vsyncadd [#allocation8], %s524
          %s526 = sshll.u32 [#allocation7], 4
          %s527 = int_to_ptr.vmem [resolvable:$true] %s526
          %532 = dma.hbm_to_vmem [thread:$0]  %s6, 256, %s527, [#allocation8], 64, 64, 4
        $region32: #{tpu_custom_call.1} parent=11 // pred_fallthru
          _
        // Predicated region
        $region33: #{tpu_custom_call.1} parent=11 // pred_check
          %p533 = pneg %p227
        $region34: #{tpu_custom_call.1} parent=11 // pred_check_branch
          %535 = sbr.rel (%p533) target = $region36
        $region35: #{tpu_custom_call.1} parent=11 // pred_region
          _
        $region36: #{tpu_custom_call.1} parent=11 // pred_fallthru
          _
        // Predicated region
        $region37: #{tpu_custom_call.1} parent=11 // pred_check
          %p536 = pneg %p248
        $region38: #{tpu_custom_call.1} parent=11 // pred_check_branch
          %538 = sbr.rel (%p536) target = $region40
        $region39: #{tpu_custom_call.1} parent=11 // pred_region
          %s540 = ssub.s32 256, 256
          %541 = vsyncadd [#allocation8], %s540
          %s542 = sshll.u32 [#allocation9], 4
          %s543 = int_to_ptr.vmem [resolvable:$true] %s542
          %548 = dma.hbm_to_vmem [thread:$0]  %s8, 256, %s543, [#allocation8], 64, 64, 4
        $region40: #{tpu_custom_call.1} parent=11 // pred_fallthru
          _
        // Predicated region
        $region41: #{tpu_custom_call.1} parent=11 // pred_check
          %p549 = pneg %p269
        $region42: #{tpu_custom_call.1} parent=11 // pred_check_branch
          %551 = sbr.rel (%p549) target = $region44
        $region43: #{tpu_custom_call.1} parent=11 // pred_region
          _
        $region44: #{tpu_custom_call.1} parent=11 // pred_fallthru
          _
        // Predicated region
        $region45: #{tpu_custom_call.1} parent=11 // pred_check
          %p552 = pneg %p290
        $region46: #{tpu_custom_call.1} parent=11 // pred_check_branch
          %554 = sbr.rel (%p552) target = $region48
        $region47: #{tpu_custom_call.1} parent=11 // pred_region
          _
        $region48: #{tpu_custom_call.1} parent=11 // pred_fallthru
          _
        // Predicated region
        $region49: #{tpu_custom_call.1} parent=11 // pred_check
          %p555 = pneg %p311
        $region50: #{tpu_custom_call.1} parent=11 // pred_check_branch
          %557 = sbr.rel (%p555) target = $region52
        $region51: #{tpu_custom_call.1} parent=11 // pred_region
          _
        $region52: #{tpu_custom_call.1} parent=11 // pred_fallthru
          _
        // Predicated region
        $region53: #{tpu_custom_call.1} parent=11 // pred_check
          %p558 = pneg %p332
        $region54: #{tpu_custom_call.1} parent=11 // pred_check_branch
          %560 = sbr.rel (%p558) target = $region56
        $region55: #{tpu_custom_call.1} parent=11 // pred_region
          %s562 = ssub.s32 256, 256
          %563 = vsyncadd [#allocation11], %s562
          %s564 = sshll.u32 [#allocation10], 4
          %s565 = int_to_ptr.vmem [resolvable:$true] %s564
          %570 = dma.hbm_to_vmem [thread:$0]  %s12, 256, %s565, [#allocation11], 64, 64, 4
        $region56: #{tpu_custom_call.1} parent=11 // pred_fallthru
          _
        // Predicated region
        $region57: #{tpu_custom_call.1} parent=11 // pred_check
          %p571 = pneg %p353
        $region58: #{tpu_custom_call.1} parent=11 // pred_check_branch
          %573 = sbr.rel (%p571) target = $region60
        $region59: #{tpu_custom_call.1} parent=11 // pred_region
          _
        $region60: #{tpu_custom_call.1} parent=11 // pred_fallthru
          _
        // Predicated region
        $region61: #{tpu_custom_call.1} parent=11 // pred_check
          %p574 = pneg %p374
        $region62: #{tpu_custom_call.1} parent=11 // pred_check_branch
          %576 = sbr.rel (%p574) target = $region64
        $region63: #{tpu_custom_call.1} parent=11 // pred_region
          _
        $region64: #{tpu_custom_call.1} parent=11 // pred_fallthru
          _
        // Predicated region
        $region65: #{tpu_custom_call.1} parent=11 // pred_check
          %p577 = pneg %p395
        $region66: #{tpu_custom_call.1} parent=11 // pred_check_branch
          %579 = sbr.rel (%p577) target = $region68
        $region67: #{tpu_custom_call.1} parent=11 // pred_region
          _
        $region68: #{tpu_custom_call.1} parent=11 // pred_fallthru
          _
        // Predicated region
        $region69: #{tpu_custom_call.1} parent=11 // pred_check
          %p580 = pneg %p416
        $region70: #{tpu_custom_call.1} parent=11 // pred_check_branch
          %582 = sbr.rel (%p580) target = $region72
        $region71: #{tpu_custom_call.1} parent=11 // pred_region
          _
        $region72: #{tpu_custom_call.1} parent=11 // pred_fallthru
          _
        // Predicated region
        $region73: #{tpu_custom_call.1} parent=11 // pred_check
          %p583 = pneg %p437
        $region74: #{tpu_custom_call.1} parent=11 // pred_check_branch
          %585 = sbr.rel (%p583) target = $region76
        $region75: #{tpu_custom_call.1} parent=11 // pred_region
          _
        $region76: #{tpu_custom_call.1} parent=11 // pred_fallthru
          _
      $region12: #{tpu_custom_call.1} parent=5 // pred_fallthru
        _
      %p586 = scmp.lt.s32.totalorder %s37, 2
      // Predicated region
      $region77: #{tpu_custom_call.1} parent=5 // pred_check
        %p587 = pneg %p586
      $region78: #{tpu_custom_call.1} parent=5 // pred_check_branch
        %589 = sbr.rel (%p587) target = $region80
      $region79: #{tpu_custom_call.1} parent=5 // pred_region
        // Predicated region
        $region81: #{tpu_custom_call.1} parent=79 // pred_check
          %p590 = pneg %p69
        $region82: #{tpu_custom_call.1} parent=79 // pred_check_branch
          %592 = sbr.rel (%p590) target = $region84
        $region83: #{tpu_custom_call.1} parent=79 // pred_region
          %p593 = scmp.lt.s32.totalorder %s44, 1
          %s594 = scalar_select %p593, %s44, 1
          %s595 = smul.addr %s594, 8
          %s596 = scalar_lea.vmem %s0, %s595
        $region84: #{tpu_custom_call.1} parent=79 // pred_fallthru
          _
        // Predicated region
        $region85: #{tpu_custom_call.1} parent=79 // pred_check
          %p597 = pneg %p95
        $region86: #{tpu_custom_call.1} parent=79 // pred_check_branch
          %599 = sbr.rel (%p597) target = $region88
        $region87: #{tpu_custom_call.1} parent=79 // pred_region
          %s600 = sand.u32 %s85, 1
          %s601 = scalar_lea.sflag [#allocation5], %s600
          %s602 = sand.u32 %s85, 1
          %s603 = scalar_lea.vmem [#allocation4], %s602
          %s605 = ssub.s32 16, 16
          %606 = vsyncadd %s601, %s605
          %s607 = smul.addr %s44, 16
          %s608 = scalar_lea.hbm %s1, %s607
          %s610 = sshll.u32 %s603, 4
          %s611 = int_to_ptr.vmem [resolvable:$true] %s610
          %613 = dma.hbm_to_vmem [thread:$0]  %s608, 16, %s611, %s601
        $region88: #{tpu_custom_call.1} parent=79 // pred_fallthru
          _
      $region80: #{tpu_custom_call.1} parent=5 // pred_fallthru
        _
      %p614 = scmp.le.s32.totalorder 1, %s37
      %p615 = scmp.lt.s32.totalorder %s37, 3
      %p616 = pnand %p614, %p615
      %p617 = pneg %p616
      // Predicated region
      $region89: #{tpu_custom_call.1} parent=5 // pred_check
        _
      $region90: #{tpu_custom_call.1} parent=5 // pred_check_branch
        %619 = sbr.rel (%p616) target = $region92
      $region91: #{tpu_custom_call.1} parent=5 // pred_region
        %s620 = ssub.s32 %s37, 1
        %s621 = sand.u32 %s88, 1
        %s622 = scalar_lea.sflag [#allocation5], %s621
        %s623 = sand.u32 %s88, 1
        %s624 = scalar_lea.vmem [#allocation4], %s623
        // Predicated region
        $region93: #{tpu_custom_call.1} parent=91 // pred_check
          %p625 = pneg %p101
        $region94: #{tpu_custom_call.1} parent=91 // pred_check_branch
          %627 = sbr.rel (%p625) target = $region96
        $region95: #{tpu_custom_call.1} parent=91 // pred_region
          %628 = dma.done %s622, 16
        $region96: #{tpu_custom_call.1} parent=91 // pred_fallthru
          _
        // Predicated region
        $region97: #{tpu_custom_call.1} parent=91 // pred_check
          %p629 = pneg %p206
        $region98: #{tpu_custom_call.1} parent=91 // pred_check_branch
          %631 = sbr.rel (%p629) target = $region100
        $region99: #{tpu_custom_call.1} parent=91 // pred_region
          %632 = dma.done [#allocation8], 256
        $region100: #{tpu_custom_call.1} parent=91 // pred_fallthru
          _
        // Predicated region
        $region101: #{tpu_custom_call.1} parent=91 // pred_check
          %p633 = pneg %p248
        $region102: #{tpu_custom_call.1} parent=91 // pred_check_branch
          %635 = sbr.rel (%p633) target = $region104
        $region103: #{tpu_custom_call.1} parent=91 // pred_region
          %636 = dma.done [#allocation8], 256
        $region104: #{tpu_custom_call.1} parent=91 // pred_fallthru
          _
        // Predicated region
        $region105: #{tpu_custom_call.1} parent=91 // pred_check
          %p637 = pneg %p332
        $region106: #{tpu_custom_call.1} parent=91 // pred_check_branch
          %639 = sbr.rel (%p637) target = $region108
        $region107: #{tpu_custom_call.1} parent=91 // pred_region
          %640 = dma.done [#allocation11], 256
        $region108: #{tpu_custom_call.1} parent=91 // pred_fallthru
          _
        %p641 = scmp.lt.s32.totalorder %s46, 1
        %s642 = scalar_select %p641, %s46, 1
        %s643 = smul.addr %s642, 8
        %s644 = scalar_lea.vmem %s0, %s643
        %p645 = pneg %p75
        %p646 = pneg %p72
        %s647 = sand.u32 %s88, 1
        %s648 = scalar_lea.sflag [#allocation5], %s647
        %s649 = sand.u32 %s88, 1
        %s650 = scalar_lea.vmem [#allocation4], %s649
        %p651 = pneg %p101
        %p652 = pneg %p98
        %p653 = pneg %p122
        %p654 = pneg %p119
        %p655 = pneg %p143
        %p656 = pneg %p140
        %p657 = pneg %p164
        %p658 = pneg %p161
        %p659 = pneg %p185
        %p660 = pneg %p182
        %p661 = pneg %p206
        %p662 = pneg %p203
        %p663 = pneg %p227
        %p664 = pneg %p224
        %p665 = pneg %p248
        %p666 = pneg %p245
        %p667 = pneg %p269
        %p668 = pneg %p266
        %p669 = pneg %p290
        %p670 = pneg %p287
        %p671 = pneg %p311
        %p672 = pneg %p308
        %p673 = pneg %p332
        %p674 = pneg %p329
        %p675 = pneg %p353
        %p676 = pneg %p350
        %p677 = pneg %p374
        %p678 = pneg %p371
        %p679 = pneg %p395
        %p680 = pneg %p392
        %p681 = pneg %p416
        %p682 = pneg %p413
        %p683 = pneg %p437
        %p684 = pneg %p434
        %p685 = pneg %p465
        %p686 = pneg %p462
        %s687 = sand.u32 %s452, 1
        %s688 = scalar_lea.sflag [#allocation6], %s687
        %s689 = sand.u32 %s452, 1
        %s690 = smul.addr %s689, 8
        %s691 = scalar_lea.vmem [#allocation12], %s690
        %p692 = pneg %p493
        %p693 = pneg %p490
        %s694 = sand.u32 %s480, 1
        %s695 = scalar_lea.sflag [#allocation14], %s694
        %s696 = sand.u32 %s480, 1
        %s697 = smul.addr %s696, 16
        %s698 = scalar_lea.vmem [#allocation13], %s697
        %p699 = scmp.lt.s32.totalorder %s46, 1
        %s700 = scalar_select %p699, %s46, 1
        %s701 = smul.addr %s700, 8
        %s702 = scalar_lea.vmem %s0, %s701
        %s704 = smul.u32 %s47, 8
        %p705 = scmp.eq.s32.totalorder %s47, 0
        // Predicated region
        $region109: #{tpu_custom_call.1} parent=91 // pred_check
          %p706 = pneg %p705
        $region110: #{tpu_custom_call.1} parent=91 // pred_check_branch
          %708 = sbr.rel (%p706) target = $region112
        $region111: #{tpu_custom_call.1} parent=91 // pred_region
          %v709 = vld [vmem:[%s702] sm:$0xff]
          %v710 = vpack.c.bf16 %v709, %v709
          %v711 = vld [vmem:[%s4] sm:$0xf]
          %v712 = vld [vmem:[%s4 + $0x4] sm:$0xf]
          %v713 = vld [vmem:[%s4 + $0x8] sm:$0xf]
          %v714 = vld [vmem:[%s4 + $0xc] sm:$0xf]
          %v715 = vld [vmem:[%s5] sm:$0x1]
          %v717 = vlaneseq
          %v718 = vshrl.u32 %v717, 7
          %v719 = vsub.s32 0, %v718
          %v720 = vrot.slane %v715, %v719
          %v726 = vunpack.c.l.b16 %v711
          %v727 = vunpack.c.l.b16 %v712
          %v728 = vunpack.c.l.b16 %v713
          %v729 = vunpack.c.l.b16 %v714
          %v730 = vpack.c.b16 %v727, %v726
          %v731 = vpack.c.b16 %v729, %v728
          %vm734 = vcmask 261120
          %v736 = vsel %vm734, %v710, 0
          %738 = vmatprep.subr.bf16.mxu0 0
          %739 = vmatpush1.bf16.msra.mxu0 0
          %740 = vmatprep.subr.bf16.mxu0 0
          %741 = vmatpush1.bf16.msra.mxu0 0
          %742 = vmatprep.subr.bf16.mxu0 0
          %743 = vmatpush1.bf16.msra.mxu0 0
          %744 = vmatprep.subr.bf16.mxu0 0
          %745 = vmatpush1.bf16.msra.mxu0 0
          %746 = vmatprep.subr.bf16.mxu0 0
          %747 = vmatpush1.bf16.msra.mxu0 0
          %748 = vmatprep.subr.bf16.mxu0 0
          %749 = vmatpush1.bf16.msra.mxu0 0
          %750 = vmatprep.subr.bf16.mxu0 0
          %751 = vmatpush1.bf16.msra.mxu0 %v731
          %752 = vmatprep.subr.bf16.mxu0 0
          %753 = vmatpush1.bf16.msra.mxu0 %v730
          %754 = vmatprep.subr.bf16.mxu0 0
          %755 = vmatpush2.bf16.msra.mxu0 0
          %756 = vmatprep.subr.bf16.mxu0 0
          %757 = vmatpush2.bf16.msra.mxu0 0
          %758 = vmatprep.subr.bf16.mxu0 0
          %759 = vmatpush2.bf16.msra.mxu0 0
          %760 = vmatprep.subr.bf16.mxu0 0
          %761 = vmatpush2.bf16.msra.mxu0 0
          %762 = vmatprep.subr.bf16.mxu0 0
          %763 = vmatpush2.bf16.msra.mxu0 0
          %764 = vmatprep.subr.bf16.mxu0 0
          %765 = vmatpush2.bf16.msra.mxu0 0
          %766 = vmatprep.subr.bf16.mxu0 0
          %767 = vmatpush2.bf16.msra.mxu0 0
          %768 = vmatprep.subr.bf16.mxu0 0
          %769 = vmatpush2.bf16.msra.mxu0 0
          %770 = vmatprep.mubr.bf16.mxu0 0
          %771 = vmatmul.mubr.bf16.gmra.mxu0 %v736
          %v772 = vpop.f32.mrf.mxu0
          %v773 = vadd.f32 %v720, %v772
          %v774 = vpop.f32.mrf.mxu0
          %v775 = vpop.f32.mrf.mxu0
          %v776 = vpop.f32.mrf.mxu0
          %777 = vdwg.mxu0
          %v778 = vld [vmem:[#allocation7] sm:$0xf]
          %v779 = vld [vmem:[#allocation7 + $0x4] sm:$0xf]
          %v780 = vld [vmem:[#allocation7 + $0x8] sm:$0xf]
          %v781 = vld [vmem:[#allocation7 + $0xc] sm:$0xf]
          %v782 = vld [vmem:[%s7] sm:$0x1]
          %v784 = vlaneseq
          %v785 = vshrl.u32 %v784, 7
          %v786 = vsub.s32 0, %v785
          %v787 = vrot.slane %v782, %v786
          %v793 = vunpack.c.l.b16 %v778
          %v794 = vunpack.c.l.b16 %v779
          %v795 = vunpack.c.l.b16 %v780
          %v796 = vunpack.c.l.b16 %v781
          %v797 = vpack.c.b16 %v794, %v793
          %v798 = vpack.c.b16 %v796, %v795
          %801 = vmatprep.subr.bf16.mxu0 0
          %802 = vmatpush1.bf16.msra.mxu0 0
          %803 = vmatprep.subr.bf16.mxu0 0
          %804 = vmatpush1.bf16.msra.mxu0 0
          %805 = vmatprep.subr.bf16.mxu0 0
          %806 = vmatpush1.bf16.msra.mxu0 0
          %807 = vmatprep.subr.bf16.mxu0 0
          %808 = vmatpush1.bf16.msra.mxu0 0
          %809 = vmatprep.subr.bf16.mxu0 0
          %810 = vmatpush1.bf16.msra.mxu0 0
          %811 = vmatprep.subr.bf16.mxu0 0
          %812 = vmatpush1.bf16.msra.mxu0 0
          %813 = vmatprep.subr.bf16.mxu0 0
          %814 = vmatpush1.bf16.msra.mxu0 %v798
          %815 = vmatprep.subr.bf16.mxu0 0
          %816 = vmatpush1.bf16.msra.mxu0 %v797
          %817 = vmatprep.subr.bf16.mxu0 0
          %818 = vmatpush2.bf16.msra.mxu0 0
          %819 = vmatprep.subr.bf16.mxu0 0
          %820 = vmatpush2.bf16.msra.mxu0 0
          %821 = vmatprep.subr.bf16.mxu0 0
          %822 = vmatpush2.bf16.msra.mxu0 0
          %823 = vmatprep.subr.bf16.mxu0 0
          %824 = vmatpush2.bf16.msra.mxu0 0
          %825 = vmatprep.subr.bf16.mxu0 0
          %826 = vmatpush2.bf16.msra.mxu0 0
          %827 = vmatprep.subr.bf16.mxu0 0
          %828 = vmatpush2.bf16.msra.mxu0 0
          %829 = vmatprep.subr.bf16.mxu0 0
          %830 = vmatpush2.bf16.msra.mxu0 0
          %831 = vmatprep.subr.bf16.mxu0 0
          %832 = vmatpush2.bf16.msra.mxu0 0
          %833 = vmatprep.mubr.bf16.mxu0 0
          %834 = vmatmul.mubr.bf16.gmra.mxu0 %v736
          %v835 = vpop.f32.mrf.mxu0
          %v836 = vadd.f32 %v787, %v835
          %v837 = vpop.f32.mrf.mxu0
          %v838 = vpop.f32.mrf.mxu0
          %v839 = vpop.f32.mrf.mxu0
          %840 = vdwg.mxu0
          %842 = vrot.lane.b32.xlu0 %v773, 120
          %v843 = vpop.permute.xlu0 %842
          %845 = vrot.lane.b32.xlu0 %v773, 112
          %v846 = vpop.permute.xlu0 %845
          %848 = vrot.lane.b32.xlu0 %v773, 104
          %v849 = vpop.permute.xlu0 %848
          %v851 = vcombine.low %v773, %v846
          %v852 = vcombine.high %v773, %v846
          %v854 = vunpack.c.l.s4 1983009808
          %v855 = vunpack.c.0.s8 %v854
          %v856 = vlaneseq
          %v857 = vshrl.u32 %v856, 7
          %v858 = vsub.s32 %v855, %v857
          %v859 = vrot.slane %v851, %v858
          %v861 = vunpack.c.l.s4 1983009808
          %v862 = vunpack.c.0.s8 %v861
          %v863 = vlaneseq
          %v864 = vshrl.u32 %v863, 7
          %v865 = vsub.s32 %v862, %v864
          %v866 = vrot.slane %v852, %v865
          %v867 = vcombine.low %v843, %v849
          %v868 = vcombine.high %v843, %v849
          %v870 = vunpack.c.l.s4 1983009808
          %v871 = vunpack.c.0.s8 %v870
          %v872 = vlaneseq
          %v873 = vshrl.u32 %v872, 7
          %v874 = vsub.s32 %v871, %v873
          %v875 = vrot.slane %v867, %v874
          %v877 = vunpack.c.l.s4 1983009808
          %v878 = vunpack.c.0.s8 %v877
          %v879 = vlaneseq
          %v880 = vshrl.u32 %v879, 7
          %v881 = vsub.s32 %v878, %v880
          %v882 = vrot.slane %v868, %v881
          %v883 = vcombine.low %v859, %v875
          %v884 = vcombine.high %v859, %v875
          %v886 = vunpack.c.l.s4 1934713408
          %v887 = vunpack.c.0.s8 %v886
          %v888 = vlaneseq
          %v889 = vshrl.u32 %v888, 7
          %v890 = vsub.s32 %v887, %v889
          %v891 = vrot.slane %v883, %v890
          %v893 = vunpack.c.l.s4 1934713408
          %v894 = vunpack.c.0.s8 %v893
          %v895 = vlaneseq
          %v896 = vshrl.u32 %v895, 7
          %v897 = vsub.s32 %v894, %v896
          %v898 = vrot.slane %v884, %v897
          %v899 = vcombine.low %v866, %v882
          %v900 = vcombine.high %v866, %v882
          %v902 = vunpack.c.l.s4 1934713408
          %v903 = vunpack.c.0.s8 %v902
          %v904 = vlaneseq
          %v905 = vshrl.u32 %v904, 7
          %v906 = vsub.s32 %v903, %v905
          %v907 = vrot.slane %v899, %v906
          %v909 = vunpack.c.l.s4 1934713408
          %v910 = vunpack.c.0.s8 %v909
          %v911 = vlaneseq
          %v912 = vshrl.u32 %v911, 7
          %v913 = vsub.s32 %v910, %v912
          %v914 = vrot.slane %v900, %v913
          %v915 = vcombine.high %v891, 0.0
          %v916 = vcombine.high %v898, 0.0
          %v917 = vcombine.high %v907, 0.0
          %v918 = vcombine.high %v914, 0.0
          %v919 = vcombine.low %v891, %v898
          %v921 = vunpack.c.l.s4 1983009808
          %v922 = vunpack.c.0.s8 %v921
          %v923 = vlaneseq
          %v924 = vshrl.u32 %v923, 7
          %v925 = vsub.s32 %v922, %v924
          %v926 = vrot.slane %v919, %v925
          %v927 = vcombine.low %v915, %v916
          %v929 = vunpack.c.l.s4 1983009808
          %v930 = vunpack.c.0.s8 %v929
          %v931 = vlaneseq
          %v932 = vshrl.u32 %v931, 7
          %v933 = vsub.s32 %v930, %v932
          %v934 = vrot.slane %v927, %v933
          %v935 = vcombine.low %v907, %v914
          %v937 = vunpack.c.l.s4 1983009808
          %v938 = vunpack.c.0.s8 %v937
          %v939 = vlaneseq
          %v940 = vshrl.u32 %v939, 7
          %v941 = vsub.s32 %v938, %v940
          %v942 = vrot.slane %v935, %v941
          %v943 = vcombine.low %v917, %v918
          %v945 = vunpack.c.l.s4 1983009808
          %v946 = vunpack.c.0.s8 %v945
          %v947 = vlaneseq
          %v948 = vshrl.u32 %v947, 7
          %v949 = vsub.s32 %v946, %v948
          %v950 = vrot.slane %v943, %v949
          %v951 = vcombine.low %v926, %v934
          %v952 = vcombine.high %v926, %v934
          %v954 = vunpack.c.l.s4 1934713408
          %v955 = vunpack.c.0.s8 %v954
          %v956 = vlaneseq
          %v957 = vshrl.u32 %v956, 7
          %v958 = vsub.s32 %v955, %v957
          %v959 = vrot.slane %v951, %v958
          %v961 = vunpack.c.l.s4 1934713408
          %v962 = vunpack.c.0.s8 %v961
          %v963 = vlaneseq
          %v964 = vshrl.u32 %v963, 7
          %v965 = vsub.s32 %v962, %v964
          %v966 = vrot.slane %v952, %v965
          %v967 = vcombine.low %v942, %v950
          %v968 = vcombine.high %v942, %v950
          %v970 = vunpack.c.l.s4 1934713408
          %v971 = vunpack.c.0.s8 %v970
          %v972 = vlaneseq
          %v973 = vshrl.u32 %v972, 7
          %v974 = vsub.s32 %v971, %v973
          %v975 = vrot.slane %v967, %v974
          %v977 = vunpack.c.l.s4 1934713408
          %v978 = vunpack.c.0.s8 %v977
          %v979 = vlaneseq
          %v980 = vshrl.u32 %v979, 7
          %v981 = vsub.s32 %v978, %v980
          %v982 = vrot.slane %v968, %v981
          %v983 = vcombine.low %v959, %v975
          %v984 = vcombine.high %v959, %v975
          %v985 = vcombine.low %v966, %v982
          %v986 = vcombine.high %v966, %v982
          %v987 = vpack.c.bf16 %v983, %v983
          %v988 = vpack.c.bf16 %v984, %v984
          %v989 = vpack.c.bf16 %v985, %v985
          %v990 = vpack.c.bf16 %v986, %v986
          %vm991 = vcmask 60416
          %992 = vst.msk [vmem:[#allocation2] sm:$0xf] %vm991, %v987
          %993 = vst.msk [vmem:[#allocation2 + $0x4] sm:$0xf] %vm991, %v988
          %994 = vst.msk [vmem:[#allocation2 + $0x8] sm:$0xf] %vm991, %v989
          %995 = vst.msk [vmem:[#allocation2 + $0xc] sm:$0xf] %vm991, %v990
          %997 = vrot.lane.b32.xlu0 %v836, 120
          %v998 = vpop.permute.xlu0 %997
          %1000 = vrot.lane.b32.xlu0 %v836, 112
          %v1001 = vpop.permute.xlu0 %1000
          %1003 = vrot.lane.b32.xlu0 %v836, 104
          %v1004 = vpop.permute.xlu0 %1003
          %v1006 = vcombine.low %v836, %v1001
          %v1007 = vcombine.high %v836, %v1001
          %v1009 = vunpack.c.l.s4 1983009808
          %v1010 = vunpack.c.0.s8 %v1009
          %v1011 = vlaneseq
          %v1012 = vshrl.u32 %v1011, 7
          %v1013 = vsub.s32 %v1010, %v1012
          %v1014 = vrot.slane %v1006, %v1013
          %v1016 = vunpack.c.l.s4 1983009808
          %v1017 = vunpack.c.0.s8 %v1016
          %v1018 = vlaneseq
          %v1019 = vshrl.u32 %v1018, 7
          %v1020 = vsub.s32 %v1017, %v1019
          %v1021 = vrot.slane %v1007, %v1020
          %v1022 = vcombine.low %v998, %v1004
          %v1023 = vcombine.high %v998, %v1004
          %v1025 = vunpack.c.l.s4 1983009808
          %v1026 = vunpack.c.0.s8 %v1025
          %v1027 = vlaneseq
          %v1028 = vshrl.u32 %v1027, 7
          %v1029 = vsub.s32 %v1026, %v1028
          %v1030 = vrot.slane %v1022, %v1029
          %v1032 = vunpack.c.l.s4 1983009808
          %v1033 = vunpack.c.0.s8 %v1032
          %v1034 = vlaneseq
          %v1035 = vshrl.u32 %v1034, 7
          %v1036 = vsub.s32 %v1033, %v1035
          %v1037 = vrot.slane %v1023, %v1036
          %v1038 = vcombine.low %v1014, %v1030
          %v1039 = vcombine.high %v1014, %v1030
          %v1041 = vunpack.c.l.s4 1934713408
          %v1042 = vunpack.c.0.s8 %v1041
          %v1043 = vlaneseq
          %v1044 = vshrl.u32 %v1043, 7
          %v1045 = vsub.s32 %v1042, %v1044
          %v1046 = vrot.slane %v1038, %v1045
          %v1048 = vunpack.c.l.s4 1934713408
          %v1049 = vunpack.c.0.s8 %v1048
          %v1050 = vlaneseq
          %v1051 = vshrl.u32 %v1050, 7
          %v1052 = vsub.s32 %v1049, %v1051
          %v1053 = vrot.slane %v1039, %v1052
          %v1054 = vcombine.low %v1021, %v1037
          %v1055 = vcombine.high %v1021, %v1037
          %v1057 = vunpack.c.l.s4 1934713408
          %v1058 = vunpack.c.0.s8 %v1057
          %v1059 = vlaneseq
          %v1060 = vshrl.u32 %v1059, 7
          %v1061 = vsub.s32 %v1058, %v1060
          %v1062 = vrot.slane %v1054, %v1061
          %v1064 = vunpack.c.l.s4 1934713408
          %v1065 = vunpack.c.0.s8 %v1064
          %v1066 = vlaneseq
          %v1067 = vshrl.u32 %v1066, 7
          %v1068 = vsub.s32 %v1065, %v1067
          %v1069 = vrot.slane %v1055, %v1068
          %v1070 = vcombine.high %v1046, 0.0
          %v1071 = vcombine.high %v1053, 0.0
          %v1072 = vcombine.high %v1062, 0.0
          %v1073 = vcombine.high %v1069, 0.0
          %v1074 = vcombine.low %v1046, %v1053
          %v1076 = vunpack.c.l.s4 1983009808
          %v1077 = vunpack.c.0.s8 %v1076
          %v1078 = vlaneseq
          %v1079 = vshrl.u32 %v1078, 7
          %v1080 = vsub.s32 %v1077, %v1079
          %v1081 = vrot.slane %v1074, %v1080
          %v1082 = vcombine.low %v1070, %v1071
          %v1084 = vunpack.c.l.s4 1983009808
          %v1085 = vunpack.c.0.s8 %v1084
          %v1086 = vlaneseq
          %v1087 = vshrl.u32 %v1086, 7
          %v1088 = vsub.s32 %v1085, %v1087
          %v1089 = vrot.slane %v1082, %v1088
          %v1090 = vcombine.low %v1062, %v1069
          %v1092 = vunpack.c.l.s4 1983009808
          %v1093 = vunpack.c.0.s8 %v1092
          %v1094 = vlaneseq
          %v1095 = vshrl.u32 %v1094, 7
          %v1096 = vsub.s32 %v1093, %v1095
          %v1097 = vrot.slane %v1090, %v1096
          %v1098 = vcombine.low %v1072, %v1073
          %v1100 = vunpack.c.l.s4 1983009808
          %v1101 = vunpack.c.0.s8 %v1100
          %v1102 = vlaneseq
          %v1103 = vshrl.u32 %v1102, 7
          %v1104 = vsub.s32 %v1101, %v1103
          %v1105 = vrot.slane %v1098, %v1104
          %v1106 = vcombine.low %v1081, %v1089
          %v1107 = vcombine.high %v1081, %v1089
          %v1109 = vunpack.c.l.s4 1934713408
          %v1110 = vunpack.c.0.s8 %v1109
          %v1111 = vlaneseq
          %v1112 = vshrl.u32 %v1111, 7
          %v1113 = vsub.s32 %v1110, %v1112
          %v1114 = vrot.slane %v1106, %v1113
          %v1116 = vunpack.c.l.s4 1934713408
          %v1117 = vunpack.c.0.s8 %v1116
          %v1118 = vlaneseq
          %v1119 = vshrl.u32 %v1118, 7
          %v1120 = vsub.s32 %v1117, %v1119
          %v1121 = vrot.slane %v1107, %v1120
          %v1122 = vcombine.low %v1097, %v1105
          %v1123 = vcombine.high %v1097, %v1105
          %v1125 = vunpack.c.l.s4 1934713408
          %v1126 = vunpack.c.0.s8 %v1125
          %v1127 = vlaneseq
          %v1128 = vshrl.u32 %v1127, 7
          %v1129 = vsub.s32 %v1126, %v1128
          %v1130 = vrot.slane %v1122, %v1129
          %v1132 = vunpack.c.l.s4 1934713408
          %v1133 = vunpack.c.0.s8 %v1132
          %v1134 = vlaneseq
          %v1135 = vshrl.u32 %v1134, 7
          %v1136 = vsub.s32 %v1133, %v1135
          %v1137 = vrot.slane %v1123, %v1136
          %v1138 = vcombine.low %v1114, %v1130
          %v1139 = vcombine.high %v1114, %v1130
          %v1140 = vcombine.low %v1121, %v1137
          %v1141 = vcombine.high %v1121, %v1137
          %v1142 = vpack.c.bf16 %v1138, %v1138
          %v1143 = vpack.c.bf16 %v1139, %v1139
          %v1144 = vpack.c.bf16 %v1140, %v1140
          %v1145 = vpack.c.bf16 %v1141, %v1141
          %1146 = vst.msk [vmem:[#allocation3] sm:$0xf] %vm991, %v1142
          %1147 = vst.msk [vmem:[#allocation3 + $0x4] sm:$0xf] %vm991, %v1143
          %1148 = vst.msk [vmem:[#allocation3 + $0x8] sm:$0xf] %vm991, %v1144
          %1149 = vst.msk [vmem:[#allocation3 + $0xc] sm:$0xf] %vm991, %v1145
        $region112: #{tpu_custom_call.1} parent=91 // pred_fallthru
          _
        %s1150 = scalar_lea.vmem %s702, %s704
        %v1151 = vld [vmem:[%s1150] sm:$0xff]
        %v1152 = vpack.c.bf16 %v1151, %v1151
        %v1153 = vld [vmem:[%s2] sm:$0xf]
        %v1154 = vld [vmem:[%s2 + $0x4] sm:$0xf]
        %v1155 = vld [vmem:[%s2 + $0x8] sm:$0xf]
        %v1156 = vld [vmem:[%s2 + $0xc] sm:$0xf]
        %v1157 = vld [vmem:[%s3] sm:$0x1]
        %v1159 = vlaneseq
        %v1160 = vshrl.u32 %v1159, 7
        %v1161 = vsub.s32 0, %v1160
        %v1162 = vrot.slane %v1157, %v1161
        %v1168 = vunpack.c.l.b16 %v1153
        %v1169 = vunpack.c.l.b16 %v1154
        %v1170 = vunpack.c.l.b16 %v1155
        %v1171 = vunpack.c.l.b16 %v1156
        %v1172 = vpack.c.b16 %v1169, %v1168
        %v1173 = vpack.c.b16 %v1171, %v1170
        %vm1176 = vcmask 261120
        %v1178 = vsel %vm1176, %v1152, 0
        %1180 = vmatprep.subr.bf16.mxu0 0
        %1181 = vmatpush1.bf16.msra.mxu0 0
        %1182 = vmatprep.subr.bf16.mxu0 0
        %1183 = vmatpush1.bf16.msra.mxu0 0
        %1184 = vmatprep.subr.bf16.mxu0 0
        %1185 = vmatpush1.bf16.msra.mxu0 0
        %1186 = vmatprep.subr.bf16.mxu0 0
        %1187 = vmatpush1.bf16.msra.mxu0 0
        %1188 = vmatprep.subr.bf16.mxu0 0
        %1189 = vmatpush1.bf16.msra.mxu0 0
        %1190 = vmatprep.subr.bf16.mxu0 0
        %1191 = vmatpush1.bf16.msra.mxu0 0
        %1192 = vmatprep.subr.bf16.mxu0 0
        %1193 = vmatpush1.bf16.msra.mxu0 %v1173
        %1194 = vmatprep.subr.bf16.mxu0 0
        %1195 = vmatpush1.bf16.msra.mxu0 %v1172
        %1196 = vmatprep.subr.bf16.mxu0 0
        %1197 = vmatpush2.bf16.msra.mxu0 0
        %1198 = vmatprep.subr.bf16.mxu0 0
        %1199 = vmatpush2.bf16.msra.mxu0 0
        %1200 = vmatprep.subr.bf16.mxu0 0
        %1201 = vmatpush2.bf16.msra.mxu0 0
        %1202 = vmatprep.subr.bf16.mxu0 0
        %1203 = vmatpush2.bf16.msra.mxu0 0
        %1204 = vmatprep.subr.bf16.mxu0 0
        %1205 = vmatpush2.bf16.msra.mxu0 0
        %1206 = vmatprep.subr.bf16.mxu0 0
        %1207 = vmatpush2.bf16.msra.mxu0 0
        %1208 = vmatprep.subr.bf16.mxu0 0
        %1209 = vmatpush2.bf16.msra.mxu0 0
        %1210 = vmatprep.subr.bf16.mxu0 0
        %1211 = vmatpush2.bf16.msra.mxu0 0
        %1212 = vmatprep.mubr.bf16.mxu0 0
        %1213 = vmatmul.mubr.bf16.gmra.mxu0 %v1178
        %v1214 = vpop.f32.mrf.mxu0
        %v1215 = vadd.f32 %v1162, %v1214
        %v1216 = vpop.f32.mrf.mxu0
        %v1217 = vpop.f32.mrf.mxu0
        %v1218 = vpop.f32.mrf.mxu0
        %1219 = vdwg.mxu0
        %1221 = vrot.lane.b32.xlu0 %v1215, 120
        %v1222 = vpop.permute.xlu0 %1221
        %1224 = vrot.lane.b32.xlu0 %v1215, 112
        %v1225 = vpop.permute.xlu0 %1224
        %1227 = vrot.lane.b32.xlu0 %v1215, 104
        %v1228 = vpop.permute.xlu0 %1227
        %v1230 = vcombine.low %v1215, %v1225
        %v1231 = vcombine.high %v1215, %v1225
        %v1233 = vunpack.c.l.s4 1983009808
        %v1234 = vunpack.c.0.s8 %v1233
        %v1235 = vlaneseq
        %v1236 = vshrl.u32 %v1235, 7
        %v1237 = vsub.s32 %v1234, %v1236
        %v1238 = vrot.slane %v1230, %v1237
        %v1240 = vunpack.c.l.s4 1983009808
        %v1241 = vunpack.c.0.s8 %v1240
        %v1242 = vlaneseq
        %v1243 = vshrl.u32 %v1242, 7
        %v1244 = vsub.s32 %v1241, %v1243
        %v1245 = vrot.slane %v1231, %v1244
        %v1246 = vcombine.low %v1222, %v1228
        %v1247 = vcombine.high %v1222, %v1228
        %v1249 = vunpack.c.l.s4 1983009808
        %v1250 = vunpack.c.0.s8 %v1249
        %v1251 = vlaneseq
        %v1252 = vshrl.u32 %v1251, 7
        %v1253 = vsub.s32 %v1250, %v1252
        %v1254 = vrot.slane %v1246, %v1253
        %v1256 = vunpack.c.l.s4 1983009808
        %v1257 = vunpack.c.0.s8 %v1256
        %v1258 = vlaneseq
        %v1259 = vshrl.u32 %v1258, 7
        %v1260 = vsub.s32 %v1257, %v1259
        %v1261 = vrot.slane %v1247, %v1260
        %v1262 = vcombine.low %v1238, %v1254
        %v1263 = vcombine.high %v1238, %v1254
        %v1265 = vunpack.c.l.s4 1934713408
        %v1266 = vunpack.c.0.s8 %v1265
        %v1267 = vlaneseq
        %v1268 = vshrl.u32 %v1267, 7
        %v1269 = vsub.s32 %v1266, %v1268
        %v1270 = vrot.slane %v1262, %v1269
        %v1272 = vunpack.c.l.s4 1934713408
        %v1273 = vunpack.c.0.s8 %v1272
        %v1274 = vlaneseq
        %v1275 = vshrl.u32 %v1274, 7
        %v1276 = vsub.s32 %v1273, %v1275
        %v1277 = vrot.slane %v1263, %v1276
        %v1278 = vcombine.low %v1245, %v1261
        %v1279 = vcombine.high %v1245, %v1261
        %v1281 = vunpack.c.l.s4 1934713408
        %v1282 = vunpack.c.0.s8 %v1281
        %v1283 = vlaneseq
        %v1284 = vshrl.u32 %v1283, 7
        %v1285 = vsub.s32 %v1282, %v1284
        %v1286 = vrot.slane %v1278, %v1285
        %v1288 = vunpack.c.l.s4 1934713408
        %v1289 = vunpack.c.0.s8 %v1288
        %v1290 = vlaneseq
        %v1291 = vshrl.u32 %v1290, 7
        %v1292 = vsub.s32 %v1289, %v1291
        %v1293 = vrot.slane %v1279, %v1292
        %v1294 = vcombine.high %v1270, 0.0
        %v1295 = vcombine.high %v1277, 0.0
        %v1296 = vcombine.high %v1286, 0.0
        %v1297 = vcombine.high %v1293, 0.0
        %v1298 = vcombine.low %v1270, %v1277
        %v1300 = vunpack.c.l.s4 1983009808
        %v1301 = vunpack.c.0.s8 %v1300
        %v1302 = vlaneseq
        %v1303 = vshrl.u32 %v1302, 7
        %v1304 = vsub.s32 %v1301, %v1303
        %v1305 = vrot.slane %v1298, %v1304
        %v1306 = vcombine.low %v1294, %v1295
        %v1308 = vunpack.c.l.s4 1983009808
        %v1309 = vunpack.c.0.s8 %v1308
        %v1310 = vlaneseq
        %v1311 = vshrl.u32 %v1310, 7
        %v1312 = vsub.s32 %v1309, %v1311
        %v1313 = vrot.slane %v1306, %v1312
        %v1314 = vcombine.low %v1286, %v1293
        %v1316 = vunpack.c.l.s4 1983009808
        %v1317 = vunpack.c.0.s8 %v1316
        %v1318 = vlaneseq
        %v1319 = vshrl.u32 %v1318, 7
        %v1320 = vsub.s32 %v1317, %v1319
        %v1321 = vrot.slane %v1314, %v1320
        %v1322 = vcombine.low %v1296, %v1297
        %v1324 = vunpack.c.l.s4 1983009808
        %v1325 = vunpack.c.0.s8 %v1324
        %v1326 = vlaneseq
        %v1327 = vshrl.u32 %v1326, 7
        %v1328 = vsub.s32 %v1325, %v1327
        %v1329 = vrot.slane %v1322, %v1328
        %v1330 = vcombine.low %v1305, %v1313
        %v1331 = vcombine.high %v1305, %v1313
        %v1333 = vunpack.c.l.s4 1934713408
        %v1334 = vunpack.c.0.s8 %v1333
        %v1335 = vlaneseq
        %v1336 = vshrl.u32 %v1335, 7
        %v1337 = vsub.s32 %v1334, %v1336
        %v1338 = vrot.slane %v1330, %v1337
        %v1340 = vunpack.c.l.s4 1934713408
        %v1341 = vunpack.c.0.s8 %v1340
        %v1342 = vlaneseq
        %v1343 = vshrl.u32 %v1342, 7
        %v1344 = vsub.s32 %v1341, %v1343
        %v1345 = vrot.slane %v1331, %v1344
        %v1346 = vcombine.low %v1321, %v1329
        %v1347 = vcombine.high %v1321, %v1329
        %v1349 = vunpack.c.l.s4 1934713408
        %v1350 = vunpack.c.0.s8 %v1349
        %v1351 = vlaneseq
        %v1352 = vshrl.u32 %v1351, 7
        %v1353 = vsub.s32 %v1350, %v1352
        %v1354 = vrot.slane %v1346, %v1353
        %v1356 = vunpack.c.l.s4 1934713408
        %v1357 = vunpack.c.0.s8 %v1356
        %v1358 = vlaneseq
        %v1359 = vshrl.u32 %v1358, 7
        %v1360 = vsub.s32 %v1357, %v1359
        %v1361 = vrot.slane %v1347, %v1360
        %v1362 = vcombine.low %v1338, %v1354
        %v1363 = vcombine.high %v1338, %v1354
        %v1364 = vcombine.low %v1345, %v1361
        %v1365 = vcombine.high %v1345, %v1361
        %v1366 = vpack.c.bf16 %v1362, %v1362
        %v1367 = vpack.c.bf16 %v1363, %v1363
        %v1368 = vpack.c.bf16 %v1364, %v1364
        %v1369 = vpack.c.bf16 %v1365, %v1365
        %v1370 = vld [vmem:[#allocation2] sm:$0xf]
        %v1371 = vld [vmem:[#allocation2 + $0x4] sm:$0xf]
        %v1372 = vld [vmem:[#allocation2 + $0x8] sm:$0xf]
        %v1373 = vld [vmem:[#allocation2 + $0xc] sm:$0xf]
        %vm1374 = vcmask 64512
        %v1376 = vsel %vm1374, %v1366, 0
        %v1379 = vsel %vm1374, %v1370, 0
        %1381 = vmatprep.subr.bf16.mxu0 0
        %1382 = vmatpush1.bf16.xpose.msra.mxu0 0
        %1383 = vmatprep.subr.bf16.mxu0 0
        %1384 = vmatpush1.bf16.xpose.msra.mxu0 0
        %1385 = vmatprep.subr.bf16.mxu0 0
        %1386 = vmatpush1.bf16.xpose.msra.mxu0 0
        %1387 = vmatprep.subr.bf16.mxu0 0
        %1388 = vmatpush1.bf16.xpose.msra.mxu0 0
        %1389 = vmatprep.subr.bf16.mxu0 0
        %1390 = vmatpush1.bf16.xpose.msra.mxu0 0
        %1391 = vmatprep.subr.bf16.mxu0 0
        %1392 = vmatpush1.bf16.xpose.msra.mxu0 0
        %1393 = vmatprep.subr.bf16.mxu0 0
        %1394 = vmatpush1.bf16.xpose.msra.mxu0 0
        %1395 = vmatprep.subr.bf16.mxu0 0
        %1396 = vmatpush1.bf16.xpose.msra.mxu0 %v1379
        %1397 = vmatprep.subr.bf16.mxu0 0
        %1398 = vmatpush2.bf16.xpose.msra.mxu0 0
        %1399 = vmatprep.subr.bf16.mxu0 0
        %1400 = vmatpush2.bf16.xpose.msra.mxu0 0
        %1401 = vmatprep.subr.bf16.mxu0 0
        %1402 = vmatpush2.bf16.xpose.msra.mxu0 0
        %1403 = vmatprep.subr.bf16.mxu0 0
        %1404 = vmatpush2.bf16.xpose.msra.mxu0 0
        %1405 = vmatprep.subr.bf16.mxu0 0
        %1406 = vmatpush2.bf16.xpose.msra.mxu0 0
        %1407 = vmatprep.subr.bf16.mxu0 0
        %1408 = vmatpush2.bf16.xpose.msra.mxu0 0
        %1409 = vmatprep.subr.bf16.mxu0 0
        %1410 = vmatpush2.bf16.xpose.msra.mxu0 0
        %1411 = vmatprep.subr.bf16.mxu0 0
        %1412 = vmatpush2.bf16.xpose.msra.mxu0 0
        %1413 = vmatprep.mubr.bf16.mxu0 0
        %1414 = vmatmul.mubr.bf16.gmra.mxu0 %v1376
        %v1415 = vpop.f32.mrf.mxu0
        %v1416 = vadd.f32 0.0, %v1415
        %v1417 = vpop.f32.mrf.mxu0
        %v1418 = vpop.f32.mrf.mxu0
        %v1419 = vpop.f32.mrf.mxu0
        %1420 = vdwg.mxu0
        %v1422 = vsel %vm1374, %v1367, 0
        %v1425 = vsel %vm1374, %v1371, 0
        %1427 = vmatprep.subr.bf16.mxu0 0
        %1428 = vmatpush1.bf16.xpose.msra.mxu0 0
        %1429 = vmatprep.subr.bf16.mxu0 0
        %1430 = vmatpush1.bf16.xpose.msra.mxu0 0
        %1431 = vmatprep.subr.bf16.mxu0 0
        %1432 = vmatpush1.bf16.xpose.msra.mxu0 0
        %1433 = vmatprep.subr.bf16.mxu0 0
        %1434 = vmatpush1.bf16.xpose.msra.mxu0 0
        %1435 = vmatprep.subr.bf16.mxu0 0
        %1436 = vmatpush1.bf16.xpose.msra.mxu0 0
        %1437 = vmatprep.subr.bf16.mxu0 0
        %1438 = vmatpush1.bf16.xpose.msra.mxu0 0
        %1439 = vmatprep.subr.bf16.mxu0 0
        %1440 = vmatpush1.bf16.xpose.msra.mxu0 0
        %1441 = vmatprep.subr.bf16.mxu0 0
        %1442 = vmatpush1.bf16.xpose.msra.mxu0 %v1425
        %1443 = vmatprep.subr.bf16.mxu0 0
        %1444 = vmatpush2.bf16.xpose.msra.mxu0 0
        %1445 = vmatprep.subr.bf16.mxu0 0
        %1446 = vmatpush2.bf16.xpose.msra.mxu0 0
        %1447 = vmatprep.subr.bf16.mxu0 0
        %1448 = vmatpush2.bf16.xpose.msra.mxu0 0
        %1449 = vmatprep.subr.bf16.mxu0 0
        %1450 = vmatpush2.bf16.xpose.msra.mxu0 0
        %1451 = vmatprep.subr.bf16.mxu0 0
        %1452 = vmatpush2.bf16.xpose.msra.mxu0 0
        %1453 = vmatprep.subr.bf16.mxu0 0
        %1454 = vmatpush2.bf16.xpose.msra.mxu0 0
        %1455 = vmatprep.subr.bf16.mxu0 0
        %1456 = vmatpush2.bf16.xpose.msra.mxu0 0
        %1457 = vmatprep.subr.bf16.mxu0 0
        %1458 = vmatpush2.bf16.xpose.msra.mxu0 0
        %1459 = vmatprep.mubr.bf16.mxu0 0
        %1460 = vmatmul.mubr.bf16.gmra.mxu0 %v1422
        %v1461 = vpop.f32.mrf.mxu0
        %v1462 = vadd.f32 0.0, %v1461
        %v1463 = vpop.f32.mrf.mxu0
        %v1464 = vpop.f32.mrf.mxu0
        %v1465 = vpop.f32.mrf.mxu0
        %1466 = vdwg.mxu0
        %v1468 = vsel %vm1374, %v1368, 0
        %v1471 = vsel %vm1374, %v1372, 0
        %1473 = vmatprep.subr.bf16.mxu0 0
        %1474 = vmatpush1.bf16.xpose.msra.mxu0 0
        %1475 = vmatprep.subr.bf16.mxu0 0
        %1476 = vmatpush1.bf16.xpose.msra.mxu0 0
        %1477 = vmatprep.subr.bf16.mxu0 0
        %1478 = vmatpush1.bf16.xpose.msra.mxu0 0
        %1479 = vmatprep.subr.bf16.mxu0 0
        %1480 = vmatpush1.bf16.xpose.msra.mxu0 0
        %1481 = vmatprep.subr.bf16.mxu0 0
        %1482 = vmatpush1.bf16.xpose.msra.mxu0 0
        %1483 = vmatprep.subr.bf16.mxu0 0
        %1484 = vmatpush1.bf16.xpose.msra.mxu0 0
        %1485 = vmatprep.subr.bf16.mxu0 0
        %1486 = vmatpush1.bf16.xpose.msra.mxu0 0
        %1487 = vmatprep.subr.bf16.mxu0 0
        %1488 = vmatpush1.bf16.xpose.msra.mxu0 %v1471
        %1489 = vmatprep.subr.bf16.mxu0 0
        %1490 = vmatpush2.bf16.xpose.msra.mxu0 0
        %1491 = vmatprep.subr.bf16.mxu0 0
        %1492 = vmatpush2.bf16.xpose.msra.mxu0 0
        %1493 = vmatprep.subr.bf16.mxu0 0
        %1494 = vmatpush2.bf16.xpose.msra.mxu0 0
        %1495 = vmatprep.subr.bf16.mxu0 0
        %1496 = vmatpush2.bf16.xpose.msra.mxu0 0
        %1497 = vmatprep.subr.bf16.mxu0 0
        %1498 = vmatpush2.bf16.xpose.msra.mxu0 0
        %1499 = vmatprep.subr.bf16.mxu0 0
        %1500 = vmatpush2.bf16.xpose.msra.mxu0 0
        %1501 = vmatprep.subr.bf16.mxu0 0
        %1502 = vmatpush2.bf16.xpose.msra.mxu0 0
        %1503 = vmatprep.subr.bf16.mxu0 0
        %1504 = vmatpush2.bf16.xpose.msra.mxu0 0
        %1505 = vmatprep.mubr.bf16.mxu0 0
        %1506 = vmatmul.mubr.bf16.gmra.mxu0 %v1468
        %v1507 = vpop.f32.mrf.mxu0
        %v1508 = vadd.f32 0.0, %v1507
        %v1509 = vpop.f32.mrf.mxu0
        %v1510 = vpop.f32.mrf.mxu0
        %v1511 = vpop.f32.mrf.mxu0
        %1512 = vdwg.mxu0
        %v1514 = vsel %vm1374, %v1369, 0
        %v1517 = vsel %vm1374, %v1373, 0
        %1519 = vmatprep.subr.bf16.mxu0 0
        %1520 = vmatpush1.bf16.xpose.msra.mxu0 0
        %1521 = vmatprep.subr.bf16.mxu0 0
        %1522 = vmatpush1.bf16.xpose.msra.mxu0 0
        %1523 = vmatprep.subr.bf16.mxu0 0
        %1524 = vmatpush1.bf16.xpose.msra.mxu0 0
        %1525 = vmatprep.subr.bf16.mxu0 0
        %1526 = vmatpush1.bf16.xpose.msra.mxu0 0
        %1527 = vmatprep.subr.bf16.mxu0 0
        %1528 = vmatpush1.bf16.xpose.msra.mxu0 0
        %1529 = vmatprep.subr.bf16.mxu0 0
        %1530 = vmatpush1.bf16.xpose.msra.mxu0 0
        %1531 = vmatprep.subr.bf16.mxu0 0
        %1532 = vmatpush1.bf16.xpose.msra.mxu0 0
        %1533 = vmatprep.subr.bf16.mxu0 0
        %1534 = vmatpush1.bf16.xpose.msra.mxu0 %v1517
        %1535 = vmatprep.subr.bf16.mxu0 0
        %1536 = vmatpush2.bf16.xpose.msra.mxu0 0
        %1537 = vmatprep.subr.bf16.mxu0 0
        %1538 = vmatpush2.bf16.xpose.msra.mxu0 0
        %1539 = vmatprep.subr.bf16.mxu0 0
        %1540 = vmatpush2.bf16.xpose.msra.mxu0 0
        %1541 = vmatprep.subr.bf16.mxu0 0
        %1542 = vmatpush2.bf16.xpose.msra.mxu0 0
        %1543 = vmatprep.subr.bf16.mxu0 0
        %1544 = vmatpush2.bf16.xpose.msra.mxu0 0
        %1545 = vmatprep.subr.bf16.mxu0 0
        %1546 = vmatpush2.bf16.xpose.msra.mxu0 0
        %1547 = vmatprep.subr.bf16.mxu0 0
        %1548 = vmatpush2.bf16.xpose.msra.mxu0 0
        %1549 = vmatprep.subr.bf16.mxu0 0
        %1550 = vmatpush2.bf16.xpose.msra.mxu0 0
        %1551 = vmatprep.mubr.bf16.mxu0 0
        %1552 = vmatmul.mubr.bf16.gmra.mxu0 %v1514
        %v1553 = vpop.f32.mrf.mxu0
        %v1554 = vadd.f32 0.0, %v1553
        %v1555 = vpop.f32.mrf.mxu0
        %v1556 = vpop.f32.mrf.mxu0
        %v1557 = vpop.f32.mrf.mxu0
        %1558 = vdwg.mxu0
        %v1559 = vlaneseq
        %v1560 = vshrl.u32 %v1559, 7
        %v1561 = vstv %s704
        %v1562 = vadd.s32 %v1561, %v1560
        %v1563 = vlaneseq
        %v1564 = vand.u32 %v1563, 127
        %vm1565 = vcmp.gt.s32.totalorder %v1564, %v1562
        %v1566 = vld [vmem:[%s624] sm:$0x1]
        %vm1567 = vcmp.gt.f32.partialorder %v1566, 0.0
        %v1568 = vsel %vm1567, 1, 0
        %v1569 = vlaneseq
        %v1570 = vshrl.u32 %v1569, 7
        %v1571 = vsub.s32 0, %v1570
        %v1572 = vrot.slane %v1568, %v1571
        %vm1573 = vcmp.eq.s32.totalorder %v1572, 1
        %vm1574 = vmor %vm1565, %vm1573
        %v1575 = vsel %vm1574, 1, 0
        %vm1576 = vcmp.eq.s32.totalorder %v1575, 1
        %v1577 = vsel %vm1576, -1e+09, %v1416
        %v1578 = vsel %vm1576, -1e+09, %v1462
        %v1579 = vsel %vm1576, -1e+09, %v1508
        %v1580 = vsel %vm1576, -1e+09, %v1554
        %v1581 = vsel %vm1374, %v1577, -inf
        %1582 = vmax.xlane.f32.xlu0 %v1581
        %v1583 = vpop.xlane.xlu0 %1582
        %v1584 = vsel %vm1374, %v1578, -inf
        %1585 = vmax.xlane.f32.xlu0 %v1584
        %v1586 = vpop.xlane.xlu0 %1585
        %v1587 = vsel %vm1374, %v1579, -inf
        %1588 = vmax.xlane.f32.xlu0 %v1587
        %v1589 = vpop.xlane.xlu0 %1588
        %v1590 = vsel %vm1374, %v1580, -inf
        %1591 = vmax.xlane.f32.xlu0 %v1590
        %v1592 = vpop.xlane.xlu0 %1591
        %v1593 = vsub.f32 %v1577, %v1583
        %v1594 = vsub.f32 %v1578, %v1586
        %v1595 = vsub.f32 %v1579, %v1589
        %v1596 = vsub.f32 %v1580, %v1592
        %v1597 = vmul.f32 %v1593, 1.442695
        %v1598 = vpow.pop %v1597
        %v1599 = vmul.f32 %v1594, 1.442695
        %v1600 = vpow.pop %v1599
        %v1601 = vmul.f32 %v1595, 1.442695
        %v1602 = vpow.pop %v1601
        %v1603 = vmul.f32 %v1596, 1.442695
        %v1604 = vpow.pop %v1603
        %v1605 = vsel %vm1374, %v1598, 0.0
        %1606 = vadd.xlane.f32.xlu0 %v1605
        %v1607 = vpop.xlane.xlu0 %1606
        %v1608 = vsel %vm1374, %v1600, 0.0
        %1609 = vadd.xlane.f32.xlu0 %v1608
        %v1610 = vpop.xlane.xlu0 %1609
        %v1611 = vsel %vm1374, %v1602, 0.0
        %1612 = vadd.xlane.f32.xlu0 %v1611
        %v1613 = vpop.xlane.xlu0 %1612
        %v1614 = vsel %vm1374, %v1604, 0.0
        %1615 = vadd.xlane.f32.xlu0 %v1614
        %v1616 = vpop.xlane.xlu0 %1615
        %v1617 = vrcp.pop %v1607
        %v1618 = vrcp.pop %v1610
        %v1619 = vrcp.pop %v1613
        %v1620 = vrcp.pop %v1616
        %v1621 = vmul.f32 %v1598, %v1617
        %v1622 = vmul.f32 %v1600, %v1618
        %v1623 = vmul.f32 %v1602, %v1619
        %v1624 = vmul.f32 %v1604, %v1620
        %v1625 = vpack.c.bf16 %v1621, %v1621
        %v1626 = vpack.c.bf16 %v1622, %v1622
        %v1627 = vpack.c.bf16 %v1623, %v1623
        %v1628 = vpack.c.bf16 %v1624, %v1624
        %vm1629 = vcmask 60416
        %1630 = vst.msk [vmem:[%s698] sm:$0xf] %vm1629, %v1625
        %1631 = vst.msk [vmem:[%s698 + $0x4] sm:$0xf] %vm1629, %v1626
        %1632 = vst.msk [vmem:[%s698 + $0x8] sm:$0xf] %vm1629, %v1627
        %1633 = vst.msk [vmem:[%s698 + $0xc] sm:$0xf] %vm1629, %v1628
        %v1634 = vld [vmem:[#allocation3] sm:$0xf]
        %v1635 = vld [vmem:[#allocation3 + $0x4] sm:$0xf]
        %v1636 = vld [vmem:[#allocation3 + $0x8] sm:$0xf]
        %v1637 = vld [vmem:[#allocation3 + $0xc] sm:$0xf]
        %v1639 = vsel %vm1374, %v1625, 0
        %vm1641 = vcmask 1043456
        %v1643 = vsel %vm1641, %v1634, 0
        %1645 = vmatprep.subr.bf16.mxu0 0
        %1646 = vmatpush1.bf16.msra.mxu0 0
        %1647 = vmatprep.subr.bf16.mxu0 0
        %1648 = vmatpush1.bf16.msra.mxu0 0
        %1649 = vmatprep.subr.bf16.mxu0 0
        %1650 = vmatpush1.bf16.msra.mxu0 0
        %1651 = vmatprep.subr.bf16.mxu0 0
        %1652 = vmatpush1.bf16.msra.mxu0 0
        %1653 = vmatprep.subr.bf16.mxu0 0
        %1654 = vmatpush1.bf16.msra.mxu0 0
        %1655 = vmatprep.subr.bf16.mxu0 0
        %1656 = vmatpush1.bf16.msra.mxu0 0
        %1657 = vmatprep.subr.bf16.mxu0 0
        %1658 = vmatpush1.bf16.msra.mxu0 0
        %1659 = vmatprep.subr.bf16.mxu0 0
        %1660 = vmatpush1.bf16.msra.mxu0 %v1643
        %1661 = vmatprep.subr.bf16.mxu0 0
        %1662 = vmatpush2.bf16.msra.mxu0 0
        %1663 = vmatprep.subr.bf16.mxu0 0
        %1664 = vmatpush2.bf16.msra.mxu0 0
        %1665 = vmatprep.subr.bf16.mxu0 0
        %1666 = vmatpush2.bf16.msra.mxu0 0
        %1667 = vmatprep.subr.bf16.mxu0 0
        %1668 = vmatpush2.bf16.msra.mxu0 0
        %1669 = vmatprep.subr.bf16.mxu0 0
        %1670 = vmatpush2.bf16.msra.mxu0 0
        %1671 = vmatprep.subr.bf16.mxu0 0
        %1672 = vmatpush2.bf16.msra.mxu0 0
        %1673 = vmatprep.subr.bf16.mxu0 0
        %1674 = vmatpush2.bf16.msra.mxu0 0
        %1675 = vmatprep.subr.bf16.mxu0 0
        %1676 = vmatpush2.bf16.msra.mxu0 0
        %1677 = vmatprep.mubr.bf16.mxu0 0
        %1678 = vmatmul.mubr.bf16.gmra.mxu0 %v1639
        %v1679 = vpop.f32.mrf.mxu0
        %v1680 = vadd.f32 0.0, %v1679
        %v1681 = vpop.f32.mrf.mxu0
        %v1682 = vpop.f32.mrf.mxu0
        %v1683 = vpop.f32.mrf.mxu0
        %1684 = vdwg.mxu0
        %v1686 = vsel %vm1374, %v1626, 0
        %v1689 = vsel %vm1641, %v1635, 0
        %1691 = vmatprep.subr.bf16.mxu0 0
        %1692 = vmatpush1.bf16.msra.mxu0 0
        %1693 = vmatprep.subr.bf16.mxu0 0
        %1694 = vmatpush1.bf16.msra.mxu0 0
        %1695 = vmatprep.subr.bf16.mxu0 0
        %1696 = vmatpush1.bf16.msra.mxu0 0
        %1697 = vmatprep.subr.bf16.mxu0 0
        %1698 = vmatpush1.bf16.msra.mxu0 0
        %1699 = vmatprep.subr.bf16.mxu0 0
        %1700 = vmatpush1.bf16.msra.mxu0 0
        %1701 = vmatprep.subr.bf16.mxu0 0
        %1702 = vmatpush1.bf16.msra.mxu0 0
        %1703 = vmatprep.subr.bf16.mxu0 0
        %1704 = vmatpush1.bf16.msra.mxu0 0
        %1705 = vmatprep.subr.bf16.mxu0 0
        %1706 = vmatpush1.bf16.msra.mxu0 %v1689
        %1707 = vmatprep.subr.bf16.mxu0 0
        %1708 = vmatpush2.bf16.msra.mxu0 0
        %1709 = vmatprep.subr.bf16.mxu0 0
        %1710 = vmatpush2.bf16.msra.mxu0 0
        %1711 = vmatprep.subr.bf16.mxu0 0
        %1712 = vmatpush2.bf16.msra.mxu0 0
        %1713 = vmatprep.subr.bf16.mxu0 0
        %1714 = vmatpush2.bf16.msra.mxu0 0
        %1715 = vmatprep.subr.bf16.mxu0 0
        %1716 = vmatpush2.bf16.msra.mxu0 0
        %1717 = vmatprep.subr.bf16.mxu0 0
        %1718 = vmatpush2.bf16.msra.mxu0 0
        %1719 = vmatprep.subr.bf16.mxu0 0
        %1720 = vmatpush2.bf16.msra.mxu0 0
        %1721 = vmatprep.subr.bf16.mxu0 0
        %1722 = vmatpush2.bf16.msra.mxu0 0
        %1723 = vmatprep.mubr.bf16.mxu0 0
        %1724 = vmatmul.mubr.bf16.gmra.mxu0 %v1686
        %v1725 = vpop.f32.mrf.mxu0
        %v1726 = vadd.f32 0.0, %v1725
        %v1727 = vpop.f32.mrf.mxu0
        %v1728 = vpop.f32.mrf.mxu0
        %v1729 = vpop.f32.mrf.mxu0
        %1730 = vdwg.mxu0
        %v1732 = vsel %vm1374, %v1627, 0
        %v1735 = vsel %vm1641, %v1636, 0
        %1737 = vmatprep.subr.bf16.mxu0 0
        %1738 = vmatpush1.bf16.msra.mxu0 0
        %1739 = vmatprep.subr.bf16.mxu0 0
        %1740 = vmatpush1.bf16.msra.mxu0 0
        %1741 = vmatprep.subr.bf16.mxu0 0
        %1742 = vmatpush1.bf16.msra.mxu0 0
        %1743 = vmatprep.subr.bf16.mxu0 0
        %1744 = vmatpush1.bf16.msra.mxu0 0
        %1745 = vmatprep.subr.bf16.mxu0 0
        %1746 = vmatpush1.bf16.msra.mxu0 0
        %1747 = vmatprep.subr.bf16.mxu0 0
        %1748 = vmatpush1.bf16.msra.mxu0 0
        %1749 = vmatprep.subr.bf16.mxu0 0
        %1750 = vmatpush1.bf16.msra.mxu0 0
        %1751 = vmatprep.subr.bf16.mxu0 0
        %1752 = vmatpush1.bf16.msra.mxu0 %v1735
        %1753 = vmatprep.subr.bf16.mxu0 0
        %1754 = vmatpush2.bf16.msra.mxu0 0
        %1755 = vmatprep.subr.bf16.mxu0 0
        %1756 = vmatpush2.bf16.msra.mxu0 0
        %1757 = vmatprep.subr.bf16.mxu0 0
        %1758 = vmatpush2.bf16.msra.mxu0 0
        %1759 = vmatprep.subr.bf16.mxu0 0
        %1760 = vmatpush2.bf16.msra.mxu0 0
        %1761 = vmatprep.subr.bf16.mxu0 0
        %1762 = vmatpush2.bf16.msra.mxu0 0
        %1763 = vmatprep.subr.bf16.mxu0 0
        %1764 = vmatpush2.bf16.msra.mxu0 0
        %1765 = vmatprep.subr.bf16.mxu0 0
        %1766 = vmatpush2.bf16.msra.mxu0 0
        %1767 = vmatprep.subr.bf16.mxu0 0
        %1768 = vmatpush2.bf16.msra.mxu0 0
        %1769 = vmatprep.mubr.bf16.mxu0 0
        %1770 = vmatmul.mubr.bf16.gmra.mxu0 %v1732
        %v1771 = vpop.f32.mrf.mxu0
        %v1772 = vadd.f32 0.0, %v1771
        %v1773 = vpop.f32.mrf.mxu0
        %v1774 = vpop.f32.mrf.mxu0
        %v1775 = vpop.f32.mrf.mxu0
        %1776 = vdwg.mxu0
        %v1778 = vsel %vm1374, %v1628, 0
        %v1781 = vsel %vm1641, %v1637, 0
        %1783 = vmatprep.subr.bf16.mxu0 0
        %1784 = vmatpush1.bf16.msra.mxu0 0
        %1785 = vmatprep.subr.bf16.mxu0 0
        %1786 = vmatpush1.bf16.msra.mxu0 0
        %1787 = vmatprep.subr.bf16.mxu0 0
        %1788 = vmatpush1.bf16.msra.mxu0 0
        %1789 = vmatprep.subr.bf16.mxu0 0
        %1790 = vmatpush1.bf16.msra.mxu0 0
        %1791 = vmatprep.subr.bf16.mxu0 0
        %1792 = vmatpush1.bf16.msra.mxu0 0
        %1793 = vmatprep.subr.bf16.mxu0 0
        %1794 = vmatpush1.bf16.msra.mxu0 0
        %1795 = vmatprep.subr.bf16.mxu0 0
        %1796 = vmatpush1.bf16.msra.mxu0 0
        %1797 = vmatprep.subr.bf16.mxu0 0
        %1798 = vmatpush1.bf16.msra.mxu0 %v1781
        %1799 = vmatprep.subr.bf16.mxu0 0
        %1800 = vmatpush2.bf16.msra.mxu0 0
        %1801 = vmatprep.subr.bf16.mxu0 0
        %1802 = vmatpush2.bf16.msra.mxu0 0
        %1803 = vmatprep.subr.bf16.mxu0 0
        %1804 = vmatpush2.bf16.msra.mxu0 0
        %1805 = vmatprep.subr.bf16.mxu0 0
        %1806 = vmatpush2.bf16.msra.mxu0 0
        %1807 = vmatprep.subr.bf16.mxu0 0
        %1808 = vmatpush2.bf16.msra.mxu0 0
        %1809 = vmatprep.subr.bf16.mxu0 0
        %1810 = vmatpush2.bf16.msra.mxu0 0
        %1811 = vmatprep.subr.bf16.mxu0 0
        %1812 = vmatpush2.bf16.msra.mxu0 0
        %1813 = vmatprep.subr.bf16.mxu0 0
        %1814 = vmatpush2.bf16.msra.mxu0 0
        %1815 = vmatprep.mubr.bf16.mxu0 0
        %1816 = vmatmul.mubr.bf16.gmra.mxu0 %v1778
        %v1817 = vpop.f32.mrf.mxu0
        %v1818 = vadd.f32 0.0, %v1817
        %v1819 = vpop.f32.mrf.mxu0
        %v1820 = vpop.f32.mrf.mxu0
        %v1821 = vpop.f32.mrf.mxu0
        %1822 = vdwg.mxu0
        %v1823 = vcombine.low %v1680, %v1772
        %v1824 = vcombine.high %v1680, %v1772
        %v1826 = vunpack.c.l.s4 1983009808
        %v1827 = vunpack.c.0.s8 %v1826
        %v1828 = vlaneseq
        %v1829 = vshrl.u32 %v1828, 7
        %v1830 = vsub.s32 %v1827, %v1829
        %v1831 = vrot.slane %v1823, %v1830
        %v1833 = vunpack.c.l.s4 1983009808
        %v1834 = vunpack.c.0.s8 %v1833
        %v1835 = vlaneseq
        %v1836 = vshrl.u32 %v1835, 7
        %v1837 = vsub.s32 %v1834, %v1836
        %v1838 = vrot.slane %v1824, %v1837
        %v1839 = vcombine.low %v1726, %v1818
        %v1840 = vcombine.high %v1726, %v1818
        %v1842 = vunpack.c.l.s4 1983009808
        %v1843 = vunpack.c.0.s8 %v1842
        %v1844 = vlaneseq
        %v1845 = vshrl.u32 %v1844, 7
        %v1846 = vsub.s32 %v1843, %v1845
        %v1847 = vrot.slane %v1839, %v1846
        %v1849 = vunpack.c.l.s4 1983009808
        %v1850 = vunpack.c.0.s8 %v1849
        %v1851 = vlaneseq
        %v1852 = vshrl.u32 %v1851, 7
        %v1853 = vsub.s32 %v1850, %v1852
        %v1854 = vrot.slane %v1840, %v1853
        %v1855 = vcombine.low %v1831, %v1847
        %v1856 = vcombine.high %v1831, %v1847
        %v1858 = vunpack.c.l.s4 1934713408
        %v1859 = vunpack.c.0.s8 %v1858
        %v1860 = vlaneseq
        %v1861 = vshrl.u32 %v1860, 7
        %v1862 = vsub.s32 %v1859, %v1861
        %v1863 = vrot.slane %v1855, %v1862
        %v1865 = vunpack.c.l.s4 1934713408
        %v1866 = vunpack.c.0.s8 %v1865
        %v1867 = vlaneseq
        %v1868 = vshrl.u32 %v1867, 7
        %v1869 = vsub.s32 %v1866, %v1868
        %v1870 = vrot.slane %v1856, %v1869
        %v1871 = vcombine.low %v1838, %v1854
        %v1872 = vcombine.high %v1838, %v1854
        %v1874 = vunpack.c.l.s4 1934713408
        %v1875 = vunpack.c.0.s8 %v1874
        %v1876 = vlaneseq
        %v1877 = vshrl.u32 %v1876, 7
        %v1878 = vsub.s32 %v1875, %v1877
        %v1879 = vrot.slane %v1871, %v1878
        %v1881 = vunpack.c.l.s4 1934713408
        %v1882 = vunpack.c.0.s8 %v1881
        %v1883 = vlaneseq
        %v1884 = vshrl.u32 %v1883, 7
        %v1885 = vsub.s32 %v1882, %v1884
        %v1886 = vrot.slane %v1872, %v1885
        %v1887 = vcombine.high %v1863, 0.0
        %v1888 = vcombine.high %v1870, 0.0
        %v1889 = vcombine.high %v1879, 0.0
        %v1890 = vcombine.high %v1886, 0.0
        %v1891 = vcombine.low %v1863, %v1870
        %v1893 = vunpack.c.l.s4 1983009808
        %v1894 = vunpack.c.0.s8 %v1893
        %v1895 = vlaneseq
        %v1896 = vshrl.u32 %v1895, 7
        %v1897 = vsub.s32 %v1894, %v1896
        %v1898 = vrot.slane %v1891, %v1897
        %v1899 = vcombine.low %v1887, %v1888
        %v1901 = vunpack.c.l.s4 1983009808
        %v1902 = vunpack.c.0.s8 %v1901
        %v1903 = vlaneseq
        %v1904 = vshrl.u32 %v1903, 7
        %v1905 = vsub.s32 %v1902, %v1904
        %v1906 = vrot.slane %v1899, %v1905
        %v1907 = vcombine.low %v1879, %v1886
        %v1909 = vunpack.c.l.s4 1983009808
        %v1910 = vunpack.c.0.s8 %v1909
        %v1911 = vlaneseq
        %v1912 = vshrl.u32 %v1911, 7
        %v1913 = vsub.s32 %v1910, %v1912
        %v1914 = vrot.slane %v1907, %v1913
        %v1915 = vcombine.low %v1889, %v1890
        %v1917 = vunpack.c.l.s4 1983009808
        %v1918 = vunpack.c.0.s8 %v1917
        %v1919 = vlaneseq
        %v1920 = vshrl.u32 %v1919, 7
        %v1921 = vsub.s32 %v1918, %v1920
        %v1922 = vrot.slane %v1915, %v1921
        %v1923 = vcombine.low %v1898, %v1906
        %v1924 = vcombine.high %v1898, %v1906
        %v1926 = vunpack.c.l.s4 1934713408
        %v1927 = vunpack.c.0.s8 %v1926
        %v1928 = vlaneseq
        %v1929 = vshrl.u32 %v1928, 7
        %v1930 = vsub.s32 %v1927, %v1929
        %v1931 = vrot.slane %v1923, %v1930
        %v1933 = vunpack.c.l.s4 1934713408
        %v1934 = vunpack.c.0.s8 %v1933
        %v1935 = vlaneseq
        %v1936 = vshrl.u32 %v1935, 7
        %v1937 = vsub.s32 %v1934, %v1936
        %v1938 = vrot.slane %v1924, %v1937
        %v1939 = vcombine.low %v1914, %v1922
        %v1940 = vcombine.high %v1914, %v1922
        %v1942 = vunpack.c.l.s4 1934713408
        %v1943 = vunpack.c.0.s8 %v1942
        %v1944 = vlaneseq
        %v1945 = vshrl.u32 %v1944, 7
        %v1946 = vsub.s32 %v1943, %v1945
        %v1947 = vrot.slane %v1939, %v1946
        %v1949 = vunpack.c.l.s4 1934713408
        %v1950 = vunpack.c.0.s8 %v1949
        %v1951 = vlaneseq
        %v1952 = vshrl.u32 %v1951, 7
        %v1953 = vsub.s32 %v1950, %v1952
        %v1954 = vrot.slane %v1940, %v1953
        %v1955 = vcombine.low %v1931, %v1947
        %v1956 = vcombine.high %v1931, %v1947
        %v1957 = vcombine.low %v1938, %v1954
        %v1958 = vcombine.high %v1938, %v1954
        %1960 = vrot.lane.b32.xlu0 %v1956, 8
        %v1961 = vpop.permute.xlu0 %1960
        %1964 = vrot.lane.b32.xlu0 %v1957, 16
        %v1965 = vpop.permute.xlu0 %1964
        %1968 = vrot.lane.b32.xlu0 %v1958, 24
        %v1969 = vpop.permute.xlu0 %1968
        %v1971 = vsel %vm1374, %v1955, %v1961
        %vm1972 = vcmask 130048
        %v1973 = vsel %vm1972, %v1971, %v1965
        %vm1974 = vcmask 195584
        %v1975 = vsel %vm1974, %v1973, %v1969
        %v1976 = vpack.c.bf16 %v1975, %v1975
        %v1977 = vld [vmem:[#allocation9] sm:$0xf]
        %v1978 = vld [vmem:[#allocation9 + $0x4] sm:$0xf]
        %v1979 = vld [vmem:[#allocation9 + $0x8] sm:$0xf]
        %v1980 = vld [vmem:[#allocation9 + $0xc] sm:$0xf]
        %v1981 = vld [vmem:[%s9] sm:$0x1]
        %v1983 = vlaneseq
        %v1984 = vshrl.u32 %v1983, 7
        %v1985 = vsub.s32 0, %v1984
        %v1986 = vrot.slane %v1981, %v1985
        %v1992 = vunpack.c.l.b16 %v1977
        %v1993 = vunpack.c.l.b16 %v1978
        %v1994 = vunpack.c.l.b16 %v1979
        %v1995 = vunpack.c.l.b16 %v1980
        %v1996 = vpack.c.b16 %v1993, %v1992
        %v1997 = vpack.c.b16 %v1995, %v1994
        %v2001 = vsel %vm1176, %v1976, 0
        %2003 = vmatprep.subr.bf16.mxu0 0
        %2004 = vmatpush1.bf16.msra.mxu0 0
        %2005 = vmatprep.subr.bf16.mxu0 0
        %2006 = vmatpush1.bf16.msra.mxu0 0
        %2007 = vmatprep.subr.bf16.mxu0 0
        %2008 = vmatpush1.bf16.msra.mxu0 0
        %2009 = vmatprep.subr.bf16.mxu0 0
        %2010 = vmatpush1.bf16.msra.mxu0 0
        %2011 = vmatprep.subr.bf16.mxu0 0
        %2012 = vmatpush1.bf16.msra.mxu0 0
        %2013 = vmatprep.subr.bf16.mxu0 0
        %2014 = vmatpush1.bf16.msra.mxu0 0
        %2015 = vmatprep.subr.bf16.mxu0 0
        %2016 = vmatpush1.bf16.msra.mxu0 %v1997
        %2017 = vmatprep.subr.bf16.mxu0 0
        %2018 = vmatpush1.bf16.msra.mxu0 %v1996
        %2019 = vmatprep.subr.bf16.mxu0 0
        %2020 = vmatpush2.bf16.msra.mxu0 0
        %2021 = vmatprep.subr.bf16.mxu0 0
        %2022 = vmatpush2.bf16.msra.mxu0 0
        %2023 = vmatprep.subr.bf16.mxu0 0
        %2024 = vmatpush2.bf16.msra.mxu0 0
        %2025 = vmatprep.subr.bf16.mxu0 0
        %2026 = vmatpush2.bf16.msra.mxu0 0
        %2027 = vmatprep.subr.bf16.mxu0 0
        %2028 = vmatpush2.bf16.msra.mxu0 0
        %2029 = vmatprep.subr.bf16.mxu0 0
        %2030 = vmatpush2.bf16.msra.mxu0 0
        %2031 = vmatprep.subr.bf16.mxu0 0
        %2032 = vmatpush2.bf16.msra.mxu0 0
        %2033 = vmatprep.subr.bf16.mxu0 0
        %2034 = vmatpush2.bf16.msra.mxu0 0
        %2035 = vmatprep.mubr.bf16.mxu0 0
        %2036 = vmatmul.mubr.bf16.gmra.mxu0 %v2001
        %v2037 = vpop.f32.mrf.mxu0
        %v2038 = vadd.f32 %v1986, %v2037
        %v2039 = vpop.f32.mrf.mxu0
        %v2040 = vpop.f32.mrf.mxu0
        %v2041 = vpop.f32.mrf.mxu0
        %2042 = vdwg.mxu0
        %v2043 = vadd.f32 %v1151, %v2038
        %v2044 = vld [vmem:[%s10] sm:$0x1]
        %v2045 = vld [vmem:[%s11] sm:$0x1]
        %v2046 = vsel %vm1176, %v2043, 0.0
        %2047 = vadd.xlane.f32.xlu0 %v2046
        %v2048 = vpop.xlane.xlu0 %2047
        %v2049 = vrcp.pop 32.0
        %v2050 = vmul.f32 %v2048, %v2049
        %v2051 = vsub.f32 %v2043, %v2050
        %v2052 = vmul.f32 %v2051, %v2051
        %v2053 = vsel %vm1176, %v2052, 0.0
        %2054 = vadd.xlane.f32.xlu0 %v2053
        %v2055 = vpop.xlane.xlu0 %2054
        %v2056 = vmul.f32 %v2055, %v2049
        %v2057 = vadd.f32 %v2056, 1e-05
        %v2058 = vrsqrt.pop %v2057
        %v2059 = vmul.f32 %v2051, %v2058
        %v2061 = vlaneseq
        %v2062 = vshrl.u32 %v2061, 7
        %v2063 = vsub.s32 0, %v2062
        %v2064 = vrot.slane %v2044, %v2063
        %v2066 = vmul.f32 %v2059, %v2064
        %v2068 = vlaneseq
        %v2069 = vshrl.u32 %v2068, 7
        %v2070 = vsub.s32 0, %v2069
        %v2071 = vrot.slane %v2045, %v2070
        %v2073 = vadd.f32 %v2066, %v2071
        %v2074 = vpack.c.bf16 %v2073, %v2073
        %v2075 = vld [vmem:[#allocation10] sm:$0xf]
        %v2076 = vld [vmem:[#allocation10 + $0x4] sm:$0xf]
        %v2077 = vld [vmem:[#allocation10 + $0x8] sm:$0xf]
        %v2078 = vld [vmem:[#allocation10 + $0xc] sm:$0xf]
        %v2079 = vld [vmem:[%s13] sm:$0x1]
        %v2081 = vlaneseq
        %v2082 = vshrl.u32 %v2081, 7
        %v2083 = vsub.s32 0, %v2082
        %v2084 = vrot.slane %v2079, %v2083
        %v2090 = vunpack.c.l.b16 %v2075
        %v2091 = vunpack.c.l.b16 %v2076
        %v2092 = vunpack.c.l.b16 %v2077
        %v2093 = vunpack.c.l.b16 %v2078
        %v2094 = vpack.c.b16 %v2091, %v2090
        %v2095 = vpack.c.b16 %v2093, %v2092
        %v2099 = vsel %vm1176, %v2074, 0
        %2101 = vmatprep.subr.bf16.mxu0 0
        %2102 = vmatpush1.bf16.msra.mxu0 0
        %2103 = vmatprep.subr.bf16.mxu0 0
        %2104 = vmatpush1.bf16.msra.mxu0 0
        %2105 = vmatprep.subr.bf16.mxu0 0
        %2106 = vmatpush1.bf16.msra.mxu0 0
        %2107 = vmatprep.subr.bf16.mxu0 0
        %2108 = vmatpush1.bf16.msra.mxu0 0
        %2109 = vmatprep.subr.bf16.mxu0 0
        %2110 = vmatpush1.bf16.msra.mxu0 0
        %2111 = vmatprep.subr.bf16.mxu0 0
        %2112 = vmatpush1.bf16.msra.mxu0 0
        %2113 = vmatprep.subr.bf16.mxu0 0
        %2114 = vmatpush1.bf16.msra.mxu0 %v2095
        %2115 = vmatprep.subr.bf16.mxu0 0
        %2116 = vmatpush1.bf16.msra.mxu0 %v2094
        %2117 = vmatprep.subr.bf16.mxu0 0
        %2118 = vmatpush2.bf16.msra.mxu0 0
        %2119 = vmatprep.subr.bf16.mxu0 0
        %2120 = vmatpush2.bf16.msra.mxu0 0
        %2121 = vmatprep.subr.bf16.mxu0 0
        %2122 = vmatpush2.bf16.msra.mxu0 0
        %2123 = vmatprep.subr.bf16.mxu0 0
        %2124 = vmatpush2.bf16.msra.mxu0 0
        %2125 = vmatprep.subr.bf16.mxu0 0
        %2126 = vmatpush2.bf16.msra.mxu0 0
        %2127 = vmatprep.subr.bf16.mxu0 0
        %2128 = vmatpush2.bf16.msra.mxu0 0
        %2129 = vmatprep.subr.bf16.mxu0 0
        %2130 = vmatpush2.bf16.msra.mxu0 0
        %2131 = vmatprep.subr.bf16.mxu0 0
        %2132 = vmatpush2.bf16.msra.mxu0 0
        %2133 = vmatprep.mubr.bf16.mxu0 0
        %2134 = vmatmul.mubr.bf16.gmra.mxu0 %v2099
        %v2135 = vpop.f32.mrf.mxu0
        %v2136 = vadd.f32 %v2084, %v2135
        %v2137 = vpop.f32.mrf.mxu0
        %v2138 = vpop.f32.mrf.mxu0
        %v2139 = vpop.f32.mrf.mxu0
        %2140 = vdwg.mxu0
        %v2141 = vmul.f32 %v2136, 0.5
        %v2142 = vmul.f32 %v2136, 0.70710677
        %v2143 = verf.f32.pop %v2142
        %v2144 = vadd.f32 %v2143, 1.0
        %v2145 = vmul.f32 %v2141, %v2144
        %v2146 = vpack.c.bf16 %v2145, %v2145
        %v2147 = vld [vmem:[%s14] sm:$0xf]
        %v2148 = vld [vmem:[%s14 + $0x4] sm:$0xf]
        %v2149 = vld [vmem:[%s14 + $0x8] sm:$0xf]
        %v2150 = vld [vmem:[%s14 + $0xc] sm:$0xf]
        %v2151 = vld [vmem:[%s14 + $0x10] sm:$0xf]
        %v2152 = vld [vmem:[%s14 + $0x14] sm:$0xf]
        %v2153 = vld [vmem:[%s14 + $0x18] sm:$0xf]
        %v2154 = vld [vmem:[%s14 + $0x1c] sm:$0xf]
        %v2155 = vld [vmem:[%s15] sm:$0x1]
        %v2157 = vlaneseq
        %v2158 = vshrl.u32 %v2157, 7
        %v2159 = vsub.s32 0, %v2158
        %v2160 = vrot.slane %v2155, %v2159
        %v2170 = vunpack.c.l.b16 %v2147
        %v2171 = vunpack.c.l.b16 %v2148
        %v2172 = vunpack.c.l.b16 %v2149
        %v2173 = vunpack.c.l.b16 %v2150
        %v2174 = vunpack.c.l.b16 %v2151
        %v2175 = vunpack.c.l.b16 %v2152
        %v2176 = vunpack.c.l.b16 %v2153
        %v2177 = vunpack.c.l.b16 %v2154
        %v2178 = vpack.c.b16 %v2171, %v2170
        %v2179 = vpack.c.b16 %v2173, %v2172
        %v2180 = vpack.c.b16 %v2175, %v2174
        %v2181 = vpack.c.b16 %v2177, %v2176
        %vm2186 = vcmask 523264
        %v2188 = vsel %vm2186, %v2146, 0
        %2190 = vmatprep.subr.bf16.mxu0 0
        %2191 = vmatpush1.bf16.msra.mxu0 0
        %2192 = vmatprep.subr.bf16.mxu0 0
        %2193 = vmatpush1.bf16.msra.mxu0 0
        %2194 = vmatprep.subr.bf16.mxu0 0
        %2195 = vmatpush1.bf16.msra.mxu0 0
        %2196 = vmatprep.subr.bf16.mxu0 0
        %2197 = vmatpush1.bf16.msra.mxu0 0
        %2198 = vmatprep.subr.bf16.mxu0 0
        %2199 = vmatpush1.bf16.msra.mxu0 %v2181
        %2200 = vmatprep.subr.bf16.mxu0 0
        %2201 = vmatpush1.bf16.msra.mxu0 %v2180
        %2202 = vmatprep.subr.bf16.mxu0 0
        %2203 = vmatpush1.bf16.msra.mxu0 %v2179
        %2204 = vmatprep.subr.bf16.mxu0 0
        %2205 = vmatpush1.bf16.msra.mxu0 %v2178
        %2206 = vmatprep.subr.bf16.mxu0 0
        %2207 = vmatpush2.bf16.msra.mxu0 0
        %2208 = vmatprep.subr.bf16.mxu0 0
        %2209 = vmatpush2.bf16.msra.mxu0 0
        %2210 = vmatprep.subr.bf16.mxu0 0
        %2211 = vmatpush2.bf16.msra.mxu0 0
        %2212 = vmatprep.subr.bf16.mxu0 0
        %2213 = vmatpush2.bf16.msra.mxu0 0
        %2214 = vmatprep.subr.bf16.mxu0 0
        %2215 = vmatpush2.bf16.msra.mxu0 0
        %2216 = vmatprep.subr.bf16.mxu0 0
        %2217 = vmatpush2.bf16.msra.mxu0 0
        %2218 = vmatprep.subr.bf16.mxu0 0
        %2219 = vmatpush2.bf16.msra.mxu0 0
        %2220 = vmatprep.subr.bf16.mxu0 0
        %2221 = vmatpush2.bf16.msra.mxu0 0
        %2222 = vmatprep.mubr.bf16.mxu0 0
        %2223 = vmatmul.mubr.bf16.gmra.mxu0 %v2188
        %v2224 = vpop.f32.mrf.mxu0
        %v2225 = vadd.f32 %v2160, %v2224
        %v2226 = vpop.f32.mrf.mxu0
        %v2227 = vpop.f32.mrf.mxu0
        %v2228 = vpop.f32.mrf.mxu0
        %2229 = vdwg.mxu0
        %v2230 = vadd.f32 %v2073, %v2225
        %v2231 = vld [vmem:[%s16] sm:$0x1]
        %v2232 = vld [vmem:[%s17] sm:$0x1]
        %v2233 = vsel %vm1176, %v2230, 0.0
        %2234 = vadd.xlane.f32.xlu0 %v2233
        %v2235 = vpop.xlane.xlu0 %2234
        %v2236 = vmul.f32 %v2235, %v2049
        %v2237 = vsub.f32 %v2230, %v2236
        %v2238 = vmul.f32 %v2237, %v2237
        %v2239 = vsel %vm1176, %v2238, 0.0
        %2240 = vadd.xlane.f32.xlu0 %v2239
        %v2241 = vpop.xlane.xlu0 %2240
        %v2242 = vmul.f32 %v2241, %v2049
        %v2243 = vadd.f32 %v2242, 1e-05
        %v2244 = vrsqrt.pop %v2243
        %v2245 = vmul.f32 %v2237, %v2244
        %v2247 = vlaneseq
        %v2248 = vshrl.u32 %v2247, 7
        %v2249 = vsub.s32 0, %v2248
        %v2250 = vrot.slane %v2231, %v2249
        %v2252 = vmul.f32 %v2245, %v2250
        %v2254 = vlaneseq
        %v2255 = vshrl.u32 %v2254, 7
        %v2256 = vsub.s32 0, %v2255
        %v2257 = vrot.slane %v2232, %v2256
        %v2259 = vadd.f32 %v2252, %v2257
        %2260 = vst.msk [vmem:[%s691] sm:$0xff] %vm1176, %v2259
        %s2261 = sand.u32 %s452, 1
        %s2262 = scalar_lea.sflag [#allocation6], %s2261
        %s2263 = sand.u32 %s452, 1
        %s2264 = smul.addr %s2263, 8
        %s2265 = scalar_lea.vmem [#allocation12], %s2264
        %s2266 = sand.u32 %s480, 1
        %s2267 = scalar_lea.sflag [#allocation14], %s2266
        %s2268 = sand.u32 %s480, 1
        %s2269 = smul.addr %s2268, 16
        %s2270 = scalar_lea.vmem [#allocation13], %s2269
        // Predicated region
        $region113: #{tpu_custom_call.1} parent=91 // pred_check
          %p2271 = pneg %p462
        $region114: #{tpu_custom_call.1} parent=91 // pred_check_branch
          %2273 = sbr.rel (%p2271) target = $region116
        $region115: #{tpu_custom_call.1} parent=91 // pred_region
          %s2275 = ssub.s32 128, 128
          %2276 = vsyncadd %s2262, %s2275
          %s2277 = sadd.s32 %s47, %s46
          %s2278 = smul.addr %s2277, 128
          %s2279 = scalar_lea.hbm %s18, %s2278
          %s2281 = sshll.u32 %s2265, 4
          %s2282 = int_to_ptr.vmem [resolvable:$true] %s2281
          %2284 = dma.vmem_to_hbm [thread:$0]  %s2282, 128, %s2279, %s2262
        $region116: #{tpu_custom_call.1} parent=91 // pred_fallthru
          _
        // Predicated region
        $region117: #{tpu_custom_call.1} parent=91 // pred_check
          %p2285 = pneg %p490
        $region118: #{tpu_custom_call.1} parent=91 // pred_check_branch
          %2287 = sbr.rel (%p2285) target = $region120
        $region119: #{tpu_custom_call.1} parent=91 // pred_region
          %s2289 = ssub.s32 256, 256
          %2290 = vsyncadd %s2267, %s2289
          %s2291 = smul.addr %s46, 4
          %s2292 = sadd.s32 %s47, %s2291
          %s2293 = smul.addr %s2292, 64
          %s2294 = scalar_lea.hbm %s19, %s2293
          %s2295 = sshll.u32 %s2270, 4
          %s2296 = int_to_ptr.vmem [resolvable:$true] %s2295
          %2301 = dma.vmem_to_hbm [thread:$0]  %s2296, 256, %s2294, %s2267, 64, 64, 4
        $region120: #{tpu_custom_call.1} parent=91 // pred_fallthru
          _
      $region92: #{tpu_custom_call.1} parent=5 // pred_fallthru
        _
      %p2302 = scmp.le.s32.totalorder 2, %s37
      // Predicated region
      $region121: #{tpu_custom_call.1} parent=5 // pred_check
        %p2303 = pneg %p2302
      $region122: #{tpu_custom_call.1} parent=5 // pred_check_branch
        %2305 = sbr.rel (%p2303) target = $region124
      $region123: #{tpu_custom_call.1} parent=5 // pred_region
        %s2306 = ssub.s32 %s37, 2
        // Predicated region
        $region125: #{tpu_custom_call.1} parent=123 // pred_check
          %p2307 = pneg %p468
        $region126: #{tpu_custom_call.1} parent=123 // pred_check_branch
          %2309 = sbr.rel (%p2307) target = $region128
        $region127: #{tpu_custom_call.1} parent=123 // pred_region
          %s2310 = sand.u32 %s453, 1
          %s2311 = scalar_lea.sflag [#allocation6], %s2310
          %s2312 = sand.u32 %s453, 1
          %s2313 = smul.addr %s2312, 8
          %s2314 = scalar_lea.vmem [#allocation12], %s2313
          %2315 = dma.done %s2311, 128
        $region128: #{tpu_custom_call.1} parent=123 // pred_fallthru
          _
        // Predicated region
        $region129: #{tpu_custom_call.1} parent=123 // pred_check
          %p2316 = pneg %p496
        $region130: #{tpu_custom_call.1} parent=123 // pred_check_branch
          %2318 = sbr.rel (%p2316) target = $region132
        $region131: #{tpu_custom_call.1} parent=123 // pred_region
          %s2319 = sand.u32 %s481, 1
          %s2320 = scalar_lea.sflag [#allocation14], %s2319
          %s2321 = sand.u32 %s481, 1
          %s2322 = smul.addr %s2321, 16
          %s2323 = scalar_lea.vmem [#allocation13], %s2322
          %2324 = dma.done %s2320, 256
        $region132: #{tpu_custom_call.1} parent=123 // pred_fallthru
          _
      $region124: #{tpu_custom_call.1} parent=5 // pred_fallthru
        _
    $region6: #{tpu_custom_call.1} parent=1 // loop_footer
      %s41 = sadd.s32 1, %s37
    $region7: #{tpu_custom_call.1} parent=1 // loop_footer_branch
      %36 = sbr.rel target = $region3
    $region8: #{tpu_custom_call.1} parent=1 // loop_exit
      _
    %2325 = vsyncpa [#allocation5], 1
    %s2326 = scalar_lea.sflag [#allocation5], 1
    %2327 = vsyncpa %s2326, 1
    %2328 = vsyncpa [#allocation8], 1
    %2329 = vsyncpa [#allocation11], 1
    %2330 = vsyncpa [#allocation6], 1
    %s2331 = scalar_lea.sflag [#allocation6], 1
    %2332 = vsyncpa %s2331, 1
    %2333 = vsyncpa [#allocation14], 1
    %s2334 = scalar_lea.sflag [#allocation14], 1
    %2335 = vsyncpa %s2334, 1

</llo_original>
